<compile_context>
chip_gen: v6e
topology: v6e:2x2x1
jax: 0.10.0
libtpu: 0.0.40
codegen_flags: <defaults>
</compile_context>

<pallas_src>
import math

import jax
import jax.numpy as jnp
from jax import lax
from jax.experimental import pallas as pl
from jax.experimental.pallas import tpu as pltpu

BN_EPS = 1e-5
LRELU_SLOPE = 0.01


# ----------------------------------------------------------------------------
# Kernel 1: fused conv1x1 (+bias) + bilinear x2 upsample (align_corners=True)
# ----------------------------------------------------------------------------
def _conv1x1_upsample_kernel(x_ref, w_ref, b_ref, m_ref, o_ref):
    # x_ref: (1, Cin, H1*W1) f32   NCHW-derived, consumed without a transpose
    # w_ref: (Cin, C2)       bf16
    # b_ref: (1, C2)         f32
    # m_ref: (4*H1*W1, H1*W1) f32  == kron(Mh, Mw) bilinear interp operator
    # o_ref: (1, 2*H1, 2*W1, C2)
    _, Hp, Wp, c2 = o_ref.shape
    x = x_ref[0].astype(jnp.bfloat16)                     # (Cin, HW) bf16 MXU lhs
    y = lax.dot_general(x, w_ref[...],                    # transposed-LHS matmul
                        (((0,), (0,)), ((), ())),
                        preferred_element_type=jnp.float32)   # (HW, C2) f32
    y = y + b_ref[...]
    up = jnp.dot(m_ref[...], y,                           # (4*HW, C2) f32
                 preferred_element_type=jnp.float32)
    o_ref[0] = up.reshape(Hp, Wp, c2).astype(o_ref.dtype)  # one lane-dense store


def _interp_matrix(s_in, s_out):
    # nn.Upsample(mode='bilinear', align_corners=True) 1-D interpolation matrix.
    if s_in == 1:
        return jnp.ones((s_out, 1), jnp.float32)
    pos = jnp.arange(s_out, dtype=jnp.float32) * (s_in - 1) / (s_out - 1)
    lo = jnp.clip(jnp.floor(pos).astype(jnp.int32), 0, s_in - 2)
    frac = pos - lo.astype(jnp.float32)
    idx = jnp.arange(s_out)
    m = jnp.zeros((s_out, s_in), jnp.float32)
    m = m.at[idx, lo].add(1.0 - frac)
    m = m.at[idx, lo + 1].add(frac)
    return m


def conv1x1_upsample(x1_nchw, w, b):
    """x1_nchw: (N, Cin, H1, W1) f32; w: (Cin, C2); b: (C2,).
    Returns the upsampled tensor in NHWC: (N, 2*H1, 2*W1, C2)."""
    N, Cin, H1, W1 = x1_nchw.shape
    C2 = w.shape[-1]
    HW = H1 * W1
    x_flat = x1_nchw.reshape(N, Cin, HW)          # contiguous merge, no copy
    mh = _interp_matrix(H1, 2 * H1)
    mw = _interp_matrix(W1, 2 * W1)
    # TODO(synk): switch to the separable (Mh, Mw) two-matmul form for large
    # resolutions; the dense Kronecker operator only makes sense at small H*W.
    m2 = jnp.einsum('ph,qw->pqhw', mh, mw).reshape(4 * HW, HW)
    wb = w.astype(jnp.bfloat16)
    b2 = b.reshape(1, C2).astype(jnp.float32)

    flops = int(2 * N * (HW * Cin * C2 + 4 * HW * HW * C2))
    bytes_accessed = int(4 * (N * Cin * HW + m2.size + N * 4 * HW * C2)
                         + 2 * wb.size)

    return pl.pallas_call(
        _conv1x1_upsample_kernel,
        out_shape=jax.ShapeDtypeStruct((N, 2 * H1, 2 * W1, C2), jnp.float32),
        grid=(N,),
        in_specs=[
            pl.BlockSpec((1, Cin, HW), lambda n: (n, 0, 0)),
            pl.BlockSpec((Cin, C2), lambda n: (0, 0)),
            pl.BlockSpec((1, C2), lambda n: (0, 0)),
            pl.BlockSpec((4 * HW, HW), lambda n: (0, 0)),
        ],
        out_specs=pl.BlockSpec((1, 2 * H1, 2 * W1, C2), lambda n: (n, 0, 0, 0)),
        compiler_params=pltpu.CompilerParams(
            dimension_semantics=("parallel",)),
        cost_estimate=pl.CostEstimate(flops=flops, transcendentals=0,
                                      bytes_accessed=bytes_accessed),
    )(x_flat, wb, b2, m2)


# ----------------------------------------------------------------------------
# Kernel 2: fused ConvBlock = [implicit concat] conv3x3 + BN + LeakyReLU
#           + Dropout(eval=identity) + conv3x3 + BN + LeakyReLU
# ----------------------------------------------------------------------------
def _conv_block_kernel(x2_ref, up_ref, w1_ref, s1_ref, b1_ref,
                       w2_ref, s2_ref, b2_ref, o_ref, pad1, pad2):
    # x2_ref, up_ref: (1, H, W, C2) f32
    # w1_ref: (3, 3*2*C2, Cout) bf16   (dy, dx*Cin + cin, cout)
    # w2_ref: (3, 3*Cout, Cout) bf16
    # s*_ref, b*_ref: (1, Cout) f32    folded BN scale / bias (conv bias folded)
    # pad1: VMEM (H+2, W+2, 2*C2) f32 halo scratch; pad2: (H+2, W+2, Cout) f32
    _, H, W, _ = x2_ref.shape
    cout = o_ref.shape[-1]

    def pad_store(pad_ref, x):
        # Build the 1-px zero halo in registers and write it with ONE
        # lane-dense full-block store (no separate zeroing pass, no
        # cross-grid-step scratch state -> safe with a "parallel" batch axis).
        C = x.shape[-1]
        zrow = jnp.zeros((1, W, C), x.dtype)
        zcol = jnp.zeros((H + 2, 1, C), x.dtype)
        xp = jnp.concatenate([zrow, x, zrow], axis=0)
        xp = jnp.concatenate([zcol, xp, zcol], axis=1)
        pad_ref[...] = xp

    def conv3x3(pad_ref, w_ref, s_ref, bias_ref):
        # dx-packed shift-and-matmul: 3 MXU matmuls with K = 3*Cin
        # (bf16 operands, f32 accumulate), single f32 BN + LeakyReLU epilogue.
        cin = pad_ref.shape[-1]
        acc = None
        for dy in range(3):
            patch = jnp.concatenate(
                [pad_ref[pl.ds(dy, H), pl.ds(dx, W), :] for dx in range(3)],
                axis=-1)                                     # (H, W, 3*Cin)
            patch = patch.reshape(H * W, 3 * cin).astype(jnp.bfloat16)
            part = jnp.dot(patch, w_ref[dy],
                           preferred_element_type=jnp.float32)
            acc = part if acc is None else acc + part
        y = acc * s_ref[...] + bias_ref[...]                 # folded BN affine
        return jnp.where(y >= 0, y, LRELU_SLOPE * y)         # LeakyReLU

    # torch.cat([x2, up], dim=1) fused: in-register channel concat, single halo
    # scratch => first conv contracts the full K = 2*C2 depth.
    pad_store(pad1, jnp.concatenate([x2_ref[0], up_ref[0]], axis=-1))
    h = conv3x3(pad1, w1_ref, s1_ref, b1_ref)                # (H*W, Cout) f32
    # nn.Dropout: identity in eval mode.
    pad_store(pad2, h.reshape(H, W, cout))                   # stays in VMEM
    y = conv3x3(pad2, w2_ref, s2_ref, b2_ref)
    o_ref[0] = y.reshape(H, W, cout).astype(o_ref.dtype)     # one lane-dense store


def conv_block(x2, up, w1, s1, b1, w2, s2, b2):
    """x2, up: (N, H, W, C2) f32; w1: (3,3,2*C2,Cout); w2: (3,3,Cout,Cout);
    s*, b*: (Cout,) folded BN scale/bias."""
    N, H, W, C2 = x2.shape
    cin1 = w1.shape[2]                 # == 2*C2
    cout = w1.shape[-1]
    w1r = w1.reshape(3, 3 * cin1, cout).astype(jnp.bfloat16)
    w2r = w2.reshape(3, 3 * cout, cout).astype(jnp.bfloat16)
    s1r = s1.reshape(1, cout).astype(jnp.float32)
    b1r = b1.reshape(1, cout).astype(jnp.float32)
    s2r = s2.reshape(1, cout).astype(jnp.float32)
    b2r = b2.reshape(1, cout).astype(jnp.float32)

    flops = int(2 * N * H * W * 9 * (cin1 * cout + cout * cout))
    bytes_accessed = int(4 * (x2.size + up.size + N * H * W * cout)
                         + 2 * (w1r.size + w2r.size))

    # TODO(synk): add halo'd row tiling (extra parallel grid axis) so real
    # resolutions fit v7x's 64 MiB VMEM and the 2 TensorCores get >1 step each.
    return pl.pallas_call(
        _conv_block_kernel,
        out_shape=jax.ShapeDtypeStruct((N, H, W, cout), x2.dtype),
        grid=(N,),
        in_specs=[
            pl.BlockSpec((1, H, W, C2), lambda n: (n, 0, 0, 0)),
            pl.BlockSpec((1, H, W, C2), lambda n: (n, 0, 0, 0)),
            pl.BlockSpec((3, 3 * cin1, cout), lambda n: (0, 0, 0)),
            pl.BlockSpec((1, cout), lambda n: (0, 0)),
            pl.BlockSpec((1, cout), lambda n: (0, 0)),
            pl.BlockSpec((3, 3 * cout, cout), lambda n: (0, 0, 0)),
            pl.BlockSpec((1, cout), lambda n: (0, 0)),
            pl.BlockSpec((1, cout), lambda n: (0, 0)),
        ],
        out_specs=pl.BlockSpec((1, H, W, cout), lambda n: (n, 0, 0, 0)),
        scratch_shapes=[
            pltpu.VMEM((H + 2, W + 2, cin1), jnp.float32),
            pltpu.VMEM((H + 2, W + 2, cout), jnp.float32),
        ],
        compiler_params=pltpu.CompilerParams(
            dimension_semantics=("parallel",)),
        cost_estimate=pl.CostEstimate(flops=flops, transcendentals=0,
                                      bytes_accessed=bytes_accessed),
    )(x2, up, w1r, s1r, b1r, w2r, s2r, b2r)


# ----------------------------------------------------------------------------
# Parameter init (deterministic, synthetic — mirrors PyTorch default init)
# ----------------------------------------------------------------------------
def _init_conv(key, kh, kw, cin, cout):
    fan_in = kh * kw * cin
    bound = 1.0 / math.sqrt(fan_in)
    k1, k2 = jax.random.split(key)
    w = jax.random.uniform(k1, (kh, kw, cin, cout), jnp.float32, -bound, bound)
    b = jax.random.uniform(k2, (cout,), jnp.float32, -bound, bound)
    return w, b


def init_up_block(key, cin1, cin2, cout):
    k1, k2, k3 = jax.random.split(key, 3)
    w1x1, b1x1 = _init_conv(k1, 1, 1, cin1, cin2)
    w1, b1 = _init_conv(k2, 3, 3, 2 * cin2, cout)
    w2, b2 = _init_conv(k3, 3, 3, cout, cout)
    ones = jnp.ones((cout,), jnp.float32)
    zeros = jnp.zeros((cout,), jnp.float32)
    return {'w1x1': w1x1.reshape(cin1, cin2), 'b1x1': b1x1,
            'w1': w1, 'b1': b1, 'g1': ones, 'be1': zeros,
            'rm1': zeros, 'rv1': ones,
            'w2': w2, 'b2': b2, 'g2': ones, 'be2': zeros,
            'rm2': zeros, 'rv2': ones}


def _fold_bn(conv_bias, gamma, beta, running_mean, running_var):
    # Eval-mode BatchNorm folded into a per-channel affine applied after the
    # conv matmuls: y = conv(x)*scale + bias  (general running stats, not 0/1).
    scale = gamma * lax.rsqrt(running_var + BN_EPS)
    bias = (conv_bias - running_mean) * scale + beta
    return scale, bias


# ----------------------------------------------------------------------------
# UpBlock forward (mode_upsampling=1, eval-mode semantics)
# ----------------------------------------------------------------------------
def up_block_forward(x1_nchw, x2_nchw, p):
    # conv1x1 + bilinear x2 upsample, fused; x1 consumed in NCHW (no transpose).
    up = conv1x1_upsample(x1_nchw, p['w1x1'], p['b1x1'])        # NHWC
    # TODO(synk): fold this transpose into the ConvBlock kernel as well.
    x2 = jnp.transpose(x2_nchw, (0, 2, 3, 1))                   # NCHW -> NHWC
    s1, b1 = _fold_bn(p['b1'], p['g1'], p['be1'], p['rm1'], p['rv1'])
    s2, b2 = _fold_bn(p['b2'], p['g2'], p['be2'], p['rm2'], p['rv2'])
    h = conv_block(x2, up, p['w1'], s1, b1, p['w2'], s2, b2)    # NHWC
    # NHWC -> NCHW to match the PyTorch reference (skip if the consumer can
    # take NHWC directly).
    return jnp.transpose(h, (0, 3, 1, 2))


if __name__ == "__main__":
    key = jax.random.PRNGKey(0)
    kp, kx1, kx2 = jax.random.split(key, 3)

    # UpBlock(in_channels1=128, in_channels2=64, out_channels=64, dropout_p=0.5)
    in_ch1, in_ch2, out_ch = 128, 64, 64
    N, H1, W1 = 2, 8, 8            # x1: low-res decoder feature
    H2, W2 = 2 * H1, 2 * W1        # x2: skip connection (2x resolution)

    params = init_up_block(kp, in_ch1, in_ch2, out_ch)
    x1 = jax.random.normal(kx1, (N, in_ch1, H1, W1), jnp.float32)
    x2 = jax.random.normal(kx2, (N, in_ch2, H2, W2), jnp.float32)

    out = jax.jit(up_block_forward)(x1, x2, params)
    out = jax.block_until_ready(out)

    assert out.shape == (N, out_ch, H2, W2)
    assert bool(jnp.all(jnp.isfinite(out)))
    print("KERNEL_OK")
</pallas_src>

<mosaic_0001>
module attributes {stable_mosaic.version = 11 : i64} {
  func.func private @main(%arg0: i32) attributes {dimension_semantics = [#tpu.dimension_semantics<core_parallel>], iteration_bounds = array<i64: 2>, tpu.core_type = #tpu.core_type<sc_scalar_subcore>, window_params = []} {
    return
  }
}

module attributes {stable_mosaic.version = 11 : i64} {
  func.func private @main(%arg0: i32) attributes {dimension_semantics = [#tpu.dimension_semantics<core_parallel>], iteration_bounds = array<i64: 2>, tpu.core_type = #tpu.core_type<sc_scalar_subcore>, window_params = []} {
    return
  }
}

module attributes {stable_mosaic.version = 11 : i64} {
  func.func @_conv_block_kernel(%arg0: i32, %arg1: memref<1x16x16x64xf32, #tpu.memory_space<vmem>>, %arg2: memref<1x16x16x64xf32, #tpu.memory_space<vmem>>, %arg3: memref<3x384x64xbf16, #tpu.memory_space<vmem>>, %arg4: memref<1x64xf32, #tpu.memory_space<vmem>>, %arg5: memref<1x64xf32, #tpu.memory_space<vmem>>, %arg6: memref<3x192x64xbf16, #tpu.memory_space<vmem>>, %arg7: memref<1x64xf32, #tpu.memory_space<vmem>>, %arg8: memref<1x64xf32, #tpu.memory_space<vmem>>, %arg9: memref<1x16x16x64xf32, #tpu.memory_space<vmem>>, %arg10: memref<18x18x128xf32, #tpu.memory_space<vmem>>, %arg11: memref<18x18x64xf32, #tpu.memory_space<vmem>>) attributes {dimension_semantics = [#tpu.dimension_semantics<parallel>], iteration_bounds = array<i64: 2>, scalar_prefetch = 0 : i64, scratch_operands = 2 : i64, tpu.core_type = #tpu.core_type<tc>, window_params = [{transform_indices = @transform_0, window_bounds = array<i64: 1, 16, 16, 64>}, {transform_indices = @transform_1, window_bounds = array<i64: 1, 16, 16, 64>}, {pipeline_mode = #tpu.pipeline_mode<synchronous>, transform_indices = @transform_2, window_bounds = array<i64: 3, 384, 64>}, {pipeline_mode = #tpu.pipeline_mode<synchronous>, transform_indices = @transform_3, window_bounds = array<i64: 1, 64>}, {pipeline_mode = #tpu.pipeline_mode<synchronous>, transform_indices = @transform_4, window_bounds = array<i64: 1, 64>}, {pipeline_mode = #tpu.pipeline_mode<synchronous>, transform_indices = @transform_5, window_bounds = array<i64: 3, 192, 64>}, {pipeline_mode = #tpu.pipeline_mode<synchronous>, transform_indices = @transform_6, window_bounds = array<i64: 1, 64>}, {pipeline_mode = #tpu.pipeline_mode<synchronous>, transform_indices = @transform_7, window_bounds = array<i64: 1, 64>}, {transform_indices = @transform_8, window_bounds = array<i64: 1, 16, 16, 64>}]} {
    %c0 = arith.constant 0 : index
    %c0_0 = arith.constant 0 : index
    %c0_1 = arith.constant 0 : index
    %c0_2 = arith.constant 0 : index
    %0 = vector.load %arg1[%c0, %c0_0, %c0_1, %c0_2] : memref<1x16x16x64xf32, #tpu.memory_space<vmem>>, vector<1x16x16x64xf32>
    %1 = vector.shape_cast %0 : vector<1x16x16x64xf32> to vector<16x16x64xf32>
    %c0_3 = arith.constant 0 : index
    %c0_4 = arith.constant 0 : index
    %c0_5 = arith.constant 0 : index
    %c0_6 = arith.constant 0 : index
    %2 = vector.load %arg2[%c0_3, %c0_4, %c0_5, %c0_6] : memref<1x16x16x64xf32, #tpu.memory_space<vmem>>, vector<1x16x16x64xf32>
    %3 = vector.shape_cast %2 : vector<1x16x16x64xf32> to vector<16x16x64xf32>
    %4 = tpu.concatenate %1, %3 in 2 : vector<16x16x64xf32>, vector<16x16x64xf32> -> vector<16x16x128xf32>
    %cst = arith.constant 0.000000e+00 : f32
    %5 = vector.broadcast %cst : f32 to vector<1x16x128xf32>
    %cst_7 = arith.constant 0.000000e+00 : f32
    %6 = vector.broadcast %cst_7 : f32 to vector<18x1x128xf32>
    %7 = tpu.concatenate %5, %4, %5 in 0 : vector<1x16x128xf32>, vector<16x16x128xf32>, vector<1x16x128xf32> -> vector<18x16x128xf32>
    %8 = tpu.concatenate %6, %7, %6 in 1 : vector<18x1x128xf32>, vector<18x16x128xf32>, vector<18x1x128xf32> -> vector<18x18x128xf32>
    %c0_8 = arith.constant 0 : index
    %c0_9 = arith.constant 0 : index
    %c0_10 = arith.constant 0 : index
    %9 = vector.load %arg10[%c0_8, %c0_9, %c0_10] : memref<18x18x128xf32, #tpu.memory_space<vmem>>, vector<18x18x128xf32>
    tpu.vector_store %arg10[%c0_8, %c0_9, %c0_10], %8 {strides = array<i32>} : memref<18x18x128xf32, #tpu.memory_space<vmem>>, vector<18x18x128xf32>,
    %c0_11 = arith.constant 0 : index
    %c0_12 = arith.constant 0 : index
    %c0_13 = arith.constant 0 : index
    %10 = vector.load %arg10[%c0_11, %c0_12, %c0_13] : memref<18x18x128xf32, #tpu.memory_space<vmem>>, vector<16x16x128xf32>
    %c0_14 = arith.constant 0 : index
    %c1 = arith.constant 1 : index
    %c0_15 = arith.constant 0 : index
    %11 = vector.load %arg10[%c0_14, %c1, %c0_15] : memref<18x18x128xf32, #tpu.memory_space<vmem>>, vector<16x16x128xf32>
    %c0_16 = arith.constant 0 : index
    %c2 = arith.constant 2 : index
    %c0_17 = arith.constant 0 : index
    %12 = vector.load %arg10[%c0_16, %c2, %c0_17] : memref<18x18x128xf32, #tpu.memory_space<vmem>>, vector<16x16x128xf32>
    %13 = tpu.concatenate %10, %11, %12 in 2 : vector<16x16x128xf32>, vector<16x16x128xf32>, vector<16x16x128xf32> -> vector<16x16x384xf32>
    %14 = vector.shape_cast %13 : vector<16x16x384xf32> to vector<256x384xf32>
    %15 = arith.truncf %14 : vector<256x384xf32> to vector<256x384xbf16>
    %c0_18 = arith.constant 0 : index
    %c0_19 = arith.constant 0 : index
    %c0_20 = arith.constant 0 : index
    %16 = vector.load %arg3[%c0_18, %c0_19, %c0_20] : memref<3x384x64xbf16, #tpu.memory_space<vmem>>, vector<1x384x64xbf16>
    %17 = vector.shape_cast %16 : vector<1x384x64xbf16> to vector<384x64xbf16>
    %cst_21 = arith.constant dense<0.000000e+00> : vector<256x64xf32>
    %18 = tpu.matmul %15, %17, %cst_21 {dimension_numbers = #tpu.dot_dimension_numbers<[1], [0], [0], [1], [0, 0, 1, 1], [], []>} : vector<256x384xbf16>, vector<384x64xbf16>, vector<256x64xf32> -> vector<256x64xf32>
    %c1_22 = arith.constant 1 : index
    %c0_23 = arith.constant 0 : index
    %c0_24 = arith.constant 0 : index
    %19 = vector.load %arg10[%c1_22, %c0_23, %c0_24] : memref<18x18x128xf32, #tpu.memory_space<vmem>>, vector<16x16x128xf32>
    %c1_25 = arith.constant 1 : index
    %c1_26 = arith.constant 1 : index
    %c0_27 = arith.constant 0 : index
    %20 = vector.load %arg10[%c1_25, %c1_26, %c0_27] : memref<18x18x128xf32, #tpu.memory_space<vmem>>, vector<16x16x128xf32>
    %c1_28 = arith.constant 1 : index
    %c2_29 = arith.constant 2 : index
    %c0_30 = arith.constant 0 : index
    %21 = vector.load %arg10[%c1_28, %c2_29, %c0_30] : memref<18x18x128xf32, #tpu.memory_space<vmem>>, vector<16x16x128xf32>
    %22 = tpu.concatenate %19, %20, %21 in 2 : vector<16x16x128xf32>, vector<16x16x128xf32>, vector<16x16x128xf32> -> vector<16x16x384xf32>
    %23 = vector.shape_cast %22 : vector<16x16x384xf32> to vector<256x384xf32>
    %24 = arith.truncf %23 : vector<256x384xf32> to vector<256x384xbf16>
    %c1_31 = arith.constant 1 : index
    %c0_32 = arith.constant 0 : index
    %c0_33 = arith.constant 0 : index
    %25 = vector.load %arg3[%c1_31, %c0_32, %c0_33] : memref<3x384x64xbf16, #tpu.memory_space<vmem>>, vector<1x384x64xbf16>
    %26 = vector.shape_cast %25 : vector<1x384x64xbf16> to vector<384x64xbf16>
    %cst_34 = arith.constant dense<0.000000e+00> : vector<256x64xf32>
    %27 = tpu.matmul %24, %26, %cst_34 {dimension_numbers = #tpu.dot_dimension_numbers<[1], [0], [0], [1], [0, 0, 1, 1], [], []>} : vector<256x384xbf16>, vector<384x64xbf16>, vector<256x64xf32> -> vector<256x64xf32>
    %28 = arith.addf %18, %27 : vector<256x64xf32>
    %c2_35 = arith.constant 2 : index
    %c0_36 = arith.constant 0 : index
    %c0_37 = arith.constant 0 : index
    %29 = vector.load %arg10[%c2_35, %c0_36, %c0_37] : memref<18x18x128xf32, #tpu.memory_space<vmem>>, vector<16x16x128xf32>
    %c2_38 = arith.constant 2 : index
    %c1_39 = arith.constant 1 : index
    %c0_40 = arith.constant 0 : index
    %30 = vector.load %arg10[%c2_38, %c1_39, %c0_40] : memref<18x18x128xf32, #tpu.memory_space<vmem>>, vector<16x16x128xf32>
    %c2_41 = arith.constant 2 : index
    %c2_42 = arith.constant 2 : index
    %c0_43 = arith.constant 0 : index
    %31 = vector.load %arg10[%c2_41, %c2_42, %c0_43] : memref<18x18x128xf32, #tpu.memory_space<vmem>>, vector<16x16x128xf32>
    %32 = tpu.concatenate %29, %30, %31 in 2 : vector<16x16x128xf32>, vector<16x16x128xf32>, vector<16x16x128xf32> -> vector<16x16x384xf32>
    %33 = vector.shape_cast %32 : vector<16x16x384xf32> to vector<256x384xf32>
    %34 = arith.truncf %33 : vector<256x384xf32> to vector<256x384xbf16>
    %c2_44 = arith.constant 2 : index
    %c0_45 = arith.constant 0 : index
    %c0_46 = arith.constant 0 : index
    %35 = vector.load %arg3[%c2_44, %c0_45, %c0_46] : memref<3x384x64xbf16, #tpu.memory_space<vmem>>, vector<1x384x64xbf16>
    %36 = vector.shape_cast %35 : vector<1x384x64xbf16> to vector<384x64xbf16>
    %cst_47 = arith.constant dense<0.000000e+00> : vector<256x64xf32>
    %37 = tpu.matmul %34, %36, %cst_47 {dimension_numbers = #tpu.dot_dimension_numbers<[1], [0], [0], [1], [0, 0, 1, 1], [], []>} : vector<256x384xbf16>, vector<384x64xbf16>, vector<256x64xf32> -> vector<256x64xf32>
    %38 = arith.addf %28, %37 : vector<256x64xf32>
    %c0_48 = arith.constant 0 : index
    %c0_49 = arith.constant 0 : index
    %39 = vector.load %arg4[%c0_48, %c0_49] : memref<1x64xf32, #tpu.memory_space<vmem>>, vector<1x64xf32>
    %40 = vector.broadcast %39 : vector<1x64xf32> to vector<256x64xf32>
    %41 = arith.mulf %38, %40 : vector<256x64xf32>
    %c0_50 = arith.constant 0 : index
    %c0_51 = arith.constant 0 : index
    %42 = vector.load %arg5[%c0_50, %c0_51] : memref<1x64xf32, #tpu.memory_space<vmem>>, vector<1x64xf32>
    %43 = vector.broadcast %42 : vector<1x64xf32> to vector<256x64xf32>
    %44 = arith.addf %41, %43 : vector<256x64xf32>
    %cst_52 = arith.constant 0.000000e+00 : f32
    %45 = vector.broadcast %cst_52 : f32 to vector<256x64xf32>
    %46 = arith.cmpf oge, %44, %45 : vector<256x64xf32>
    %cst_53 = arith.constant 0.00999999977 : f32
    %47 = vector.broadcast %cst_53 : f32 to vector<256x64xf32>
    %48 = arith.mulf %47, %44 : vector<256x64xf32>
    %49 = arith.select %46, %44, %48 : vector<256x64xi1>, vector<256x64xf32>
    %50 = vector.shape_cast %49 : vector<256x64xf32> to vector<16x16x64xf32>
    %cst_54 = arith.constant 0.000000e+00 : f32
    %51 = vector.broadcast %cst_54 : f32 to vector<1x16x64xf32>
    %cst_55 = arith.constant 0.000000e+00 : f32
    %52 = vector.broadcast %cst_55 : f32 to vector<18x1x64xf32>
    %53 = tpu.concatenate %51, %50, %51 in 0 : vector<1x16x64xf32>, vector<16x16x64xf32>, vector<1x16x64xf32> -> vector<18x16x64xf32>
    %54 = tpu.concatenate %52, %53, %52 in 1 : vector<18x1x64xf32>, vector<18x16x64xf32>, vector<18x1x64xf32> -> vector<18x18x64xf32>
    %c0_56 = arith.constant 0 : index
    %c0_57 = arith.constant 0 : index
    %c0_58 = arith.constant 0 : index
    %55 = vector.load %arg11[%c0_56, %c0_57, %c0_58] : memref<18x18x64xf32, #tpu.memory_space<vmem>>, vector<18x18x64xf32>
    tpu.vector_store %arg11[%c0_56, %c0_57, %c0_58], %54 {strides = array<i32>} : memref<18x18x64xf32, #tpu.memory_space<vmem>>, vector<18x18x64xf32>,
    %c0_59 = arith.constant 0 : index
    %c0_60 = arith.constant 0 : index
    %c0_61 = arith.constant 0 : index
    %56 = vector.load %arg11[%c0_59, %c0_60, %c0_61] : memref<18x18x64xf32, #tpu.memory_space<vmem>>, vector<16x16x64xf32>
    %c0_62 = arith.constant 0 : index
    %c1_63 = arith.constant 1 : index
    %c0_64 = arith.constant 0 : index
    %57 = vector.load %arg11[%c0_62, %c1_63, %c0_64] : memref<18x18x64xf32, #tpu.memory_space<vmem>>, vector<16x16x64xf32>
    %c0_65 = arith.constant 0 : index
    %c2_66 = arith.constant 2 : index
    %c0_67 = arith.constant 0 : index
    %58 = vector.load %arg11[%c0_65, %c2_66, %c0_67] : memref<18x18x64xf32, #tpu.memory_space<vmem>>, vector<16x16x64xf32>
    %59 = tpu.concatenate %56, %57, %58 in 2 : vector<16x16x64xf32>, vector<16x16x64xf32>, vector<16x16x64xf32> -> vector<16x16x192xf32>
    %60 = vector.shape_cast %59 : vector<16x16x192xf32> to vector<256x192xf32>
    %61 = arith.truncf %60 : vector<256x192xf32> to vector<256x192xbf16>
    %c0_68 = arith.constant 0 : index
    %c0_69 = arith.constant 0 : index
    %c0_70 = arith.constant 0 : index
    %62 = vector.load %arg6[%c0_68, %c0_69, %c0_70] : memref<3x192x64xbf16, #tpu.memory_space<vmem>>, vector<1x192x64xbf16>
    %63 = vector.shape_cast %62 : vector<1x192x64xbf16> to vector<192x64xbf16>
    %cst_71 = arith.constant dense<0.000000e+00> : vector<256x64xf32>
    %64 = tpu.matmul %61, %63, %cst_71 {dimension_numbers = #tpu.dot_dimension_numbers<[1], [0], [0], [1], [0, 0, 1, 1], [], []>} : vector<256x192xbf16>, vector<192x64xbf16>, vector<256x64xf32> -> vector<256x64xf32>
    %c1_72 = arith.constant 1 : index
    %c0_73 = arith.constant 0 : index
    %c0_74 = arith.constant 0 : index
    %65 = vector.load %arg11[%c1_72, %c0_73, %c0_74] : memref<18x18x64xf32, #tpu.memory_space<vmem>>, vector<16x16x64xf32>
    %c1_75 = arith.constant 1 : index
    %c1_76 = arith.constant 1 : index
    %c0_77 = arith.constant 0 : index
    %66 = vector.load %arg11[%c1_75, %c1_76, %c0_77] : memref<18x18x64xf32, #tpu.memory_space<vmem>>, vector<16x16x64xf32>
    %c1_78 = arith.constant 1 : index
    %c2_79 = arith.constant 2 : index
    %c0_80 = arith.constant 0 : index
    %67 = vector.load %arg11[%c1_78, %c2_79, %c0_80] : memref<18x18x64xf32, #tpu.memory_space<vmem>>, vector<16x16x64xf32>
    %68 = tpu.concatenate %65, %66, %67 in 2 : vector<16x16x64xf32>, vector<16x16x64xf32>, vector<16x16x64xf32> -> vector<16x16x192xf32>
    %69 = vector.shape_cast %68 : vector<16x16x192xf32> to vector<256x192xf32>
    %70 = arith.truncf %69 : vector<256x192xf32> to vector<256x192xbf16>
    %c1_81 = arith.constant 1 : index
    %c0_82 = arith.constant 0 : index
    %c0_83 = arith.constant 0 : index
    %71 = vector.load %arg6[%c1_81, %c0_82, %c0_83] : memref<3x192x64xbf16, #tpu.memory_space<vmem>>, vector<1x192x64xbf16>
    %72 = vector.shape_cast %71 : vector<1x192x64xbf16> to vector<192x64xbf16>
    %cst_84 = arith.constant dense<0.000000e+00> : vector<256x64xf32>
    %73 = tpu.matmul %70, %72, %cst_84 {dimension_numbers = #tpu.dot_dimension_numbers<[1], [0], [0], [1], [0, 0, 1, 1], [], []>} : vector<256x192xbf16>, vector<192x64xbf16>, vector<256x64xf32> -> vector<256x64xf32>
    %74 = arith.addf %64, %73 : vector<256x64xf32>
    %c2_85 = arith.constant 2 : index
    %c0_86 = arith.constant 0 : index
    %c0_87 = arith.constant 0 : index
    %75 = vector.load %arg11[%c2_85, %c0_86, %c0_87] : memref<18x18x64xf32, #tpu.memory_space<vmem>>, vector<16x16x64xf32>
    %c2_88 = arith.constant 2 : index
    %c1_89 = arith.constant 1 : index
    %c0_90 = arith.constant 0 : index
    %76 = vector.load %arg11[%c2_88, %c1_89, %c0_90] : memref<18x18x64xf32, #tpu.memory_space<vmem>>, vector<16x16x64xf32>
    %c2_91 = arith.constant 2 : index
    %c2_92 = arith.constant 2 : index
    %c0_93 = arith.constant 0 : index
    %77 = vector.load %arg11[%c2_91, %c2_92, %c0_93] : memref<18x18x64xf32, #tpu.memory_space<vmem>>, vector<16x16x64xf32>
    %78 = tpu.concatenate %75, %76, %77 in 2 : vector<16x16x64xf32>, vector<16x16x64xf32>, vector<16x16x64xf32> -> vector<16x16x192xf32>
    %79 = vector.shape_cast %78 : vector<16x16x192xf32> to vector<256x192xf32>
    %80 = arith.truncf %79 : vector<256x192xf32> to vector<256x192xbf16>
    %c2_94 = arith.constant 2 : index
    %c0_95 = arith.constant 0 : index
    %c0_96 = arith.constant 0 : index
    %81 = vector.load %arg6[%c2_94, %c0_95, %c0_96] : memref<3x192x64xbf16, #tpu.memory_space<vmem>>, vector<1x192x64xbf16>
    %82 = vector.shape_cast %81 : vector<1x192x64xbf16> to vector<192x64xbf16>
    %cst_97 = arith.constant dense<0.000000e+00> : vector<256x64xf32>
    %83 = tpu.matmul %80, %82, %cst_97 {dimension_numbers = #tpu.dot_dimension_numbers<[1], [0], [0], [1], [0, 0, 1, 1], [], []>} : vector<256x192xbf16>, vector<192x64xbf16>, vector<256x64xf32> -> vector<256x64xf32>
    %84 = arith.addf %74, %83 : vector<256x64xf32>
    %c0_98 = arith.constant 0 : index
    %c0_99 = arith.constant 0 : index
    %85 = vector.load %arg7[%c0_98, %c0_99] : memref<1x64xf32, #tpu.memory_space<vmem>>, vector<1x64xf32>
    %86 = vector.broadcast %85 : vector<1x64xf32> to vector<256x64xf32>
    %87 = arith.mulf %84, %86 : vector<256x64xf32>
    %c0_100 = arith.constant 0 : index
    %c0_101 = arith.constant 0 : index
    %88 = vector.load %arg8[%c0_100, %c0_101] : memref<1x64xf32, #tpu.memory_space<vmem>>, vector<1x64xf32>
    %89 = vector.broadcast %88 : vector<1x64xf32> to vector<256x64xf32>
    %90 = arith.addf %87, %89 : vector<256x64xf32>
    %cst_102 = arith.constant 0.000000e+00 : f32
    %91 = vector.broadcast %cst_102 : f32 to vector<256x64xf32>
    %92 = arith.cmpf oge, %90, %91 : vector<256x64xf32>
    %cst_103 = arith.constant 0.00999999977 : f32
    %93 = vector.broadcast %cst_103 : f32 to vector<256x64xf32>
    %94 = arith.mulf %93, %90 : vector<256x64xf32>
    %95 = arith.select %92, %90, %94 : vector<256x64xi1>, vector<256x64xf32>
    %96 = vector.shape_cast %95 : vector<256x64xf32> to vector<16x16x64xf32>
    %c0_104 = arith.constant 0 : index
    %c0_105 = arith.constant 0 : index
    %c0_106 = arith.constant 0 : index
    %c0_107 = arith.constant 0 : index
    %97 = vector.load %arg9[%c0_104, %c0_105, %c0_106, %c0_107] : memref<1x16x16x64xf32, #tpu.memory_space<vmem>>, vector<1x16x16x64xf32>
    %98 = vector.shape_cast %97 : vector<1x16x16x64xf32> to vector<16x16x64xf32>
    %99 = vector.shape_cast %96 : vector<16x16x64xf32> to vector<1x16x16x64xf32>
    tpu.vector_store %arg9[%c0_104, %c0_105, %c0_106, %c0_107], %99 {strides = array<i32>} : memref<1x16x16x64xf32, #tpu.memory_space<vmem>>, vector<1x16x16x64xf32>,
    return
  }
  func.func @transform_0(%arg0: i32) -> (i32, i32, i32, i32) {
    %c0_i32 = arith.constant 0 : i32
    %c0_i32_0 = arith.constant 0 : i32
    %c0_i32_1 = arith.constant 0 : i32
    %c0_i32_2 = arith.constant 0 : i32
    return %arg0, %c0_i32, %c0_i32_0, %c0_i32_1 : i32, i32, i32, i32
  }
  func.func @transform_1(%arg0: i32) -> (i32, i32, i32, i32) {
    %c0_i32 = arith.constant 0 : i32
    %c0_i32_0 = arith.constant 0 : i32
    %c0_i32_1 = arith.constant 0 : i32
    %c0_i32_2 = arith.constant 0 : i32
    return %arg0, %c0_i32, %c0_i32_0, %c0_i32_1 : i32, i32, i32, i32
  }
  func.func @transform_2(%arg0: i32) -> (i32, i32, i32) {
    %c0_i32 = arith.constant 0 : i32
    %c0_i32_0 = arith.constant 0 : i32
    %c0_i32_1 = arith.constant 0 : i32
    %c0_i32_2 = arith.constant 0 : i32
    return %c0_i32, %c0_i32_0, %c0_i32_1 : i32, i32, i32
  }
  func.func @transform_3(%arg0: i32) -> (i32, i32) {
    %c0_i32 = arith.constant 0 : i32
    %c0_i32_0 = arith.constant 0 : i32
    %c0_i32_1 = arith.constant 0 : i32
    return %c0_i32, %c0_i32_0 : i32, i32
  }
  func.func @transform_4(%arg0: i32) -> (i32, i32) {
    %c0_i32 = arith.constant 0 : i32
    %c0_i32_0 = arith.constant 0 : i32
    %c0_i32_1 = arith.constant 0 : i32
    return %c0_i32, %c0_i32_0 : i32, i32
  }
  func.func @transform_5(%arg0: i32) -> (i32, i32, i32) {
    %c0_i32 = arith.constant 0 : i32
    %c0_i32_0 = arith.constant 0 : i32
    %c0_i32_1 = arith.constant 0 : i32
    %c0_i32_2 = arith.constant 0 : i32
    return %c0_i32, %c0_i32_0, %c0_i32_1 : i32, i32, i32
  }
  func.func @transform_6(%arg0: i32) -> (i32, i32) {
    %c0_i32 = arith.constant 0 : i32
    %c0_i32_0 = arith.constant 0 : i32
    %c0_i32_1 = arith.constant 0 : i32
    return %c0_i32, %c0_i32_0 : i32, i32
  }
  func.func @transform_7(%arg0: i32) -> (i32, i32) {
    %c0_i32 = arith.constant 0 : i32
    %c0_i32_0 = arith.constant 0 : i32
    %c0_i32_1 = arith.constant 0 : i32
    return %c0_i32, %c0_i32_0 : i32, i32
  }
  func.func @transform_8(%arg0: i32) -> (i32, i32, i32, i32) {
    %c0_i32 = arith.constant 0 : i32
    %c0_i32_0 = arith.constant 0 : i32
    %c0_i32_1 = arith.constant 0 : i32
    %c0_i32_2 = arith.constant 0 : i32
    return %arg0, %c0_i32, %c0_i32_0, %c0_i32_1 : i32, i32, i32, i32
  }
}

module attributes {stable_mosaic.version = 11 : i64} {
  func.func @_conv1x1_upsample_kernel(%arg0: i32, %arg1: memref<1x128x64xf32, #tpu.memory_space<vmem>>, %arg2: memref<128x64xbf16, #tpu.memory_space<vmem>>, %arg3: memref<1x64xf32, #tpu.memory_space<vmem>>, %arg4: memref<256x64xf32, #tpu.memory_space<vmem>>, %arg5: memref<1x16x16x64xf32, #tpu.memory_space<vmem>>) attributes {dimension_semantics = [#tpu.dimension_semantics<parallel>], iteration_bounds = array<i64: 2>, scalar_prefetch = 0 : i64, scratch_operands = 0 : i64, tpu.core_type = #tpu.core_type<tc>, window_params = [{transform_indices = @transform_0, window_bounds = array<i64: 1, 128, 64>}, {pipeline_mode = #tpu.pipeline_mode<synchronous>, transform_indices = @transform_1, window_bounds = array<i64: 128, 64>}, {pipeline_mode = #tpu.pipeline_mode<synchronous>, transform_indices = @transform_2, window_bounds = array<i64: 1, 64>}, {pipeline_mode = #tpu.pipeline_mode<synchronous>, transform_indices = @transform_3, window_bounds = array<i64: 256, 64>}, {transform_indices = @transform_4, window_bounds = array<i64: 1, 16, 16, 64>}]} {
    %c0 = arith.constant 0 : index
    %c0_0 = arith.constant 0 : index
    %c0_1 = arith.constant 0 : index
    %0 = vector.load %arg1[%c0, %c0_0, %c0_1] : memref<1x128x64xf32, #tpu.memory_space<vmem>>, vector<1x128x64xf32>
    %1 = vector.shape_cast %0 : vector<1x128x64xf32> to vector<128x64xf32>
    %2 = arith.truncf %1 : vector<128x64xf32> to vector<128x64xbf16>
    %c0_2 = arith.constant 0 : index
    %c0_3 = arith.constant 0 : index
    %3 = vector.load %arg2[%c0_2, %c0_3] : memref<128x64xbf16, #tpu.memory_space<vmem>>, vector<128x64xbf16>
    %cst = arith.constant dense<0.000000e+00> : vector<64x64xf32>
    %4 = tpu.matmul %2, %3, %cst {dimension_numbers = #tpu.dot_dimension_numbers<[0], [0], [1], [1], [0, 1, 1, 1], [], []>} : vector<128x64xbf16>, vector<128x64xbf16>, vector<64x64xf32> -> vector<64x64xf32>
    %c0_4 = arith.constant 0 : index
    %c0_5 = arith.constant 0 : index
    %5 = vector.load %arg3[%c0_4, %c0_5] : memref<1x64xf32, #tpu.memory_space<vmem>>, vector<1x64xf32>
    %6 = vector.broadcast %5 : vector<1x64xf32> to vector<64x64xf32>
    %7 = arith.addf %4, %6 : vector<64x64xf32>
    %c0_6 = arith.constant 0 : index
    %c0_7 = arith.constant 0 : index
    %8 = vector.load %arg4[%c0_6, %c0_7] : memref<256x64xf32, #tpu.memory_space<vmem>>, vector<256x64xf32>
    %cst_8 = arith.constant dense<0.000000e+00> : vector<256x64xf32>
    %9 = tpu.matmul %8, %7, %cst_8 {dimension_numbers = #tpu.dot_dimension_numbers<[1], [0], [0], [1], [0, 0, 1, 1], [], []>} : vector<256x64xf32>, vector<64x64xf32>, vector<256x64xf32> -> vector<256x64xf32>
    %10 = vector.shape_cast %9 : vector<256x64xf32> to vector<16x16x64xf32>
    %c0_9 = arith.constant 0 : index
    %c0_10 = arith.constant 0 : index
    %c0_11 = arith.constant 0 : index
    %c0_12 = arith.constant 0 : index
    %11 = vector.load %arg5[%c0_9, %c0_10, %c0_11, %c0_12] : memref<1x16x16x64xf32, #tpu.memory_space<vmem>>, vector<1x16x16x64xf32>
    %12 = vector.shape_cast %11 : vector<1x16x16x64xf32> to vector<16x16x64xf32>
    %13 = vector.shape_cast %10 : vector<16x16x64xf32> to vector<1x16x16x64xf32>
    tpu.vector_store %arg5[%c0_9, %c0_10, %c0_11, %c0_12], %13 {strides = array<i32>} : memref<1x16x16x64xf32, #tpu.memory_space<vmem>>, vector<1x16x16x64xf32>,
    return
  }
  func.func @transform_0(%arg0: i32) -> (i32, i32, i32) {
    %c0_i32 = arith.constant 0 : i32
    %c0_i32_0 = arith.constant 0 : i32
    %c0_i32_1 = arith.constant 0 : i32
    return %arg0, %c0_i32, %c0_i32_0 : i32, i32, i32
  }
  func.func @transform_1(%arg0: i32) -> (i32, i32) {
    %c0_i32 = arith.constant 0 : i32
    %c0_i32_0 = arith.constant 0 : i32
    %c0_i32_1 = arith.constant 0 : i32
    return %c0_i32, %c0_i32_0 : i32, i32
  }
  func.func @transform_2(%arg0: i32) -> (i32, i32) {
    %c0_i32 = arith.constant 0 : i32
    %c0_i32_0 = arith.constant 0 : i32
    %c0_i32_1 = arith.constant 0 : i32
    return %c0_i32, %c0_i32_0 : i32, i32
  }
  func.func @transform_3(%arg0: i32) -> (i32, i32) {
    %c0_i32 = arith.constant 0 : i32
    %c0_i32_0 = arith.constant 0 : i32
    %c0_i32_1 = arith.constant 0 : i32
    return %c0_i32, %c0_i32_0 : i32, i32
  }
  func.func @transform_4(%arg0: i32) -> (i32, i32, i32, i32) {
    %c0_i32 = arith.constant 0 : i32
    %c0_i32_0 = arith.constant 0 : i32
    %c0_i32_1 = arith.constant 0 : i32
    %c0_i32_2 = arith.constant 0 : i32
    return %arg0, %c0_i32, %c0_i32_0, %c0_i32_1 : i32, i32, i32, i32
  }
}

</mosaic_0001>

<llo_original>
// kernel: up_block_forward.2
$region0: #{up_block_forward.2}
  #allocation0 [shape = 'u32[]', space=smem, size = 0x4, offset = 0x4, fixed_abs, tag = 'smem constant byte address 0x4 - core index']
  #allocation1 [shape = 'u32[144,128]{1,0:T(1,128)}', space=vmem, size = 0x12000, scoped, tag = 'internal scratch']
  %s0 = inlined_call_operand.vmem [shape: f32[2,128,64], index: 0, kind: input, shape index: {}]
  %s1 = inlined_call_operand.vmem [shape: bf16[128,64], index: 1, kind: input, shape index: {}]
  %s2 = inlined_call_operand.vmem [shape: f32[1,64], index: 2, kind: input, shape index: {}]
  %s3 = inlined_call_operand.vmem [shape: f32[256,64], index: 3, kind: input, shape index: {}]
  %s4 = inlined_call_operand.vmem [shape: f32[2,16,16,64], index: 4, kind: output, shape index: {}]
  %s5 = sld [smem:[#allocation0]]
  $region49: #{up_block_forward.2} parent=0
    _
  %s7 = ssub.s32 1, %s5
  %s8 = scalar_select 0, %s7, %s5
  loop: start=0, step=1, limit=4
  $region2: #{up_block_forward.2} parent=0 // loop_pre_header
    _
  $region3: #{up_block_forward.2} parent=0 // loop_header
    %s10 = sphi 0, %s14
    %p11 = scmp.ge.s32.totalorder %s10, 4
    %s20 = sphi 0, %s22
    %s23 = sphi 0, %s20
    %s24 = sphi 0, %s23
    %s40 = sphi 0, %s24
    %s44 = sphi 0, %s44
    %s46 = sphi 0, %s44
    %s47 = sphi 0, %s46
    %s61 = sphi 0, %s47
    %s65 = sphi 0, %s65
    %s67 = sphi 0, %s65
    %s68 = sphi 0, %s67
    %s82 = sphi 0, %s68
    %s86 = sphi 0, %s86
    %s88 = sphi 0, %s86
    %s89 = sphi 0, %s88
    %s103 = sphi 0, %s89
    %s109 = sphi 0, %s111
    %s112 = sphi 0, %s109
    %s113 = sphi 0, %s112
    %s129 = sphi 0, %s113
  $region4: #{up_block_forward.2} parent=0 // loop_header_branch
    %13 = sbr.rel (%p11) target = $region8
  $region5: #{up_block_forward.2} parent=0 // loop_body
    %s15 = ssub.s32 %s10, 1
    %s16 = ssub.s32 %s10, 2
    %s17 = sadd.s32 %s10, 1
    %s18 = ssub.s32 %s10, %s17
    %p19 = scmp.eq.s32.totalorder %s18, 0
    %s21 = sadd.s32 %s20, 1
    %s22 = scalar_select %p19, %s20, %s21
    %p25 = pneg %p19
    %p26 = scmp.eq.s32.totalorder %s10, 1
    %p27 = por %p25, %p26
    %p28 = scmp.ne.s32.totalorder %s20, %s23
    %p29 = scmp.eq.s32.totalorder %s10, 0
    %p30 = por %p28, %p29
    %p31 = scmp.ne.s32.totalorder %s20, %s23
    %p32 = scmp.eq.s32.totalorder %s15, 1
    %p33 = por %p31, %p32
    %p34 = scmp.ne.s32.totalorder %s23, %s24
    %p35 = scmp.eq.s32.totalorder %s15, 0
    %p36 = por %p34, %p35
    %p37 = scmp.ne.s32.totalorder %s23, %s24
    %p38 = scmp.eq.s32.totalorder %s16, 1
    %p39 = por %p37, %p38
    %p41 = scmp.ne.s32.totalorder %s24, %s40
    %p42 = scmp.eq.s32.totalorder %s16, 0
    %p43 = por %p41, %p42
    %s45 = sadd.s32 %s44, 1
    %p48 = scmp.eq.s32.totalorder %s10, 1
    %p49 = scmp.ne.s32.totalorder %s44, %s46
    %p50 = scmp.eq.s32.totalorder %s10, 0
    %p51 = por %p49, %p50
    %p52 = scmp.ne.s32.totalorder %s44, %s46
    %p53 = scmp.eq.s32.totalorder %s15, 1
    %p54 = por %p52, %p53
    %p55 = scmp.ne.s32.totalorder %s46, %s47
    %p56 = scmp.eq.s32.totalorder %s15, 0
    %p57 = por %p55, %p56
    %p58 = scmp.ne.s32.totalorder %s46, %s47
    %p59 = scmp.eq.s32.totalorder %s16, 1
    %p60 = por %p58, %p59
    %p62 = scmp.ne.s32.totalorder %s47, %s61
    %p63 = scmp.eq.s32.totalorder %s16, 0
    %p64 = por %p62, %p63
    %s66 = sadd.s32 %s65, 1
    %p69 = scmp.eq.s32.totalorder %s10, 1
    %p70 = scmp.ne.s32.totalorder %s65, %s67
    %p71 = scmp.eq.s32.totalorder %s10, 0
    %p72 = por %p70, %p71
    %p73 = scmp.ne.s32.totalorder %s65, %s67
    %p74 = scmp.eq.s32.totalorder %s15, 1
    %p75 = por %p73, %p74
    %p76 = scmp.ne.s32.totalorder %s67, %s68
    %p77 = scmp.eq.s32.totalorder %s15, 0
    %p78 = por %p76, %p77
    %p79 = scmp.ne.s32.totalorder %s67, %s68
    %p80 = scmp.eq.s32.totalorder %s16, 1
    %p81 = por %p79, %p80
    %p83 = scmp.ne.s32.totalorder %s68, %s82
    %p84 = scmp.eq.s32.totalorder %s16, 0
    %p85 = por %p83, %p84
    %s87 = sadd.s32 %s86, 1
    %p90 = scmp.eq.s32.totalorder %s10, 1
    %p91 = scmp.ne.s32.totalorder %s86, %s88
    %p92 = scmp.eq.s32.totalorder %s10, 0
    %p93 = por %p91, %p92
    %p94 = scmp.ne.s32.totalorder %s86, %s88
    %p95 = scmp.eq.s32.totalorder %s15, 1
    %p96 = por %p94, %p95
    %p97 = scmp.ne.s32.totalorder %s88, %s89
    %p98 = scmp.eq.s32.totalorder %s15, 0
    %p99 = por %p97, %p98
    %p100 = scmp.ne.s32.totalorder %s88, %s89
    %p101 = scmp.eq.s32.totalorder %s16, 1
    %p102 = por %p100, %p101
    %p104 = scmp.ne.s32.totalorder %s89, %s103
    %p105 = scmp.eq.s32.totalorder %s16, 0
    %p106 = por %p104, %p105
    %s107 = ssub.s32 %s10, %s17
    %p108 = scmp.eq.s32.totalorder %s107, 0
    %s110 = sadd.s32 %s109, 1
    %s111 = scalar_select %p108, %s109, %s110
    %p114 = pneg %p108
    %p115 = scmp.eq.s32.totalorder %s10, 1
    %p116 = por %p114, %p115
    %p117 = scmp.ne.s32.totalorder %s109, %s112
    %p118 = scmp.eq.s32.totalorder %s10, 0
    %p119 = por %p117, %p118
    %p120 = scmp.ne.s32.totalorder %s109, %s112
    %p121 = scmp.eq.s32.totalorder %s15, 1
    %p122 = por %p120, %p121
    %p123 = scmp.ne.s32.totalorder %s112, %s113
    %p124 = scmp.eq.s32.totalorder %s15, 0
    %p125 = por %p123, %p124
    %p126 = scmp.ne.s32.totalorder %s112, %s113
    %p127 = scmp.eq.s32.totalorder %s16, 1
    %p128 = por %p126, %p127
    %p130 = scmp.ne.s32.totalorder %s113, %s129
    %p131 = scmp.eq.s32.totalorder %s16, 0
    %p132 = por %p130, %p131
    %p133 = scmp.le.s32.totalorder 1, %s10
    %p134 = scmp.lt.s32.totalorder %s10, 3
    %p135 = pnand %p133, %p134
    %p136 = pneg %p135
    // Predicated region
    $region9: #{up_block_forward.2} parent=5 // pred_check
      _
    $region10: #{up_block_forward.2} parent=5 // pred_check_branch
      %138 = sbr.rel (%p135) target = $region12
    $region11: #{up_block_forward.2} parent=5 // pred_region
      %s139 = ssub.s32 %s10, 1
      // Predicated region
      $region13: #{up_block_forward.2} parent=11 // pred_check
        %p140 = pneg %p57
      $region14: #{up_block_forward.2} parent=11 // pred_check_branch
        %142 = sbr.rel (%p140) target = $region16
      $region15: #{up_block_forward.2} parent=11 // pred_region
        _
      $region16: #{up_block_forward.2} parent=11 // pred_fallthru
        _
      // Predicated region
      $region17: #{up_block_forward.2} parent=11 // pred_check
        %p143 = pneg %p78
      $region18: #{up_block_forward.2} parent=11 // pred_check_branch
        %145 = sbr.rel (%p143) target = $region20
      $region19: #{up_block_forward.2} parent=11 // pred_region
        _
      $region20: #{up_block_forward.2} parent=11 // pred_fallthru
        _
      // Predicated region
      $region21: #{up_block_forward.2} parent=11 // pred_check
        %p146 = pneg %p99
      $region22: #{up_block_forward.2} parent=11 // pred_check_branch
        %148 = sbr.rel (%p146) target = $region24
      $region23: #{up_block_forward.2} parent=11 // pred_region
        _
      $region24: #{up_block_forward.2} parent=11 // pred_fallthru
        _
    $region12: #{up_block_forward.2} parent=5 // pred_fallthru
      _
    %p149 = scmp.lt.s32.totalorder %s10, 2
    // Predicated region
    $region25: #{up_block_forward.2} parent=5 // pred_check
      %p150 = pneg %p149
    $region26: #{up_block_forward.2} parent=5 // pred_check_branch
      %152 = sbr.rel (%p150) target = $region28
    $region27: #{up_block_forward.2} parent=5 // pred_region
      // Predicated region
      $region29: #{up_block_forward.2} parent=27 // pred_check
        %p153 = pneg %p30
      $region30: #{up_block_forward.2} parent=27 // pred_check_branch
        %155 = sbr.rel (%p153) target = $region32
      $region31: #{up_block_forward.2} parent=27 // pred_region
        %p156 = scmp.lt.s32.totalorder %s10, 1
        %s157 = scalar_select %p156, %s10, 1
        %s158 = smul.addr %s157, 16
        %s159 = smul.addr %s158, 8
        %s160 = scalar_lea.vmem %s0, %s159
      $region32: #{up_block_forward.2} parent=27 // pred_fallthru
        _
    $region28: #{up_block_forward.2} parent=5 // pred_fallthru
      _
    %p161 = scmp.le.s32.totalorder 1, %s10
    %p162 = scmp.lt.s32.totalorder %s10, 3
    %p163 = pnand %p161, %p162
    %p164 = pneg %p163
    // Predicated region
    $region33: #{up_block_forward.2} parent=5 // pred_check
      _
    $region34: #{up_block_forward.2} parent=5 // pred_check_branch
      %166 = sbr.rel (%p163) target = $region36
    $region35: #{up_block_forward.2} parent=5 // pred_region
      %s167 = ssub.s32 %s10, 1
      %p168 = scmp.lt.s32.totalorder %s15, 1
      %s169 = scalar_select %p168, %s15, 1
      %s170 = smul.addr %s169, 16
      %s171 = smul.addr %s170, 8
      %s172 = scalar_lea.vmem %s0, %s171
      %p173 = pneg %p36
      %p174 = pneg %p33
      %p175 = pneg %p57
      %p176 = pneg %p54
      %p177 = pneg %p78
      %p178 = pneg %p75
      %p179 = pneg %p99
      %p180 = pneg %p96
      %p181 = pneg %p125
      %p182 = pneg %p122
      %p183 = scmp.lt.s32.totalorder %s15, 1
      %s184 = scalar_select %p183, %s15, 1
      %s185 = smul.addr %s184, 32
      %s186 = smul.addr %s185, 8
      %s187 = scalar_lea.vmem %s4, %s186
      %p188 = scmp.lt.s32.totalorder %s15, 1
      %s189 = scalar_select %p188, %s15, 1
      %s190 = smul.addr %s189, 16
      %s191 = smul.addr %s190, 8
      %s192 = scalar_lea.vmem %s0, %s191
      %p193 = scmp.lt.s32.totalorder %s15, 1
      %s194 = scalar_select %p193, %s15, 1
      %s195 = smul.addr %s194, 32
      %s196 = smul.addr %s195, 8
      %s197 = scalar_lea.vmem %s4, %s196
      %v199 = vld [vmem:[%s192] sm:$0xff]
      %v200 = vld [vmem:[%s192 + $0x8] sm:$0xff]
      %v201 = vld [vmem:[%s192 + $0x10] sm:$0xff]
      %v202 = vld [vmem:[%s192 + $0x18] sm:$0xff]
      %v203 = vld [vmem:[%s192 + $0x20] sm:$0xff]
      %v204 = vld [vmem:[%s192 + $0x28] sm:$0xff]
      %v205 = vld [vmem:[%s192 + $0x30] sm:$0xff]
      %v206 = vld [vmem:[%s192 + $0x38] sm:$0xff]
      %v207 = vld [vmem:[%s192 + $0x40] sm:$0xff]
      %v208 = vld [vmem:[%s192 + $0x48] sm:$0xff]
      %v209 = vld [vmem:[%s192 + $0x50] sm:$0xff]
      %v210 = vld [vmem:[%s192 + $0x58] sm:$0xff]
      %v211 = vld [vmem:[%s192 + $0x60] sm:$0xff]
      %v212 = vld [vmem:[%s192 + $0x68] sm:$0xff]
      %v213 = vld [vmem:[%s192 + $0x70] sm:$0xff]
      %v214 = vld [vmem:[%s192 + $0x78] sm:$0xff]
      %v215 = vpack.c.bf16 %v200, %v199
      %v216 = vpack.c.bf16 %v202, %v201
      %v217 = vpack.c.bf16 %v204, %v203
      %v218 = vpack.c.bf16 %v206, %v205
      %v219 = vpack.c.bf16 %v208, %v207
      %v220 = vpack.c.bf16 %v210, %v209
      %v221 = vpack.c.bf16 %v212, %v211
      %v222 = vpack.c.bf16 %v214, %v213
      %v223 = vld [vmem:[%s1] sm:$0xf]
      %v224 = vld [vmem:[%s1 + $0x4] sm:$0xf]
      %v225 = vld [vmem:[%s1 + $0x8] sm:$0xf]
      %v226 = vld [vmem:[%s1 + $0xc] sm:$0xf]
      %v227 = vld [vmem:[%s1 + $0x10] sm:$0xf]
      %v228 = vld [vmem:[%s1 + $0x14] sm:$0xf]
      %v229 = vld [vmem:[%s1 + $0x18] sm:$0xf]
      %v230 = vld [vmem:[%s1 + $0x1c] sm:$0xf]
      %v231 = vld [vmem:[%s1 + $0x20] sm:$0xf]
      %v232 = vld [vmem:[%s1 + $0x24] sm:$0xf]
      %v233 = vld [vmem:[%s1 + $0x28] sm:$0xf]
      %v234 = vld [vmem:[%s1 + $0x2c] sm:$0xf]
      %v235 = vld [vmem:[%s1 + $0x30] sm:$0xf]
      %v236 = vld [vmem:[%s1 + $0x34] sm:$0xf]
      %v237 = vld [vmem:[%s1 + $0x38] sm:$0xf]
      %v238 = vld [vmem:[%s1 + $0x3c] sm:$0xf]
      %v239 = vld [vmem:[%s2] sm:$0x1]
      %v241 = vlaneseq
      %v242 = vshrl.u32 %v241, 7
      %v243 = vsub.s32 0, %v242
      %v244 = vrot.slane %v239, %v243
      %246 = vxpose.xlu0.c.b16.start [1/8] %v215, 128
      %247 = vxpose.xlu0.c.b16.cont [2/8] %v216, 128
      %248 = vxpose.xlu0.c.b16.cont [3/8] %v217, 128
      %249 = vxpose.xlu0.c.b16.cont [4/8] %v218, 128
      %250 = vxpose.xlu0.c.b16.cont [5/8] %v219, 128
      %251 = vxpose.xlu0.c.b16.cont [6/8] %v220, 128
      %252 = vxpose.xlu0.c.b16.cont [7/8] %v221, 128
      %253 = vxpose.xlu0.c.b16.end [8/8] %v222, 128
      %v254 = vpop.trf.xlu0
      %v255 = vpop.trf.xlu0
      %v256 = vpop.trf.xlu0
      %v257 = vpop.trf.xlu0
      %v258 = vpop.trf.xlu0
      %v259 = vpop.trf.xlu0
      %v260 = vpop.trf.xlu0
      %v261 = vpop.trf.xlu0
      %v278 = vunpack.c.l.b16 %v223
      %v279 = vunpack.c.l.b16 %v224
      %v280 = vunpack.c.l.b16 %v225
      %v281 = vunpack.c.l.b16 %v226
      %v282 = vunpack.c.l.b16 %v227
      %v283 = vunpack.c.l.b16 %v228
      %v284 = vunpack.c.l.b16 %v229
      %v285 = vunpack.c.l.b16 %v230
      %v286 = vunpack.c.l.b16 %v231
      %v287 = vunpack.c.l.b16 %v232
      %v288 = vunpack.c.l.b16 %v233
      %v289 = vunpack.c.l.b16 %v234
      %v290 = vunpack.c.l.b16 %v235
      %v291 = vunpack.c.l.b16 %v236
      %v292 = vunpack.c.l.b16 %v237
      %v293 = vunpack.c.l.b16 %v238
      %v294 = vpack.c.b16 %v279, %v278
      %v295 = vpack.c.b16 %v281, %v280
      %v296 = vpack.c.b16 %v283, %v282
      %v297 = vpack.c.b16 %v285, %v284
      %v298 = vpack.c.b16 %v287, %v286
      %v299 = vpack.c.b16 %v289, %v288
      %v300 = vpack.c.b16 %v291, %v290
      %v301 = vpack.c.b16 %v293, %v292
      %310 = vmatprep.subr.bf16.mxu0 0
      %311 = vmatpush1.bf16.msra.mxu0 %v301
      %312 = vmatprep.subr.bf16.mxu0 0
      %313 = vmatpush1.bf16.msra.mxu0 %v300
      %314 = vmatprep.subr.bf16.mxu0 0
      %315 = vmatpush1.bf16.msra.mxu0 %v299
      %316 = vmatprep.subr.bf16.mxu0 0
      %317 = vmatpush1.bf16.msra.mxu0 %v298
      %318 = vmatprep.subr.bf16.mxu0 0
      %319 = vmatpush1.bf16.msra.mxu0 %v297
      %320 = vmatprep.subr.bf16.mxu0 0
      %321 = vmatpush1.bf16.msra.mxu0 %v296
      %322 = vmatprep.subr.bf16.mxu0 0
      %323 = vmatpush1.bf16.msra.mxu0 %v295
      %324 = vmatprep.subr.bf16.mxu0 0
      %325 = vmatpush1.bf16.msra.mxu0 %v294
      %326 = vmatprep.subr.bf16.mxu0 0
      %327 = vmatpush2.bf16.msra.mxu0 0
      %328 = vmatprep.subr.bf16.mxu0 0
      %329 = vmatpush2.bf16.msra.mxu0 0
      %330 = vmatprep.subr.bf16.mxu0 0
      %331 = vmatpush2.bf16.msra.mxu0 0
      %332 = vmatprep.subr.bf16.mxu0 0
      %333 = vmatpush2.bf16.msra.mxu0 0
      %334 = vmatprep.subr.bf16.mxu0 0
      %335 = vmatpush2.bf16.msra.mxu0 0
      %336 = vmatprep.subr.bf16.mxu0 0
      %337 = vmatpush2.bf16.msra.mxu0 0
      %338 = vmatprep.subr.bf16.mxu0 0
      %339 = vmatpush2.bf16.msra.mxu0 0
      %340 = vmatprep.subr.bf16.mxu0 0
      %341 = vmatpush2.bf16.msra.mxu0 0
      %342 = vmatprep.mubr.bf16.mxu0 0
      %343 = vmatmul.mubr.bf16.gmra.mxu0 %v254
      %v344 = vpop.f32.mrf.mxu0
      %v345 = vadd.f32 %v244, %v344
      %v346 = vpop.f32.mrf.mxu0
      %v347 = vpop.f32.mrf.mxu0
      %v348 = vadd.f32 %v244, %v347
      %v349 = vpop.f32.mrf.mxu0
      %350 = vmatprep.mubr.bf16.mxu0 0
      %351 = vmatmul.mubr.bf16.gmra.mxu0 %v255
      %v352 = vpop.f32.mrf.mxu0
      %v353 = vadd.f32 %v244, %v352
      %v354 = vpop.f32.mrf.mxu0
      %v355 = vpop.f32.mrf.mxu0
      %v356 = vadd.f32 %v244, %v355
      %v357 = vpop.f32.mrf.mxu0
      %358 = vmatprep.mubr.bf16.mxu0 0
      %359 = vmatmul.mubr.bf16.gmra.mxu0 %v256
      %v360 = vpop.f32.mrf.mxu0
      %v361 = vadd.f32 %v244, %v360
      %v362 = vpop.f32.mrf.mxu0
      %v363 = vpop.f32.mrf.mxu0
      %v364 = vadd.f32 %v244, %v363
      %v365 = vpop.f32.mrf.mxu0
      %366 = vmatprep.mubr.bf16.mxu0 0
      %367 = vmatmul.mubr.bf16.gmra.mxu0 %v257
      %v368 = vpop.f32.mrf.mxu0
      %v369 = vadd.f32 %v244, %v368
      %v370 = vpop.f32.mrf.mxu0
      %v371 = vpop.f32.mrf.mxu0
      %v372 = vadd.f32 %v244, %v371
      %v373 = vpop.f32.mrf.mxu0
      %374 = vdwg.mxu0
      %v375 = vld [vmem:[%s3] sm:$0xff]
      %v376 = vld [vmem:[%s3 + $0x8] sm:$0xff]
      %v377 = vld [vmem:[%s3 + $0x10] sm:$0xff]
      %v378 = vld [vmem:[%s3 + $0x18] sm:$0xff]
      %v379 = vld [vmem:[%s3 + $0x20] sm:$0xff]
      %v380 = vld [vmem:[%s3 + $0x28] sm:$0xff]
      %v381 = vld [vmem:[%s3 + $0x30] sm:$0xff]
      %v382 = vld [vmem:[%s3 + $0x38] sm:$0xff]
      %v383 = vld [vmem:[%s3 + $0x40] sm:$0xff]
      %v384 = vld [vmem:[%s3 + $0x48] sm:$0xff]
      %v385 = vld [vmem:[%s3 + $0x50] sm:$0xff]
      %v386 = vld [vmem:[%s3 + $0x58] sm:$0xff]
      %v387 = vld [vmem:[%s3 + $0x60] sm:$0xff]
      %v388 = vld [vmem:[%s3 + $0x68] sm:$0xff]
      %v389 = vld [vmem:[%s3 + $0x70] sm:$0xff]
      %v390 = vld [vmem:[%s3 + $0x78] sm:$0xff]
      %v391 = vld [vmem:[%s3 + $0x80] sm:$0xff]
      %v392 = vld [vmem:[%s3 + $0x88] sm:$0xff]
      %v393 = vld [vmem:[%s3 + $0x90] sm:$0xff]
      %v394 = vld [vmem:[%s3 + $0x98] sm:$0xff]
      %v395 = vld [vmem:[%s3 + $0xa0] sm:$0xff]
      %v396 = vld [vmem:[%s3 + $0xa8] sm:$0xff]
      %v397 = vld [vmem:[%s3 + $0xb0] sm:$0xff]
      %v398 = vld [vmem:[%s3 + $0xb8] sm:$0xff]
      %v399 = vld [vmem:[%s3 + $0xc0] sm:$0xff]
      %v400 = vld [vmem:[%s3 + $0xc8] sm:$0xff]
      %v401 = vld [vmem:[%s3 + $0xd0] sm:$0xff]
      %v402 = vld [vmem:[%s3 + $0xd8] sm:$0xff]
      %v403 = vld [vmem:[%s3 + $0xe0] sm:$0xff]
      %v404 = vld [vmem:[%s3 + $0xe8] sm:$0xff]
      %v405 = vld [vmem:[%s3 + $0xf0] sm:$0xff]
      %v406 = vld [vmem:[%s3 + $0xf8] sm:$0xff]
      %vm407 = vcmask 523264
      %v409 = vsel %vm407, %v375, 0
      %v412 = vsel %vm407, %v376, 0
      %v415 = vsel %vm407, %v377, 0
      %v418 = vsel %vm407, %v378, 0
      %v421 = vsel %vm407, %v379, 0
      %v424 = vsel %vm407, %v380, 0
      %v427 = vsel %vm407, %v381, 0
      %v430 = vsel %vm407, %v382, 0
      %v433 = vsel %vm407, %v383, 0
      %v436 = vsel %vm407, %v384, 0
      %v439 = vsel %vm407, %v385, 0
      %v442 = vsel %vm407, %v386, 0
      %v445 = vsel %vm407, %v387, 0
      %v448 = vsel %vm407, %v388, 0
      %v451 = vsel %vm407, %v389, 0
      %v454 = vsel %vm407, %v390, 0
      %v457 = vsel %vm407, %v391, 0
      %v460 = vsel %vm407, %v392, 0
      %v463 = vsel %vm407, %v393, 0
      %v466 = vsel %vm407, %v394, 0
      %v469 = vsel %vm407, %v395, 0
      %v472 = vsel %vm407, %v396, 0
      %v475 = vsel %vm407, %v397, 0
      %v478 = vsel %vm407, %v398, 0
      %v481 = vsel %vm407, %v399, 0
      %v484 = vsel %vm407, %v400, 0
      %v487 = vsel %vm407, %v401, 0
      %v490 = vsel %vm407, %v402, 0
      %v493 = vsel %vm407, %v403, 0
      %v496 = vsel %vm407, %v404, 0
      %v499 = vsel %vm407, %v405, 0
      %v502 = vsel %vm407, %v406, 0
      %504 = vmatprep.subr.mxu0 0.0
      %505 = vmatpush1.msra.mxu0 0.0
      %506 = vmatprep.subr.mxu0 0.0
      %507 = vmatpush1.msra.mxu0 0.0
      %508 = vmatprep.subr.mxu0 0.0
      %509 = vmatpush1.msra.mxu0 0.0
      %510 = vmatprep.subr.mxu0 0.0
      %511 = vmatpush1.msra.mxu0 0.0
      %512 = vmatprep.subr.mxu0 0.0
      %513 = vmatpush1.msra.mxu0 0.0
      %514 = vmatprep.subr.mxu0 0.0
      %515 = vmatpush1.msra.mxu0 0.0
      %516 = vmatprep.subr.mxu0 0.0
      %517 = vmatpush1.msra.mxu0 0.0
      %518 = vmatprep.subr.mxu0 0.0
      %519 = vmatpush1.msra.mxu0 0.0
      %520 = vmatprep.subr.mxu0 0.0
      %521 = vmatpush1.msra.mxu0 %v372
      %522 = vmatprep.subr.mxu0 0.0
      %523 = vmatpush1.msra.mxu0 %v369
      %524 = vmatprep.subr.mxu0 0.0
      %525 = vmatpush1.msra.mxu0 %v364
      %526 = vmatprep.subr.mxu0 0.0
      %527 = vmatpush1.msra.mxu0 %v361
      %528 = vmatprep.subr.mxu0 0.0
      %529 = vmatpush1.msra.mxu0 %v356
      %530 = vmatprep.subr.mxu0 0.0
      %531 = vmatpush1.msra.mxu0 %v353
      %532 = vmatprep.subr.mxu0 0.0
      %533 = vmatpush1.msra.mxu0 %v348
      %534 = vmatprep.subr.mxu0 0.0
      %535 = vmatpush1.msra.mxu0 %v345
      %536 = vmatprep.subr.mxu0 0.0
      %537 = vmatpush2.msra.mxu0 0.0
      %538 = vmatprep.subr.mxu0 0.0
      %539 = vmatpush2.msra.mxu0 0.0
      %540 = vmatprep.subr.mxu0 0.0
      %541 = vmatpush2.msra.mxu0 0.0
      %542 = vmatprep.subr.mxu0 0.0
      %543 = vmatpush2.msra.mxu0 0.0
      %544 = vmatprep.subr.mxu0 0.0
      %545 = vmatpush2.msra.mxu0 0.0
      %546 = vmatprep.subr.mxu0 0.0
      %547 = vmatpush2.msra.mxu0 0.0
      %548 = vmatprep.subr.mxu0 0.0
      %549 = vmatpush2.msra.mxu0 0.0
      %550 = vmatprep.subr.mxu0 0.0
      %551 = vmatpush2.msra.mxu0 0.0
      %552 = vmatprep.subr.mxu0 0.0
      %553 = vmatpush2.msra.mxu0 0.0
      %554 = vmatprep.subr.mxu0 0.0
      %555 = vmatpush2.msra.mxu0 0.0
      %556 = vmatprep.subr.mxu0 0.0
      %557 = vmatpush2.msra.mxu0 0.0
      %558 = vmatprep.subr.mxu0 0.0
      %559 = vmatpush2.msra.mxu0 0.0
      %560 = vmatprep.subr.mxu0 0.0
      %561 = vmatpush2.msra.mxu0 0.0
      %562 = vmatprep.subr.mxu0 0.0
      %563 = vmatpush2.msra.mxu0 0.0
      %564 = vmatprep.subr.mxu0 0.0
      %565 = vmatpush2.msra.mxu0 0.0
      %566 = vmatprep.subr.mxu0 0.0
      %567 = vmatpush2.msra.mxu0 0.0
      %568 = vmatprep.mubr.f32.mxu0 0.0
      %569 = vmatmul.mubr.f32.gmra.mxu0 %v409
      %v570 = vpop.f32.mrf.mxu0
      %v571 = vadd.f32 0.0, %v570
      %v572 = vpop.f32.mrf.mxu0
      %573 = vmatprep.mubr.f32.mxu0 0.0
      %574 = vmatmul.mubr.f32.gmra.mxu0 %v412
      %v575 = vpop.f32.mrf.mxu0
      %v576 = vadd.f32 0.0, %v575
      %v577 = vpop.f32.mrf.mxu0
      %578 = vmatprep.mubr.f32.mxu0 0.0
      %579 = vmatmul.mubr.f32.gmra.mxu0 %v415
      %v580 = vpop.f32.mrf.mxu0
      %v581 = vadd.f32 0.0, %v580
      %v582 = vpop.f32.mrf.mxu0
      %583 = vmatprep.mubr.f32.mxu0 0.0
      %584 = vmatmul.mubr.f32.gmra.mxu0 %v418
      %v585 = vpop.f32.mrf.mxu0
      %v586 = vadd.f32 0.0, %v585
      %v587 = vpop.f32.mrf.mxu0
      %588 = vmatprep.mubr.f32.mxu0 0.0
      %589 = vmatmul.mubr.f32.gmra.mxu0 %v421
      %v590 = vpop.f32.mrf.mxu0
      %v591 = vadd.f32 0.0, %v590
      %v592 = vpop.f32.mrf.mxu0
      %593 = vmatprep.mubr.f32.mxu0 0.0
      %594 = vmatmul.mubr.f32.gmra.mxu0 %v424
      %v595 = vpop.f32.mrf.mxu0
      %v596 = vadd.f32 0.0, %v595
      %v597 = vpop.f32.mrf.mxu0
      %598 = vmatprep.mubr.f32.mxu0 0.0
      %599 = vmatmul.mubr.f32.gmra.mxu0 %v427
      %v600 = vpop.f32.mrf.mxu0
      %v601 = vadd.f32 0.0, %v600
      %v602 = vpop.f32.mrf.mxu0
      %603 = vmatprep.mubr.f32.mxu0 0.0
      %604 = vmatmul.mubr.f32.gmra.mxu0 %v430
      %v605 = vpop.f32.mrf.mxu0
      %v606 = vadd.f32 0.0, %v605
      %v607 = vpop.f32.mrf.mxu0
      %608 = vmatprep.mubr.f32.mxu0 0.0
      %609 = vmatmul.mubr.f32.gmra.mxu0 %v433
      %v610 = vpop.f32.mrf.mxu0
      %v611 = vadd.f32 0.0, %v610
      %v612 = vpop.f32.mrf.mxu0
      %613 = vmatprep.mubr.f32.mxu0 0.0
      %614 = vmatmul.mubr.f32.gmra.mxu0 %v436
      %v615 = vpop.f32.mrf.mxu0
      %v616 = vadd.f32 0.0, %v615
      %v617 = vpop.f32.mrf.mxu0
      %618 = vmatprep.mubr.f32.mxu0 0.0
      %619 = vmatmul.mubr.f32.gmra.mxu0 %v439
      %v620 = vpop.f32.mrf.mxu0
      %v621 = vadd.f32 0.0, %v620
      %v622 = vpop.f32.mrf.mxu0
      %623 = vmatprep.mubr.f32.mxu0 0.0
      %624 = vmatmul.mubr.f32.gmra.mxu0 %v442
      %v625 = vpop.f32.mrf.mxu0
      %v626 = vadd.f32 0.0, %v625
      %v627 = vpop.f32.mrf.mxu0
      %628 = vmatprep.mubr.f32.mxu0 0.0
      %629 = vmatmul.mubr.f32.gmra.mxu0 %v445
      %v630 = vpop.f32.mrf.mxu0
      %v631 = vadd.f32 0.0, %v630
      %v632 = vpop.f32.mrf.mxu0
      %633 = vmatprep.mubr.f32.mxu0 0.0
      %634 = vmatmul.mubr.f32.gmra.mxu0 %v448
      %v635 = vpop.f32.mrf.mxu0
      %v636 = vadd.f32 0.0, %v635
      %v637 = vpop.f32.mrf.mxu0
      %638 = vmatprep.mubr.f32.mxu0 0.0
      %639 = vmatmul.mubr.f32.gmra.mxu0 %v451
      %v640 = vpop.f32.mrf.mxu0
      %v641 = vadd.f32 0.0, %v640
      %v642 = vpop.f32.mrf.mxu0
      %643 = vmatprep.mubr.f32.mxu0 0.0
      %644 = vmatmul.mubr.f32.gmra.mxu0 %v454
      %v645 = vpop.f32.mrf.mxu0
      %v646 = vadd.f32 0.0, %v645
      %v647 = vpop.f32.mrf.mxu0
      %648 = vmatprep.mubr.f32.mxu0 0.0
      %649 = vmatmul.mubr.f32.gmra.mxu0 %v457
      %v650 = vpop.f32.mrf.mxu0
      %v651 = vadd.f32 0.0, %v650
      %v652 = vpop.f32.mrf.mxu0
      %653 = vmatprep.mubr.f32.mxu0 0.0
      %654 = vmatmul.mubr.f32.gmra.mxu0 %v460
      %v655 = vpop.f32.mrf.mxu0
      %v656 = vadd.f32 0.0, %v655
      %v657 = vpop.f32.mrf.mxu0
      %658 = vmatprep.mubr.f32.mxu0 0.0
      %659 = vmatmul.mubr.f32.gmra.mxu0 %v463
      %v660 = vpop.f32.mrf.mxu0
      %v661 = vadd.f32 0.0, %v660
      %v662 = vpop.f32.mrf.mxu0
      %663 = vmatprep.mubr.f32.mxu0 0.0
      %664 = vmatmul.mubr.f32.gmra.mxu0 %v466
      %v665 = vpop.f32.mrf.mxu0
      %v666 = vadd.f32 0.0, %v665
      %v667 = vpop.f32.mrf.mxu0
      %668 = vmatprep.mubr.f32.mxu0 0.0
      %669 = vmatmul.mubr.f32.gmra.mxu0 %v469
      %v670 = vpop.f32.mrf.mxu0
      %v671 = vadd.f32 0.0, %v670
      %v672 = vpop.f32.mrf.mxu0
      %673 = vmatprep.mubr.f32.mxu0 0.0
      %674 = vmatmul.mubr.f32.gmra.mxu0 %v472
      %v675 = vpop.f32.mrf.mxu0
      %v676 = vadd.f32 0.0, %v675
      %v677 = vpop.f32.mrf.mxu0
      %678 = vmatprep.mubr.f32.mxu0 0.0
      %679 = vmatmul.mubr.f32.gmra.mxu0 %v475
      %v680 = vpop.f32.mrf.mxu0
      %v681 = vadd.f32 0.0, %v680
      %v682 = vpop.f32.mrf.mxu0
      %683 = vmatprep.mubr.f32.mxu0 0.0
      %684 = vmatmul.mubr.f32.gmra.mxu0 %v478
      %v685 = vpop.f32.mrf.mxu0
      %v686 = vadd.f32 0.0, %v685
      %v687 = vpop.f32.mrf.mxu0
      %688 = vmatprep.mubr.f32.mxu0 0.0
      %689 = vmatmul.mubr.f32.gmra.mxu0 %v481
      %v690 = vpop.f32.mrf.mxu0
      %v691 = vadd.f32 0.0, %v690
      %v692 = vpop.f32.mrf.mxu0
      %693 = vmatprep.mubr.f32.mxu0 0.0
      %694 = vmatmul.mubr.f32.gmra.mxu0 %v484
      %v695 = vpop.f32.mrf.mxu0
      %v696 = vadd.f32 0.0, %v695
      %v697 = vpop.f32.mrf.mxu0
      %698 = vmatprep.mubr.f32.mxu0 0.0
      %699 = vmatmul.mubr.f32.gmra.mxu0 %v487
      %v700 = vpop.f32.mrf.mxu0
      %v701 = vadd.f32 0.0, %v700
      %v702 = vpop.f32.mrf.mxu0
      %703 = vmatprep.mubr.f32.mxu0 0.0
      %704 = vmatmul.mubr.f32.gmra.mxu0 %v490
      %v705 = vpop.f32.mrf.mxu0
      %v706 = vadd.f32 0.0, %v705
      %v707 = vpop.f32.mrf.mxu0
      %708 = vmatprep.mubr.f32.mxu0 0.0
      %709 = vmatmul.mubr.f32.gmra.mxu0 %v493
      %v710 = vpop.f32.mrf.mxu0
      %v711 = vadd.f32 0.0, %v710
      %v712 = vpop.f32.mrf.mxu0
      %713 = vmatprep.mubr.f32.mxu0 0.0
      %714 = vmatmul.mubr.f32.gmra.mxu0 %v496
      %v715 = vpop.f32.mrf.mxu0
      %v716 = vadd.f32 0.0, %v715
      %v717 = vpop.f32.mrf.mxu0
      %718 = vmatprep.mubr.f32.mxu0 0.0
      %719 = vmatmul.mubr.f32.gmra.mxu0 %v499
      %v720 = vpop.f32.mrf.mxu0
      %v721 = vadd.f32 0.0, %v720
      %v722 = vpop.f32.mrf.mxu0
      %723 = vmatprep.mubr.f32.mxu0 0.0
      %724 = vmatmul.mubr.f32.gmra.mxu0 %v502
      %v725 = vpop.f32.mrf.mxu0
      %v726 = vadd.f32 0.0, %v725
      %v727 = vpop.f32.mrf.mxu0
      %728 = vdwg.mxu0
      %729 = vst.msk [vmem:[%s197] sm:$0xff] %vm407, %v571
      %730 = vst.msk [vmem:[%s197 + $0x8] sm:$0xff] %vm407, %v576
      %731 = vst.msk [vmem:[%s197 + $0x10] sm:$0xff] %vm407, %v581
      %732 = vst.msk [vmem:[%s197 + $0x18] sm:$0xff] %vm407, %v586
      %733 = vst.msk [vmem:[%s197 + $0x20] sm:$0xff] %vm407, %v591
      %734 = vst.msk [vmem:[%s197 + $0x28] sm:$0xff] %vm407, %v596
      %735 = vst.msk [vmem:[%s197 + $0x30] sm:$0xff] %vm407, %v601
      %736 = vst.msk [vmem:[%s197 + $0x38] sm:$0xff] %vm407, %v606
      %737 = vst.msk [vmem:[%s197 + $0x40] sm:$0xff] %vm407, %v611
      %738 = vst.msk [vmem:[%s197 + $0x48] sm:$0xff] %vm407, %v616
      %739 = vst.msk [vmem:[%s197 + $0x50] sm:$0xff] %vm407, %v621
      %740 = vst.msk [vmem:[%s197 + $0x58] sm:$0xff] %vm407, %v626
      %741 = vst.msk [vmem:[%s197 + $0x60] sm:$0xff] %vm407, %v631
      %742 = vst.msk [vmem:[%s197 + $0x68] sm:$0xff] %vm407, %v636
      %743 = vst.msk [vmem:[%s197 + $0x70] sm:$0xff] %vm407, %v641
      %744 = vst.msk [vmem:[%s197 + $0x78] sm:$0xff] %vm407, %v646
      %745 = vst.msk [vmem:[%s197 + $0x80] sm:$0xff] %vm407, %v651
      %746 = vst.msk [vmem:[%s197 + $0x88] sm:$0xff] %vm407, %v656
      %747 = vst.msk [vmem:[%s197 + $0x90] sm:$0xff] %vm407, %v661
      %748 = vst.msk [vmem:[%s197 + $0x98] sm:$0xff] %vm407, %v666
      %749 = vst.msk [vmem:[%s197 + $0xa0] sm:$0xff] %vm407, %v671
      %750 = vst.msk [vmem:[%s197 + $0xa8] sm:$0xff] %vm407, %v676
      %751 = vst.msk [vmem:[%s197 + $0xb0] sm:$0xff] %vm407, %v681
      %752 = vst.msk [vmem:[%s197 + $0xb8] sm:$0xff] %vm407, %v686
      %753 = vst.msk [vmem:[%s197 + $0xc0] sm:$0xff] %vm407, %v691
      %754 = vst.msk [vmem:[%s197 + $0xc8] sm:$0xff] %vm407, %v696
      %755 = vst.msk [vmem:[%s197 + $0xd0] sm:$0xff] %vm407, %v701
      %756 = vst.msk [vmem:[%s197 + $0xd8] sm:$0xff] %vm407, %v706
      %757 = vst.msk [vmem:[%s197 + $0xe0] sm:$0xff] %vm407, %v711
      %758 = vst.msk [vmem:[%s197 + $0xe8] sm:$0xff] %vm407, %v716
      %759 = vst.msk [vmem:[%s197 + $0xf0] sm:$0xff] %vm407, %v721
      %760 = vst.msk [vmem:[%s197 + $0xf8] sm:$0xff] %vm407, %v726
      %p761 = scmp.lt.s32.totalorder %s15, 1
      %s762 = scalar_select %p761, %s15, 1
      %s763 = smul.addr %s762, 32
      %s764 = smul.addr %s763, 8
      %s765 = scalar_lea.vmem %s4, %s764
      // Predicated region
      $region37: #{up_block_forward.2} parent=35 // pred_check
        %p766 = pneg %p122
      $region38: #{up_block_forward.2} parent=35 // pred_check_branch
        %768 = sbr.rel (%p766) target = $region40
      $region39: #{up_block_forward.2} parent=35 // pred_region
        _
      $region40: #{up_block_forward.2} parent=35 // pred_fallthru
        _
    $region36: #{up_block_forward.2} parent=5 // pred_fallthru
      _
    %p769 = scmp.le.s32.totalorder 2, %s10
    // Predicated region
    $region41: #{up_block_forward.2} parent=5 // pred_check
      %p770 = pneg %p769
    $region42: #{up_block_forward.2} parent=5 // pred_check_branch
      %772 = sbr.rel (%p770) target = $region44
    $region43: #{up_block_forward.2} parent=5 // pred_region
      %s773 = ssub.s32 %s10, 2
      // Predicated region
      $region45: #{up_block_forward.2} parent=43 // pred_check
        %p774 = pneg %p128
      $region46: #{up_block_forward.2} parent=43 // pred_check_branch
        %776 = sbr.rel (%p774) target = $region48
      $region47: #{up_block_forward.2} parent=43 // pred_region
        %p777 = scmp.lt.s32.totalorder %s16, 1
        %s778 = scalar_select %p777, %s16, 1
        %s779 = smul.addr %s778, 32
        %s780 = smul.addr %s779, 8
        %s781 = scalar_lea.vmem %s4, %s780
      $region48: #{up_block_forward.2} parent=43 // pred_fallthru
        _
    $region44: #{up_block_forward.2} parent=5 // pred_fallthru
      _
  $region6: #{up_block_forward.2} parent=0 // loop_footer
    %s14 = sadd.s32 1, %s10
  $region7: #{up_block_forward.2} parent=0 // loop_footer_branch
    %9 = sbr.rel target = $region3
  $region8: #{up_block_forward.2} parent=0 // loop_exit
    _

// kernel: up_block_forward.3
$region0: #{up_block_forward.3}
  #allocation0 [shape = 'u32[]', space=smem, size = 0x4, offset = 0x4, fixed_abs, tag = 'smem constant byte address 0x4 - core index']
  #allocation1 [shape = 'u32[144,128]{1,0:T(1,128)}', space=vmem, size = 0x12000, scoped, tag = 'internal scratch']
  #allocation2 [shape = 'f32[18,18,128]{2,1,0:T(8,128)}', space=vmem, size = 0x36000, scoped, tag = 'scratch operand']
  #allocation3 [shape = 'f32[18,18,64]{2,1,0:T(8,128)}', space=vmem, size = 0x36000, scoped, tag = 'scratch operand']
  %s0 = inlined_call_operand.vmem [shape: f32[2,16,16,64], index: 0, kind: input, shape index: {}]
  %s1 = inlined_call_operand.vmem [shape: f32[2,16,16,64], index: 1, kind: input, shape index: {}]
  %s2 = inlined_call_operand.vmem [shape: bf16[3,384,64], index: 2, kind: input, shape index: {}]
  %s3 = inlined_call_operand.vmem [shape: f32[1,64], index: 3, kind: input, shape index: {}]
  %s4 = inlined_call_operand.vmem [shape: f32[1,64], index: 4, kind: input, shape index: {}]
  %s5 = inlined_call_operand.vmem [shape: bf16[3,192,64], index: 5, kind: input, shape index: {}]
  %s6 = inlined_call_operand.vmem [shape: f32[1,64], index: 6, kind: input, shape index: {}]
  %s7 = inlined_call_operand.vmem [shape: f32[1,64], index: 7, kind: input, shape index: {}]
  %s8 = inlined_call_operand.hbm [shape: f32[2,16,16,64], index: 8, kind: output, shape index: {}]
  %s9 = sld [smem:[#allocation0]]
  $region65: #{up_block_forward.3} parent=0
    _
  %s11 = ssub.s32 1, %s9
  %s12 = scalar_select 0, %s11, %s9
  $region1: #{up_block_forward.3} parent=0
    #allocation4 [shape = 'u8[262144]{0}', space=vmem, size = 0x40000, scoped, tag = 'output window, operand 0']
    #allocation5 [shape = 's32[2]{0}', space=sflag, size = 0x8, scoped, tag = 'scoped memory for up_block_forward.3']
    %13 = vsyncpa [#allocation5], 0
    %s14 = scalar_lea.sflag [#allocation5], 1
    %15 = vsyncpa %s14, 0
    loop: start=0, step=1, limit=4
    $region2: #{up_block_forward.3} parent=1 // loop_pre_header
      _
    $region3: #{up_block_forward.3} parent=1 // loop_header
      %s17 = sphi 0, %s21
      %p18 = scmp.ge.s32.totalorder %s17, 4
      %s27 = sphi 0, %s29
      %s30 = sphi 0, %s27
      %s31 = sphi 0, %s30
      %s47 = sphi 0, %s31
      %s53 = sphi 0, %s55
      %s56 = sphi 0, %s53
      %s57 = sphi 0, %s56
      %s73 = sphi 0, %s57
      %s77 = sphi 0, %s77
      %s79 = sphi 0, %s77
      %s80 = sphi 0, %s79
      %s94 = sphi 0, %s80
      %s98 = sphi 0, %s98
      %s100 = sphi 0, %s98
      %s101 = sphi 0, %s100
      %s115 = sphi 0, %s101
      %s119 = sphi 0, %s119
      %s121 = sphi 0, %s119
      %s122 = sphi 0, %s121
      %s136 = sphi 0, %s122
      %s140 = sphi 0, %s140
      %s142 = sphi 0, %s140
      %s143 = sphi 0, %s142
      %s157 = sphi 0, %s143
      %s161 = sphi 0, %s161
      %s163 = sphi 0, %s161
      %s164 = sphi 0, %s163
      %s178 = sphi 0, %s164
      %s182 = sphi 0, %s182
      %s184 = sphi 0, %s182
      %s185 = sphi 0, %s184
      %s199 = sphi 0, %s185
      %s205 = sphi 0, %s207
      %s208 = sphi 0, %s205
      %s209 = sphi 0, %s208
      %s225 = sphi 0, %s209
    $region4: #{up_block_forward.3} parent=1 // loop_header_branch
      %20 = sbr.rel (%p18) target = $region8
    $region5: #{up_block_forward.3} parent=1 // loop_body
      %s22 = ssub.s32 %s17, 1
      %s23 = ssub.s32 %s17, 2
      %s24 = sadd.s32 %s17, 1
      %s25 = ssub.s32 %s17, %s24
      %p26 = scmp.eq.s32.totalorder %s25, 0
      %s28 = sadd.s32 %s27, 1
      %s29 = scalar_select %p26, %s27, %s28
      %p32 = pneg %p26
      %p33 = scmp.eq.s32.totalorder %s17, 1
      %p34 = por %p32, %p33
      %p35 = scmp.ne.s32.totalorder %s27, %s30
      %p36 = scmp.eq.s32.totalorder %s17, 0
      %p37 = por %p35, %p36
      %p38 = scmp.ne.s32.totalorder %s27, %s30
      %p39 = scmp.eq.s32.totalorder %s22, 1
      %p40 = por %p38, %p39
      %p41 = scmp.ne.s32.totalorder %s30, %s31
      %p42 = scmp.eq.s32.totalorder %s22, 0
      %p43 = por %p41, %p42
      %p44 = scmp.ne.s32.totalorder %s30, %s31
      %p45 = scmp.eq.s32.totalorder %s23, 1
      %p46 = por %p44, %p45
      %p48 = scmp.ne.s32.totalorder %s31, %s47
      %p49 = scmp.eq.s32.totalorder %s23, 0
      %p50 = por %p48, %p49
      %s51 = ssub.s32 %s17, %s24
      %p52 = scmp.eq.s32.totalorder %s51, 0
      %s54 = sadd.s32 %s53, 1
      %s55 = scalar_select %p52, %s53, %s54
      %p58 = pneg %p52
      %p59 = scmp.eq.s32.totalorder %s17, 1
      %p60 = por %p58, %p59
      %p61 = scmp.ne.s32.totalorder %s53, %s56
      %p62 = scmp.eq.s32.totalorder %s17, 0
      %p63 = por %p61, %p62
      %p64 = scmp.ne.s32.totalorder %s53, %s56
      %p65 = scmp.eq.s32.totalorder %s22, 1
      %p66 = por %p64, %p65
      %p67 = scmp.ne.s32.totalorder %s56, %s57
      %p68 = scmp.eq.s32.totalorder %s22, 0
      %p69 = por %p67, %p68
      %p70 = scmp.ne.s32.totalorder %s56, %s57
      %p71 = scmp.eq.s32.totalorder %s23, 1
      %p72 = por %p70, %p71
      %p74 = scmp.ne.s32.totalorder %s57, %s73
      %p75 = scmp.eq.s32.totalorder %s23, 0
      %p76 = por %p74, %p75
      %s78 = sadd.s32 %s77, 1
      %p81 = scmp.eq.s32.totalorder %s17, 1
      %p82 = scmp.ne.s32.totalorder %s77, %s79
      %p83 = scmp.eq.s32.totalorder %s17, 0
      %p84 = por %p82, %p83
      %p85 = scmp.ne.s32.totalorder %s77, %s79
      %p86 = scmp.eq.s32.totalorder %s22, 1
      %p87 = por %p85, %p86
      %p88 = scmp.ne.s32.totalorder %s79, %s80
      %p89 = scmp.eq.s32.totalorder %s22, 0
      %p90 = por %p88, %p89
      %p91 = scmp.ne.s32.totalorder %s79, %s80
      %p92 = scmp.eq.s32.totalorder %s23, 1
      %p93 = por %p91, %p92
      %p95 = scmp.ne.s32.totalorder %s80, %s94
      %p96 = scmp.eq.s32.totalorder %s23, 0
      %p97 = por %p95, %p96
      %s99 = sadd.s32 %s98, 1
      %p102 = scmp.eq.s32.totalorder %s17, 1
      %p103 = scmp.ne.s32.totalorder %s98, %s100
      %p104 = scmp.eq.s32.totalorder %s17, 0
      %p105 = por %p103, %p104
      %p106 = scmp.ne.s32.totalorder %s98, %s100
      %p107 = scmp.eq.s32.totalorder %s22, 1
      %p108 = por %p106, %p107
      %p109 = scmp.ne.s32.totalorder %s100, %s101
      %p110 = scmp.eq.s32.totalorder %s22, 0
      %p111 = por %p109, %p110
      %p112 = scmp.ne.s32.totalorder %s100, %s101
      %p113 = scmp.eq.s32.totalorder %s23, 1
      %p114 = por %p112, %p113
      %p116 = scmp.ne.s32.totalorder %s101, %s115
      %p117 = scmp.eq.s32.totalorder %s23, 0
      %p118 = por %p116, %p117
      %s120 = sadd.s32 %s119, 1
      %p123 = scmp.eq.s32.totalorder %s17, 1
      %p124 = scmp.ne.s32.totalorder %s119, %s121
      %p125 = scmp.eq.s32.totalorder %s17, 0
      %p126 = por %p124, %p125
      %p127 = scmp.ne.s32.totalorder %s119, %s121
      %p128 = scmp.eq.s32.totalorder %s22, 1
      %p129 = por %p127, %p128
      %p130 = scmp.ne.s32.totalorder %s121, %s122
      %p131 = scmp.eq.s32.totalorder %s22, 0
      %p132 = por %p130, %p131
      %p133 = scmp.ne.s32.totalorder %s121, %s122
      %p134 = scmp.eq.s32.totalorder %s23, 1
      %p135 = por %p133, %p134
      %p137 = scmp.ne.s32.totalorder %s122, %s136
      %p138 = scmp.eq.s32.totalorder %s23, 0
      %p139 = por %p137, %p138
      %s141 = sadd.s32 %s140, 1
      %p144 = scmp.eq.s32.totalorder %s17, 1
      %p145 = scmp.ne.s32.totalorder %s140, %s142
      %p146 = scmp.eq.s32.totalorder %s17, 0
      %p147 = por %p145, %p146
      %p148 = scmp.ne.s32.totalorder %s140, %s142
      %p149 = scmp.eq.s32.totalorder %s22, 1
      %p150 = por %p148, %p149
      %p151 = scmp.ne.s32.totalorder %s142, %s143
      %p152 = scmp.eq.s32.totalorder %s22, 0
      %p153 = por %p151, %p152
      %p154 = scmp.ne.s32.totalorder %s142, %s143
      %p155 = scmp.eq.s32.totalorder %s23, 1
      %p156 = por %p154, %p155
      %p158 = scmp.ne.s32.totalorder %s143, %s157
      %p159 = scmp.eq.s32.totalorder %s23, 0
      %p160 = por %p158, %p159
      %s162 = sadd.s32 %s161, 1
      %p165 = scmp.eq.s32.totalorder %s17, 1
      %p166 = scmp.ne.s32.totalorder %s161, %s163
      %p167 = scmp.eq.s32.totalorder %s17, 0
      %p168 = por %p166, %p167
      %p169 = scmp.ne.s32.totalorder %s161, %s163
      %p170 = scmp.eq.s32.totalorder %s22, 1
      %p171 = por %p169, %p170
      %p172 = scmp.ne.s32.totalorder %s163, %s164
      %p173 = scmp.eq.s32.totalorder %s22, 0
      %p174 = por %p172, %p173
      %p175 = scmp.ne.s32.totalorder %s163, %s164
      %p176 = scmp.eq.s32.totalorder %s23, 1
      %p177 = por %p175, %p176
      %p179 = scmp.ne.s32.totalorder %s164, %s178
      %p180 = scmp.eq.s32.totalorder %s23, 0
      %p181 = por %p179, %p180
      %s183 = sadd.s32 %s182, 1
      %p186 = scmp.eq.s32.totalorder %s17, 1
      %p187 = scmp.ne.s32.totalorder %s182, %s184
      %p188 = scmp.eq.s32.totalorder %s17, 0
      %p189 = por %p187, %p188
      %p190 = scmp.ne.s32.totalorder %s182, %s184
      %p191 = scmp.eq.s32.totalorder %s22, 1
      %p192 = por %p190, %p191
      %p193 = scmp.ne.s32.totalorder %s184, %s185
      %p194 = scmp.eq.s32.totalorder %s22, 0
      %p195 = por %p193, %p194
      %p196 = scmp.ne.s32.totalorder %s184, %s185
      %p197 = scmp.eq.s32.totalorder %s23, 1
      %p198 = por %p196, %p197
      %p200 = scmp.ne.s32.totalorder %s185, %s199
      %p201 = scmp.eq.s32.totalorder %s23, 0
      %p202 = por %p200, %p201
      %s203 = ssub.s32 %s17, %s24
      %p204 = scmp.eq.s32.totalorder %s203, 0
      %s206 = sadd.s32 %s205, 1
      %s207 = scalar_select %p204, %s205, %s206
      %p210 = pneg %p204
      %p211 = scmp.eq.s32.totalorder %s17, 1
      %p212 = por %p210, %p211
      %p213 = scmp.ne.s32.totalorder %s205, %s208
      %p214 = scmp.eq.s32.totalorder %s17, 0
      %p215 = por %p213, %p214
      %p216 = scmp.ne.s32.totalorder %s205, %s208
      %p217 = scmp.eq.s32.totalorder %s22, 1
      %p218 = por %p216, %p217
      %p219 = scmp.ne.s32.totalorder %s208, %s209
      %p220 = scmp.eq.s32.totalorder %s22, 0
      %p221 = por %p219, %p220
      %p222 = scmp.ne.s32.totalorder %s208, %s209
      %p223 = scmp.eq.s32.totalorder %s23, 1
      %p224 = por %p222, %p223
      %p226 = scmp.ne.s32.totalorder %s209, %s225
      %p227 = scmp.eq.s32.totalorder %s23, 0
      %p228 = por %p226, %p227
      %p229 = scmp.le.s32.totalorder 1, %s17
      %p230 = scmp.lt.s32.totalorder %s17, 3
      %p231 = pnand %p229, %p230
      %p232 = pneg %p231
      // Predicated region
      $region9: #{up_block_forward.3} parent=5 // pred_check
        _
      $region10: #{up_block_forward.3} parent=5 // pred_check_branch
        %234 = sbr.rel (%p231) target = $region12
      $region11: #{up_block_forward.3} parent=5 // pred_region
        %s235 = ssub.s32 %s17, 1
        // Predicated region
        $region13: #{up_block_forward.3} parent=11 // pred_check
          %p236 = pneg %p90
        $region14: #{up_block_forward.3} parent=11 // pred_check_branch
          %238 = sbr.rel (%p236) target = $region16
        $region15: #{up_block_forward.3} parent=11 // pred_region
          _
        $region16: #{up_block_forward.3} parent=11 // pred_fallthru
          _
        // Predicated region
        $region17: #{up_block_forward.3} parent=11 // pred_check
          %p239 = pneg %p111
        $region18: #{up_block_forward.3} parent=11 // pred_check_branch
          %241 = sbr.rel (%p239) target = $region20
        $region19: #{up_block_forward.3} parent=11 // pred_region
          _
        $region20: #{up_block_forward.3} parent=11 // pred_fallthru
          _
        // Predicated region
        $region21: #{up_block_forward.3} parent=11 // pred_check
          %p242 = pneg %p132
        $region22: #{up_block_forward.3} parent=11 // pred_check_branch
          %244 = sbr.rel (%p242) target = $region24
        $region23: #{up_block_forward.3} parent=11 // pred_region
          _
        $region24: #{up_block_forward.3} parent=11 // pred_fallthru
          _
        // Predicated region
        $region25: #{up_block_forward.3} parent=11 // pred_check
          %p245 = pneg %p153
        $region26: #{up_block_forward.3} parent=11 // pred_check_branch
          %247 = sbr.rel (%p245) target = $region28
        $region27: #{up_block_forward.3} parent=11 // pred_region
          _
        $region28: #{up_block_forward.3} parent=11 // pred_fallthru
          _
        // Predicated region
        $region29: #{up_block_forward.3} parent=11 // pred_check
          %p248 = pneg %p174
        $region30: #{up_block_forward.3} parent=11 // pred_check_branch
          %250 = sbr.rel (%p248) target = $region32
        $region31: #{up_block_forward.3} parent=11 // pred_region
          _
        $region32: #{up_block_forward.3} parent=11 // pred_fallthru
          _
        // Predicated region
        $region33: #{up_block_forward.3} parent=11 // pred_check
          %p251 = pneg %p195
        $region34: #{up_block_forward.3} parent=11 // pred_check_branch
          %253 = sbr.rel (%p251) target = $region36
        $region35: #{up_block_forward.3} parent=11 // pred_region
          _
        $region36: #{up_block_forward.3} parent=11 // pred_fallthru
          _
      $region12: #{up_block_forward.3} parent=5 // pred_fallthru
        _
      %p254 = scmp.lt.s32.totalorder %s17, 2
      // Predicated region
      $region37: #{up_block_forward.3} parent=5 // pred_check
        %p255 = pneg %p254
      $region38: #{up_block_forward.3} parent=5 // pred_check_branch
        %257 = sbr.rel (%p255) target = $region40
      $region39: #{up_block_forward.3} parent=5 // pred_region
        // Predicated region
        $region41: #{up_block_forward.3} parent=39 // pred_check
          %p258 = pneg %p37
        $region42: #{up_block_forward.3} parent=39 // pred_check_branch
          %260 = sbr.rel (%p258) target = $region44
        $region43: #{up_block_forward.3} parent=39 // pred_region
          %p261 = scmp.lt.s32.totalorder %s17, 1
          %s262 = scalar_select %p261, %s17, 1
          %s263 = smul.addr %s262, 32
          %s264 = smul.addr %s263, 8
          %s265 = scalar_lea.vmem %s0, %s264
        $region44: #{up_block_forward.3} parent=39 // pred_fallthru
          _
        // Predicated region
        $region45: #{up_block_forward.3} parent=39 // pred_check
          %p266 = pneg %p63
        $region46: #{up_block_forward.3} parent=39 // pred_check_branch
          %268 = sbr.rel (%p266) target = $region48
        $region47: #{up_block_forward.3} parent=39 // pred_region
          %p269 = scmp.lt.s32.totalorder %s17, 1
          %s270 = scalar_select %p269, %s17, 1
          %s271 = smul.addr %s270, 32
          %s272 = smul.addr %s271, 8
          %s273 = scalar_lea.vmem %s1, %s272
        $region48: #{up_block_forward.3} parent=39 // pred_fallthru
          _
      $region40: #{up_block_forward.3} parent=5 // pred_fallthru
        _
      %p274 = scmp.le.s32.totalorder 1, %s17
      %p275 = scmp.lt.s32.totalorder %s17, 3
      %p276 = pnand %p274, %p275
      %p277 = pneg %p276
      // Predicated region
      $region49: #{up_block_forward.3} parent=5 // pred_check
        _
      $region50: #{up_block_forward.3} parent=5 // pred_check_branch
        %279 = sbr.rel (%p276) target = $region52
      $region51: #{up_block_forward.3} parent=5 // pred_region
        %s280 = ssub.s32 %s17, 1
        %p281 = scmp.lt.s32.totalorder %s22, 1
        %s282 = scalar_select %p281, %s22, 1
        %s283 = smul.addr %s282, 32
        %s284 = smul.addr %s283, 8
        %s285 = scalar_lea.vmem %s0, %s284
        %p286 = pneg %p43
        %p287 = pneg %p40
        %p288 = scmp.lt.s32.totalorder %s22, 1
        %s289 = scalar_select %p288, %s22, 1
        %s290 = smul.addr %s289, 32
        %s291 = smul.addr %s290, 8
        %s292 = scalar_lea.vmem %s1, %s291
        %p293 = pneg %p69
        %p294 = pneg %p66
        %p295 = pneg %p90
        %p296 = pneg %p87
        %p297 = pneg %p111
        %p298 = pneg %p108
        %p299 = pneg %p132
        %p300 = pneg %p129
        %p301 = pneg %p153
        %p302 = pneg %p150
        %p303 = pneg %p174
        %p304 = pneg %p171
        %p305 = pneg %p195
        %p306 = pneg %p192
        %p307 = pneg %p221
        %p308 = pneg %p218
        %s309 = sand.u32 %s208, 1
        %s310 = scalar_lea.sflag [#allocation5], %s309
        %s311 = sand.u32 %s208, 1
        %s312 = smul.addr %s311, 256
        %s313 = scalar_lea.vmem [#allocation4], %s312
        %p314 = scmp.lt.s32.totalorder %s22, 1
        %s315 = scalar_select %p314, %s22, 1
        %s316 = smul.addr %s315, 32
        %s317 = smul.addr %s316, 8
        %s318 = scalar_lea.vmem %s0, %s317
        %p319 = scmp.lt.s32.totalorder %s22, 1
        %s320 = scalar_select %p319, %s22, 1
        %s321 = smul.addr %s320, 32
        %s322 = smul.addr %s321, 8
        %s323 = scalar_lea.vmem %s1, %s322
        %v325 = vld [vmem:[%s318] sm:$0xff]
        %v326 = vld [vmem:[%s318 + $0x8] sm:$0xff]
        %v327 = vld [vmem:[%s318 + $0x10] sm:$0xff]
        %v328 = vld [vmem:[%s318 + $0x18] sm:$0xff]
        %v329 = vld [vmem:[%s318 + $0x20] sm:$0xff]
        %v330 = vld [vmem:[%s318 + $0x28] sm:$0xff]
        %v331 = vld [vmem:[%s318 + $0x30] sm:$0xff]
        %v332 = vld [vmem:[%s318 + $0x38] sm:$0xff]
        %v333 = vld [vmem:[%s318 + $0x40] sm:$0xff]
        %v334 = vld [vmem:[%s318 + $0x48] sm:$0xff]
        %v335 = vld [vmem:[%s318 + $0x50] sm:$0xff]
        %v336 = vld [vmem:[%s318 + $0x58] sm:$0xff]
        %v337 = vld [vmem:[%s318 + $0x60] sm:$0xff]
        %v338 = vld [vmem:[%s318 + $0x68] sm:$0xff]
        %v339 = vld [vmem:[%s318 + $0x70] sm:$0xff]
        %v340 = vld [vmem:[%s318 + $0x78] sm:$0xff]
        %v341 = vld [vmem:[%s318 + $0x80] sm:$0xff]
        %v342 = vld [vmem:[%s318 + $0x88] sm:$0xff]
        %v343 = vld [vmem:[%s318 + $0x90] sm:$0xff]
        %v344 = vld [vmem:[%s318 + $0x98] sm:$0xff]
        %v345 = vld [vmem:[%s318 + $0xa0] sm:$0xff]
        %v346 = vld [vmem:[%s318 + $0xa8] sm:$0xff]
        %v347 = vld [vmem:[%s318 + $0xb0] sm:$0xff]
        %v348 = vld [vmem:[%s318 + $0xb8] sm:$0xff]
        %v349 = vld [vmem:[%s318 + $0xc0] sm:$0xff]
        %v350 = vld [vmem:[%s318 + $0xc8] sm:$0xff]
        %v351 = vld [vmem:[%s318 + $0xd0] sm:$0xff]
        %v352 = vld [vmem:[%s318 + $0xd8] sm:$0xff]
        %v353 = vld [vmem:[%s318 + $0xe0] sm:$0xff]
        %v354 = vld [vmem:[%s318 + $0xe8] sm:$0xff]
        %v355 = vld [vmem:[%s318 + $0xf0] sm:$0xff]
        %v356 = vld [vmem:[%s318 + $0xf8] sm:$0xff]
        %v357 = vld [vmem:[%s323] sm:$0xff]
        %v358 = vld [vmem:[%s323 + $0x8] sm:$0xff]
        %v359 = vld [vmem:[%s323 + $0x10] sm:$0xff]
        %v360 = vld [vmem:[%s323 + $0x18] sm:$0xff]
        %v361 = vld [vmem:[%s323 + $0x20] sm:$0xff]
        %v362 = vld [vmem:[%s323 + $0x28] sm:$0xff]
        %v363 = vld [vmem:[%s323 + $0x30] sm:$0xff]
        %v364 = vld [vmem:[%s323 + $0x38] sm:$0xff]
        %v365 = vld [vmem:[%s323 + $0x40] sm:$0xff]
        %v366 = vld [vmem:[%s323 + $0x48] sm:$0xff]
        %v367 = vld [vmem:[%s323 + $0x50] sm:$0xff]
        %v368 = vld [vmem:[%s323 + $0x58] sm:$0xff]
        %v369 = vld [vmem:[%s323 + $0x60] sm:$0xff]
        %v370 = vld [vmem:[%s323 + $0x68] sm:$0xff]
        %v371 = vld [vmem:[%s323 + $0x70] sm:$0xff]
        %v372 = vld [vmem:[%s323 + $0x78] sm:$0xff]
        %v373 = vld [vmem:[%s323 + $0x80] sm:$0xff]
        %v374 = vld [vmem:[%s323 + $0x88] sm:$0xff]
        %v375 = vld [vmem:[%s323 + $0x90] sm:$0xff]
        %v376 = vld [vmem:[%s323 + $0x98] sm:$0xff]
        %v377 = vld [vmem:[%s323 + $0xa0] sm:$0xff]
        %v378 = vld [vmem:[%s323 + $0xa8] sm:$0xff]
        %v379 = vld [vmem:[%s323 + $0xb0] sm:$0xff]
        %v380 = vld [vmem:[%s323 + $0xb8] sm:$0xff]
        %v381 = vld [vmem:[%s323 + $0xc0] sm:$0xff]
        %v382 = vld [vmem:[%s323 + $0xc8] sm:$0xff]
        %v383 = vld [vmem:[%s323 + $0xd0] sm:$0xff]
        %v384 = vld [vmem:[%s323 + $0xd8] sm:$0xff]
        %v385 = vld [vmem:[%s323 + $0xe0] sm:$0xff]
        %v386 = vld [vmem:[%s323 + $0xe8] sm:$0xff]
        %v387 = vld [vmem:[%s323 + $0xf0] sm:$0xff]
        %v388 = vld [vmem:[%s323 + $0xf8] sm:$0xff]
        %421 = vrot.lane.b32.xlu0 %v357, 64
        %v422 = vpop.permute.xlu0 %421
        %423 = vrot.lane.b32.xlu0 %v358, 64
        %v424 = vpop.permute.xlu0 %423
        %425 = vrot.lane.b32.xlu0 %v359, 64
        %v426 = vpop.permute.xlu0 %425
        %427 = vrot.lane.b32.xlu0 %v360, 64
        %v428 = vpop.permute.xlu0 %427
        %429 = vrot.lane.b32.xlu0 %v361, 64
        %v430 = vpop.permute.xlu0 %429
        %431 = vrot.lane.b32.xlu0 %v362, 64
        %v432 = vpop.permute.xlu0 %431
        %433 = vrot.lane.b32.xlu0 %v363, 64
        %v434 = vpop.permute.xlu0 %433
        %435 = vrot.lane.b32.xlu0 %v364, 64
        %v436 = vpop.permute.xlu0 %435
        %437 = vrot.lane.b32.xlu0 %v365, 64
        %v438 = vpop.permute.xlu0 %437
        %439 = vrot.lane.b32.xlu0 %v366, 64
        %v440 = vpop.permute.xlu0 %439
        %441 = vrot.lane.b32.xlu0 %v367, 64
        %v442 = vpop.permute.xlu0 %441
        %443 = vrot.lane.b32.xlu0 %v368, 64
        %v444 = vpop.permute.xlu0 %443
        %445 = vrot.lane.b32.xlu0 %v369, 64
        %v446 = vpop.permute.xlu0 %445
        %447 = vrot.lane.b32.xlu0 %v370, 64
        %v448 = vpop.permute.xlu0 %447
        %449 = vrot.lane.b32.xlu0 %v371, 64
        %v450 = vpop.permute.xlu0 %449
        %451 = vrot.lane.b32.xlu0 %v372, 64
        %v452 = vpop.permute.xlu0 %451
        %453 = vrot.lane.b32.xlu0 %v373, 64
        %v454 = vpop.permute.xlu0 %453
        %455 = vrot.lane.b32.xlu0 %v374, 64
        %v456 = vpop.permute.xlu0 %455
        %457 = vrot.lane.b32.xlu0 %v375, 64
        %v458 = vpop.permute.xlu0 %457
        %459 = vrot.lane.b32.xlu0 %v376, 64
        %v460 = vpop.permute.xlu0 %459
        %461 = vrot.lane.b32.xlu0 %v377, 64
        %v462 = vpop.permute.xlu0 %461
        %463 = vrot.lane.b32.xlu0 %v378, 64
        %v464 = vpop.permute.xlu0 %463
        %465 = vrot.lane.b32.xlu0 %v379, 64
        %v466 = vpop.permute.xlu0 %465
        %467 = vrot.lane.b32.xlu0 %v380, 64
        %v468 = vpop.permute.xlu0 %467
        %469 = vrot.lane.b32.xlu0 %v381, 64
        %v470 = vpop.permute.xlu0 %469
        %471 = vrot.lane.b32.xlu0 %v382, 64
        %v472 = vpop.permute.xlu0 %471
        %473 = vrot.lane.b32.xlu0 %v383, 64
        %v474 = vpop.permute.xlu0 %473
        %475 = vrot.lane.b32.xlu0 %v384, 64
        %v476 = vpop.permute.xlu0 %475
        %477 = vrot.lane.b32.xlu0 %v385, 64
        %v478 = vpop.permute.xlu0 %477
        %479 = vrot.lane.b32.xlu0 %v386, 64
        %v480 = vpop.permute.xlu0 %479
        %481 = vrot.lane.b32.xlu0 %v387, 64
        %v482 = vpop.permute.xlu0 %481
        %483 = vrot.lane.b32.xlu0 %v388, 64
        %v484 = vpop.permute.xlu0 %483
        %vm517 = vcmask 523264
        %v518 = vsel %vm517, %v325, %v422
        %v519 = vsel %vm517, %v326, %v424
        %v520 = vsel %vm517, %v327, %v426
        %v521 = vsel %vm517, %v328, %v428
        %v522 = vsel %vm517, %v329, %v430
        %v523 = vsel %vm517, %v330, %v432
        %v524 = vsel %vm517, %v331, %v434
        %v525 = vsel %vm517, %v332, %v436
        %v526 = vsel %vm517, %v333, %v438
        %v527 = vsel %vm517, %v334, %v440
        %v528 = vsel %vm517, %v335, %v442
        %v529 = vsel %vm517, %v336, %v444
        %v530 = vsel %vm517, %v337, %v446
        %v531 = vsel %vm517, %v338, %v448
        %v532 = vsel %vm517, %v339, %v450
        %v533 = vsel %vm517, %v340, %v452
        %v534 = vsel %vm517, %v341, %v454
        %v535 = vsel %vm517, %v342, %v456
        %v536 = vsel %vm517, %v343, %v458
        %v537 = vsel %vm517, %v344, %v460
        %v538 = vsel %vm517, %v345, %v462
        %v539 = vsel %vm517, %v346, %v464
        %v540 = vsel %vm517, %v347, %v466
        %v541 = vsel %vm517, %v348, %v468
        %v542 = vsel %vm517, %v349, %v470
        %v543 = vsel %vm517, %v350, %v472
        %v544 = vsel %vm517, %v351, %v474
        %v545 = vsel %vm517, %v352, %v476
        %v546 = vsel %vm517, %v353, %v478
        %v547 = vsel %vm517, %v354, %v480
        %v548 = vsel %vm517, %v355, %v482
        %v549 = vsel %vm517, %v356, %v484
        %vm583 = vcmask 1040384
        %v584 = vrot.slane 0.0, 7
        %v585 = vsel %vm583, %v584, %v584
        %v586 = vrot.slane %v518, 7
        %v587 = vrot.slane %v519, 7
        %v588 = vsel %vm583, %v586, %v587
        %v589 = vrot.slane %v520, 7
        %v590 = vrot.slane %v521, 7
        %v591 = vsel %vm583, %v589, %v590
        %v592 = vrot.slane %v522, 7
        %v593 = vrot.slane %v523, 7
        %v594 = vsel %vm583, %v592, %v593
        %v595 = vrot.slane %v524, 7
        %v596 = vrot.slane %v525, 7
        %v597 = vsel %vm583, %v595, %v596
        %v598 = vrot.slane %v526, 7
        %v599 = vrot.slane %v527, 7
        %v600 = vsel %vm583, %v598, %v599
        %v601 = vrot.slane %v528, 7
        %v602 = vrot.slane %v529, 7
        %v603 = vsel %vm583, %v601, %v602
        %v604 = vrot.slane %v530, 7
        %v605 = vrot.slane %v531, 7
        %v606 = vsel %vm583, %v604, %v605
        %v607 = vrot.slane %v532, 7
        %v608 = vrot.slane %v533, 7
        %v609 = vsel %vm583, %v607, %v608
        %v610 = vrot.slane %v534, 7
        %v611 = vrot.slane %v535, 7
        %v612 = vsel %vm583, %v610, %v611
        %v613 = vrot.slane %v536, 7
        %v614 = vrot.slane %v537, 7
        %v615 = vsel %vm583, %v613, %v614
        %v616 = vrot.slane %v538, 7
        %v617 = vrot.slane %v539, 7
        %v618 = vsel %vm583, %v616, %v617
        %v619 = vrot.slane %v540, 7
        %v620 = vrot.slane %v541, 7
        %v621 = vsel %vm583, %v619, %v620
        %v622 = vrot.slane %v542, 7
        %v623 = vrot.slane %v543, 7
        %v624 = vsel %vm583, %v622, %v623
        %v625 = vrot.slane %v544, 7
        %v626 = vrot.slane %v545, 7
        %v627 = vsel %vm583, %v625, %v626
        %v628 = vrot.slane %v546, 7
        %v629 = vrot.slane %v547, 7
        %v630 = vsel %vm583, %v628, %v629
        %v631 = vrot.slane %v548, 7
        %v632 = vrot.slane %v549, 7
        %v633 = vsel %vm583, %v631, %v632
        %v684 = vsel %vm583, 0.0, %v584
        %v685 = vsel %vm583, 0.0, %v586
        %v686 = vsel %vm583, 0.0, %v589
        %v687 = vsel %vm583, 0.0, %v592
        %v688 = vsel %vm583, 0.0, %v595
        %v689 = vsel %vm583, 0.0, %v598
        %v690 = vsel %vm583, 0.0, %v601
        %v691 = vsel %vm583, 0.0, %v604
        %v692 = vsel %vm583, 0.0, %v607
        %v693 = vsel %vm583, 0.0, %v610
        %v694 = vsel %vm583, 0.0, %v613
        %v695 = vsel %vm583, 0.0, %v616
        %v696 = vsel %vm583, 0.0, %v619
        %v697 = vsel %vm583, 0.0, %v622
        %v698 = vsel %vm583, 0.0, %v625
        %v699 = vsel %vm583, 0.0, %v628
        %v700 = vsel %vm583, 0.0, %v631
        %v701 = vsel %vm583, %v584, 0.0
        %v702 = vsel %vm583, %v587, 0.0
        %v703 = vsel %vm583, %v590, 0.0
        %v704 = vsel %vm583, %v593, 0.0
        %v705 = vsel %vm583, %v596, 0.0
        %v706 = vsel %vm583, %v599, 0.0
        %v707 = vsel %vm583, %v602, 0.0
        %v708 = vsel %vm583, %v605, 0.0
        %v709 = vsel %vm583, %v608, 0.0
        %v710 = vsel %vm583, %v611, 0.0
        %v711 = vsel %vm583, %v614, 0.0
        %v712 = vsel %vm583, %v617, 0.0
        %v713 = vsel %vm583, %v620, 0.0
        %v714 = vsel %vm583, %v623, 0.0
        %v715 = vsel %vm583, %v626, 0.0
        %v716 = vsel %vm583, %v629, 0.0
        %v717 = vsel %vm583, %v632, 0.0
        %718 = vst [vmem:[#allocation2] sm:$0xff] %v684
        %719 = vst [vmem:[#allocation2 + $0x8] sm:$0xff] %v585
        %720 = vst [vmem:[#allocation2 + $0x10] sm:$0x3] %v701
        %721 = vst [vmem:[#allocation2 + $0x18] sm:$0xff] %v685
        %722 = vst [vmem:[#allocation2 + $0x20] sm:$0xff] %v588
        %723 = vst [vmem:[#allocation2 + $0x28] sm:$0x3] %v702
        %724 = vst [vmem:[#allocation2 + $0x30] sm:$0xff] %v686
        %725 = vst [vmem:[#allocation2 + $0x38] sm:$0xff] %v591
        %726 = vst [vmem:[#allocation2 + $0x40] sm:$0x3] %v703
        %727 = vst [vmem:[#allocation2 + $0x48] sm:$0xff] %v687
        %728 = vst [vmem:[#allocation2 + $0x50] sm:$0xff] %v594
        %729 = vst [vmem:[#allocation2 + $0x58] sm:$0x3] %v704
        %730 = vst [vmem:[#allocation2 + $0x60] sm:$0xff] %v688
        %731 = vst [vmem:[#allocation2 + $0x68] sm:$0xff] %v597
        %732 = vst [vmem:[#allocation2 + $0x70] sm:$0x3] %v705
        %733 = vst [vmem:[#allocation2 + $0x78] sm:$0xff] %v689
        %734 = vst [vmem:[#allocation2 + $0x80] sm:$0xff] %v600
        %735 = vst [vmem:[#allocation2 + $0x88] sm:$0x3] %v706
        %736 = vst [vmem:[#allocation2 + $0x90] sm:$0xff] %v690
        %737 = vst [vmem:[#allocation2 + $0x98] sm:$0xff] %v603
        %738 = vst [vmem:[#allocation2 + $0xa0] sm:$0x3] %v707
        %739 = vst [vmem:[#allocation2 + $0xa8] sm:$0xff] %v691
        %740 = vst [vmem:[#allocation2 + $0xb0] sm:$0xff] %v606
        %741 = vst [vmem:[#allocation2 + $0xb8] sm:$0x3] %v708
        %742 = vst [vmem:[#allocation2 + $0xc0] sm:$0xff] %v692
        %743 = vst [vmem:[#allocation2 + $0xc8] sm:$0xff] %v609
        %744 = vst [vmem:[#allocation2 + $0xd0] sm:$0x3] %v709
        %745 = vst [vmem:[#allocation2 + $0xd8] sm:$0xff] %v693
        %746 = vst [vmem:[#allocation2 + $0xe0] sm:$0xff] %v612
        %747 = vst [vmem:[#allocation2 + $0xe8] sm:$0x3] %v710
        %748 = vst [vmem:[#allocation2 + $0xf0] sm:$0xff] %v694
        %749 = vst [vmem:[#allocation2 + $0xf8] sm:$0xff] %v615
        %750 = vst [vmem:[#allocation2 + $0x100] sm:$0x3] %v711
        %751 = vst [vmem:[#allocation2 + $0x108] sm:$0xff] %v695
        %752 = vst [vmem:[#allocation2 + $0x110] sm:$0xff] %v618
        %753 = vst [vmem:[#allocation2 + $0x118] sm:$0x3] %v712
        %754 = vst [vmem:[#allocation2 + $0x120] sm:$0xff] %v696
        %755 = vst [vmem:[#allocation2 + $0x128] sm:$0xff] %v621
        %756 = vst [vmem:[#allocation2 + $0x130] sm:$0x3] %v713
        %757 = vst [vmem:[#allocation2 + $0x138] sm:$0xff] %v697
        %758 = vst [vmem:[#allocation2 + $0x140] sm:$0xff] %v624
        %759 = vst [vmem:[#allocation2 + $0x148] sm:$0x3] %v714
        %760 = vst [vmem:[#allocation2 + $0x150] sm:$0xff] %v698
        %761 = vst [vmem:[#allocation2 + $0x158] sm:$0xff] %v627
        %762 = vst [vmem:[#allocation2 + $0x160] sm:$0x3] %v715
        %763 = vst [vmem:[#allocation2 + $0x168] sm:$0xff] %v699
        %764 = vst [vmem:[#allocation2 + $0x170] sm:$0xff] %v630
        %765 = vst [vmem:[#allocation2 + $0x178] sm:$0x3] %v716
        %766 = vst [vmem:[#allocation2 + $0x180] sm:$0xff] %v700
        %767 = vst [vmem:[#allocation2 + $0x188] sm:$0xff] %v633
        %768 = vst [vmem:[#allocation2 + $0x190] sm:$0x3] %v717
        %769 = vst [vmem:[#allocation2 + $0x198] sm:$0xff] %v684
        %770 = vst [vmem:[#allocation2 + $0x1a0] sm:$0xff] %v585
        %771 = vst [vmem:[#allocation2 + $0x1a8] sm:$0x3] %v701
        %v772 = vld [vmem:[#allocation2] sm:$0xff]
        %v773 = vld [vmem:[#allocation2 + $0x8] sm:$0xff]
        %v774 = vld [vmem:[#allocation2 + $0x18] sm:$0xff]
        %v775 = vld [vmem:[#allocation2 + $0x20] sm:$0xff]
        %v776 = vld [vmem:[#allocation2 + $0x30] sm:$0xff]
        %v777 = vld [vmem:[#allocation2 + $0x38] sm:$0xff]
        %v778 = vld [vmem:[#allocation2 + $0x48] sm:$0xff]
        %v779 = vld [vmem:[#allocation2 + $0x50] sm:$0xff]
        %v780 = vld [vmem:[#allocation2 + $0x60] sm:$0xff]
        %v781 = vld [vmem:[#allocation2 + $0x68] sm:$0xff]
        %v782 = vld [vmem:[#allocation2 + $0x78] sm:$0xff]
        %v783 = vld [vmem:[#allocation2 + $0x80] sm:$0xff]
        %v784 = vld [vmem:[#allocation2 + $0x90] sm:$0xff]
        %v785 = vld [vmem:[#allocation2 + $0x98] sm:$0xff]
        %v786 = vld [vmem:[#allocation2 + $0xa8] sm:$0xff]
        %v787 = vld [vmem:[#allocation2 + $0xb0] sm:$0xff]
        %v788 = vld [vmem:[#allocation2 + $0xc0] sm:$0xff]
        %v789 = vld [vmem:[#allocation2 + $0xc8] sm:$0xff]
        %v790 = vld [vmem:[#allocation2 + $0xd8] sm:$0xff]
        %v791 = vld [vmem:[#allocation2 + $0xe0] sm:$0xff]
        %v792 = vld [vmem:[#allocation2 + $0xf0] sm:$0xff]
        %v793 = vld [vmem:[#allocation2 + $0xf8] sm:$0xff]
        %v794 = vld [vmem:[#allocation2 + $0x108] sm:$0xff]
        %v795 = vld [vmem:[#allocation2 + $0x110] sm:$0xff]
        %v796 = vld [vmem:[#allocation2 + $0x120] sm:$0xff]
        %v797 = vld [vmem:[#allocation2 + $0x128] sm:$0xff]
        %v798 = vld [vmem:[#allocation2 + $0x138] sm:$0xff]
        %v799 = vld [vmem:[#allocation2 + $0x140] sm:$0xff]
        %v800 = vld [vmem:[#allocation2 + $0x150] sm:$0xff]
        %v801 = vld [vmem:[#allocation2 + $0x158] sm:$0xff]
        %v802 = vld [vmem:[#allocation2 + $0x168] sm:$0xff]
        %v803 = vld [vmem:[#allocation2 + $0x170] sm:$0xff]
        %v804 = vld [vmem:[#allocation2 + $0x1] sm:$0xff]
        %v805 = vld [vmem:[#allocation2 + $0x9] sm:$0xff]
        %v806 = vld [vmem:[#allocation2 + $0x19] sm:$0xff]
        %v807 = vld [vmem:[#allocation2 + $0x21] sm:$0xff]
        %v808 = vld [vmem:[#allocation2 + $0x31] sm:$0xff]
        %v809 = vld [vmem:[#allocation2 + $0x39] sm:$0xff]
        %v810 = vld [vmem:[#allocation2 + $0x49] sm:$0xff]
        %v811 = vld [vmem:[#allocation2 + $0x51] sm:$0xff]
        %v812 = vld [vmem:[#allocation2 + $0x61] sm:$0xff]
        %v813 = vld [vmem:[#allocation2 + $0x69] sm:$0xff]
        %v814 = vld [vmem:[#allocation2 + $0x79] sm:$0xff]
        %v815 = vld [vmem:[#allocation2 + $0x81] sm:$0xff]
        %v816 = vld [vmem:[#allocation2 + $0x91] sm:$0xff]
        %v817 = vld [vmem:[#allocation2 + $0x99] sm:$0xff]
        %v818 = vld [vmem:[#allocation2 + $0xa9] sm:$0xff]
        %v819 = vld [vmem:[#allocation2 + $0xb1] sm:$0xff]
        %v820 = vld [vmem:[#allocation2 + $0xc1] sm:$0xff]
        %v821 = vld [vmem:[#allocation2 + $0xc9] sm:$0xff]
        %v822 = vld [vmem:[#allocation2 + $0xd9] sm:$0xff]
        %v823 = vld [vmem:[#allocation2 + $0xe1] sm:$0xff]
        %v824 = vld [vmem:[#allocation2 + $0xf1] sm:$0xff]
        %v825 = vld [vmem:[#allocation2 + $0xf9] sm:$0xff]
        %v826 = vld [vmem:[#allocation2 + $0x109] sm:$0xff]
        %v827 = vld [vmem:[#allocation2 + $0x111] sm:$0xff]
        %v828 = vld [vmem:[#allocation2 + $0x121] sm:$0xff]
        %v829 = vld [vmem:[#allocation2 + $0x129] sm:$0xff]
        %v830 = vld [vmem:[#allocation2 + $0x139] sm:$0xff]
        %v831 = vld [vmem:[#allocation2 + $0x141] sm:$0xff]
        %v832 = vld [vmem:[#allocation2 + $0x151] sm:$0xff]
        %v833 = vld [vmem:[#allocation2 + $0x159] sm:$0xff]
        %v834 = vld [vmem:[#allocation2 + $0x169] sm:$0xff]
        %v835 = vld [vmem:[#allocation2 + $0x171] sm:$0xff]
        %v836 = vld [vmem:[#allocation2 + $0x2] sm:$0xff]
        %v837 = vld [vmem:[#allocation2 + $0xa] sm:$0xff]
        %v838 = vld [vmem:[#allocation2 + $0x1a] sm:$0xff]
        %v839 = vld [vmem:[#allocation2 + $0x22] sm:$0xff]
        %v840 = vld [vmem:[#allocation2 + $0x32] sm:$0xff]
        %v841 = vld [vmem:[#allocation2 + $0x3a] sm:$0xff]
        %v842 = vld [vmem:[#allocation2 + $0x4a] sm:$0xff]
        %v843 = vld [vmem:[#allocation2 + $0x52] sm:$0xff]
        %v844 = vld [vmem:[#allocation2 + $0x62] sm:$0xff]
        %v845 = vld [vmem:[#allocation2 + $0x6a] sm:$0xff]
        %v846 = vld [vmem:[#allocation2 + $0x7a] sm:$0xff]
        %v847 = vld [vmem:[#allocation2 + $0x82] sm:$0xff]
        %v848 = vld [vmem:[#allocation2 + $0x92] sm:$0xff]
        %v849 = vld [vmem:[#allocation2 + $0x9a] sm:$0xff]
        %v850 = vld [vmem:[#allocation2 + $0xaa] sm:$0xff]
        %v851 = vld [vmem:[#allocation2 + $0xb2] sm:$0xff]
        %v852 = vld [vmem:[#allocation2 + $0xc2] sm:$0xff]
        %v853 = vld [vmem:[#allocation2 + $0xca] sm:$0xff]
        %v854 = vld [vmem:[#allocation2 + $0xda] sm:$0xff]
        %v855 = vld [vmem:[#allocation2 + $0xe2] sm:$0xff]
        %v856 = vld [vmem:[#allocation2 + $0xf2] sm:$0xff]
        %v857 = vld [vmem:[#allocation2 + $0xfa] sm:$0xff]
        %v858 = vld [vmem:[#allocation2 + $0x10a] sm:$0xff]
        %v859 = vld [vmem:[#allocation2 + $0x112] sm:$0xff]
        %v860 = vld [vmem:[#allocation2 + $0x122] sm:$0xff]
        %v861 = vld [vmem:[#allocation2 + $0x12a] sm:$0xff]
        %v862 = vld [vmem:[#allocation2 + $0x13a] sm:$0xff]
        %v863 = vld [vmem:[#allocation2 + $0x142] sm:$0xff]
        %v864 = vld [vmem:[#allocation2 + $0x152] sm:$0xff]
        %v865 = vld [vmem:[#allocation2 + $0x15a] sm:$0xff]
        %v866 = vld [vmem:[#allocation2 + $0x16a] sm:$0xff]
        %v867 = vld [vmem:[#allocation2 + $0x172] sm:$0xff]
        %v868 = vpack.c.bf16 %v773, %v772
        %v869 = vpack.c.bf16 %v805, %v804
        %v870 = vpack.c.bf16 %v837, %v836
        %v871 = vpack.c.bf16 %v775, %v774
        %v872 = vpack.c.bf16 %v807, %v806
        %v873 = vpack.c.bf16 %v839, %v838
        %v874 = vpack.c.bf16 %v777, %v776
        %v875 = vpack.c.bf16 %v809, %v808
        %v876 = vpack.c.bf16 %v841, %v840
        %v877 = vpack.c.bf16 %v779, %v778
        %v878 = vpack.c.bf16 %v811, %v810
        %v879 = vpack.c.bf16 %v843, %v842
        %v880 = vpack.c.bf16 %v781, %v780
        %v881 = vpack.c.bf16 %v813, %v812
        %v882 = vpack.c.bf16 %v845, %v844
        %v883 = vpack.c.bf16 %v783, %v782
        %v884 = vpack.c.bf16 %v815, %v814
        %v885 = vpack.c.bf16 %v847, %v846
        %v886 = vpack.c.bf16 %v785, %v784
        %v887 = vpack.c.bf16 %v817, %v816
        %v888 = vpack.c.bf16 %v849, %v848
        %v889 = vpack.c.bf16 %v787, %v786
        %v890 = vpack.c.bf16 %v819, %v818
        %v891 = vpack.c.bf16 %v851, %v850
        %v892 = vpack.c.bf16 %v789, %v788
        %v893 = vpack.c.bf16 %v821, %v820
        %v894 = vpack.c.bf16 %v853, %v852
        %v895 = vpack.c.bf16 %v791, %v790
        %v896 = vpack.c.bf16 %v823, %v822
        %v897 = vpack.c.bf16 %v855, %v854
        %v898 = vpack.c.bf16 %v793, %v792
        %v899 = vpack.c.bf16 %v825, %v824
        %v900 = vpack.c.bf16 %v857, %v856
        %v901 = vpack.c.bf16 %v795, %v794
        %v902 = vpack.c.bf16 %v827, %v826
        %v903 = vpack.c.bf16 %v859, %v858
        %v904 = vpack.c.bf16 %v797, %v796
        %v905 = vpack.c.bf16 %v829, %v828
        %v906 = vpack.c.bf16 %v861, %v860
        %v907 = vpack.c.bf16 %v799, %v798
        %v908 = vpack.c.bf16 %v831, %v830
        %v909 = vpack.c.bf16 %v863, %v862
        %v910 = vpack.c.bf16 %v801, %v800
        %v911 = vpack.c.bf16 %v833, %v832
        %v912 = vpack.c.bf16 %v865, %v864
        %v913 = vpack.c.bf16 %v803, %v802
        %v914 = vpack.c.bf16 %v835, %v834
        %v915 = vpack.c.bf16 %v867, %v866
        %v916 = vld [vmem:[%s2] sm:$0xf]
        %v917 = vld [vmem:[%s2 + $0x4] sm:$0xf]
        %v918 = vld [vmem:[%s2 + $0x8] sm:$0xf]
        %v919 = vld [vmem:[%s2 + $0xc] sm:$0xf]
        %v920 = vld [vmem:[%s2 + $0x10] sm:$0xf]
        %v921 = vld [vmem:[%s2 + $0x14] sm:$0xf]
        %v922 = vld [vmem:[%s2 + $0x18] sm:$0xf]
        %v923 = vld [vmem:[%s2 + $0x1c] sm:$0xf]
        %v924 = vld [vmem:[%s2 + $0x20] sm:$0xf]
        %v925 = vld [vmem:[%s2 + $0x24] sm:$0xf]
        %v926 = vld [vmem:[%s2 + $0x28] sm:$0xf]
        %v927 = vld [vmem:[%s2 + $0x2c] sm:$0xf]
        %v928 = vld [vmem:[%s2 + $0x30] sm:$0xf]
        %v929 = vld [vmem:[%s2 + $0x34] sm:$0xf]
        %v930 = vld [vmem:[%s2 + $0x38] sm:$0xf]
        %v931 = vld [vmem:[%s2 + $0x3c] sm:$0xf]
        %v932 = vld [vmem:[%s2 + $0x40] sm:$0xf]
        %v933 = vld [vmem:[%s2 + $0x44] sm:$0xf]
        %v934 = vld [vmem:[%s2 + $0x48] sm:$0xf]
        %v935 = vld [vmem:[%s2 + $0x4c] sm:$0xf]
        %v936 = vld [vmem:[%s2 + $0x50] sm:$0xf]
        %v937 = vld [vmem:[%s2 + $0x54] sm:$0xf]
        %v938 = vld [vmem:[%s2 + $0x58] sm:$0xf]
        %v939 = vld [vmem:[%s2 + $0x5c] sm:$0xf]
        %v940 = vld [vmem:[%s2 + $0x60] sm:$0xf]
        %v941 = vld [vmem:[%s2 + $0x64] sm:$0xf]
        %v942 = vld [vmem:[%s2 + $0x68] sm:$0xf]
        %v943 = vld [vmem:[%s2 + $0x6c] sm:$0xf]
        %v944 = vld [vmem:[%s2 + $0x70] sm:$0xf]
        %v945 = vld [vmem:[%s2 + $0x74] sm:$0xf]
        %v946 = vld [vmem:[%s2 + $0x78] sm:$0xf]
        %v947 = vld [vmem:[%s2 + $0x7c] sm:$0xf]
        %v948 = vld [vmem:[%s2 + $0x80] sm:$0xf]
        %v949 = vld [vmem:[%s2 + $0x84] sm:$0xf]
        %v950 = vld [vmem:[%s2 + $0x88] sm:$0xf]
        %v951 = vld [vmem:[%s2 + $0x8c] sm:$0xf]
        %v952 = vld [vmem:[%s2 + $0x90] sm:$0xf]
        %v953 = vld [vmem:[%s2 + $0x94] sm:$0xf]
        %v954 = vld [vmem:[%s2 + $0x98] sm:$0xf]
        %v955 = vld [vmem:[%s2 + $0x9c] sm:$0xf]
        %v956 = vld [vmem:[%s2 + $0xa0] sm:$0xf]
        %v957 = vld [vmem:[%s2 + $0xa4] sm:$0xf]
        %v958 = vld [vmem:[%s2 + $0xa8] sm:$0xf]
        %v959 = vld [vmem:[%s2 + $0xac] sm:$0xf]
        %v960 = vld [vmem:[%s2 + $0xb0] sm:$0xf]
        %v961 = vld [vmem:[%s2 + $0xb4] sm:$0xf]
        %v962 = vld [vmem:[%s2 + $0xb8] sm:$0xf]
        %v963 = vld [vmem:[%s2 + $0xbc] sm:$0xf]
        %s964 = scalar_lea.vmem [#allocation2], 24
        %v965 = vld [vmem:[%s964] sm:$0xff]
        %v966 = vld [vmem:[%s964 + $0x8] sm:$0xff]
        %v967 = vld [vmem:[%s964 + $0x18] sm:$0xff]
        %v968 = vld [vmem:[%s964 + $0x20] sm:$0xff]
        %v969 = vld [vmem:[%s964 + $0x30] sm:$0xff]
        %v970 = vld [vmem:[%s964 + $0x38] sm:$0xff]
        %v971 = vld [vmem:[%s964 + $0x48] sm:$0xff]
        %v972 = vld [vmem:[%s964 + $0x50] sm:$0xff]
        %v973 = vld [vmem:[%s964 + $0x60] sm:$0xff]
        %v974 = vld [vmem:[%s964 + $0x68] sm:$0xff]
        %v975 = vld [vmem:[%s964 + $0x78] sm:$0xff]
        %v976 = vld [vmem:[%s964 + $0x80] sm:$0xff]
        %v977 = vld [vmem:[%s964 + $0x90] sm:$0xff]
        %v978 = vld [vmem:[%s964 + $0x98] sm:$0xff]
        %v979 = vld [vmem:[%s964 + $0xa8] sm:$0xff]
        %v980 = vld [vmem:[%s964 + $0xb0] sm:$0xff]
        %v981 = vld [vmem:[%s964 + $0xc0] sm:$0xff]
        %v982 = vld [vmem:[%s964 + $0xc8] sm:$0xff]
        %v983 = vld [vmem:[%s964 + $0xd8] sm:$0xff]
        %v984 = vld [vmem:[%s964 + $0xe0] sm:$0xff]
        %v985 = vld [vmem:[%s964 + $0xf0] sm:$0xff]
        %v986 = vld [vmem:[%s964 + $0xf8] sm:$0xff]
        %v987 = vld [vmem:[%s964 + $0x108] sm:$0xff]
        %v988 = vld [vmem:[%s964 + $0x110] sm:$0xff]
        %v989 = vld [vmem:[%s964 + $0x120] sm:$0xff]
        %v990 = vld [vmem:[%s964 + $0x128] sm:$0xff]
        %v991 = vld [vmem:[%s964 + $0x138] sm:$0xff]
        %v992 = vld [vmem:[%s964 + $0x140] sm:$0xff]
        %v993 = vld [vmem:[%s964 + $0x150] sm:$0xff]
        %v994 = vld [vmem:[%s964 + $0x158] sm:$0xff]
        %v995 = vld [vmem:[%s964 + $0x168] sm:$0xff]
        %v996 = vld [vmem:[%s964 + $0x170] sm:$0xff]
        %v997 = vld [vmem:[%s964 + $0x1] sm:$0xff]
        %v998 = vld [vmem:[%s964 + $0x9] sm:$0xff]
        %v999 = vld [vmem:[%s964 + $0x19] sm:$0xff]
        %v1000 = vld [vmem:[%s964 + $0x21] sm:$0xff]
        %v1001 = vld [vmem:[%s964 + $0x31] sm:$0xff]
        %v1002 = vld [vmem:[%s964 + $0x39] sm:$0xff]
        %v1003 = vld [vmem:[%s964 + $0x49] sm:$0xff]
        %v1004 = vld [vmem:[%s964 + $0x51] sm:$0xff]
        %v1005 = vld [vmem:[%s964 + $0x61] sm:$0xff]
        %v1006 = vld [vmem:[%s964 + $0x69] sm:$0xff]
        %v1007 = vld [vmem:[%s964 + $0x79] sm:$0xff]
        %v1008 = vld [vmem:[%s964 + $0x81] sm:$0xff]
        %v1009 = vld [vmem:[%s964 + $0x91] sm:$0xff]
        %v1010 = vld [vmem:[%s964 + $0x99] sm:$0xff]
        %v1011 = vld [vmem:[%s964 + $0xa9] sm:$0xff]
        %v1012 = vld [vmem:[%s964 + $0xb1] sm:$0xff]
        %v1013 = vld [vmem:[%s964 + $0xc1] sm:$0xff]
        %v1014 = vld [vmem:[%s964 + $0xc9] sm:$0xff]
        %v1015 = vld [vmem:[%s964 + $0xd9] sm:$0xff]
        %v1016 = vld [vmem:[%s964 + $0xe1] sm:$0xff]
        %v1017 = vld [vmem:[%s964 + $0xf1] sm:$0xff]
        %v1018 = vld [vmem:[%s964 + $0xf9] sm:$0xff]
        %v1019 = vld [vmem:[%s964 + $0x109] sm:$0xff]
        %v1020 = vld [vmem:[%s964 + $0x111] sm:$0xff]
        %v1021 = vld [vmem:[%s964 + $0x121] sm:$0xff]
        %v1022 = vld [vmem:[%s964 + $0x129] sm:$0xff]
        %v1023 = vld [vmem:[%s964 + $0x139] sm:$0xff]
        %v1024 = vld [vmem:[%s964 + $0x141] sm:$0xff]
        %v1025 = vld [vmem:[%s964 + $0x151] sm:$0xff]
        %v1026 = vld [vmem:[%s964 + $0x159] sm:$0xff]
        %v1027 = vld [vmem:[%s964 + $0x169] sm:$0xff]
        %v1028 = vld [vmem:[%s964 + $0x171] sm:$0xff]
        %v1029 = vld [vmem:[%s964 + $0x2] sm:$0xff]
        %v1030 = vld [vmem:[%s964 + $0xa] sm:$0xff]
        %v1031 = vld [vmem:[%s964 + $0x1a] sm:$0xff]
        %v1032 = vld [vmem:[%s964 + $0x22] sm:$0xff]
        %v1033 = vld [vmem:[%s964 + $0x32] sm:$0xff]
        %v1034 = vld [vmem:[%s964 + $0x3a] sm:$0xff]
        %v1035 = vld [vmem:[%s964 + $0x4a] sm:$0xff]
        %v1036 = vld [vmem:[%s964 + $0x52] sm:$0xff]
        %v1037 = vld [vmem:[%s964 + $0x62] sm:$0xff]
        %v1038 = vld [vmem:[%s964 + $0x6a] sm:$0xff]
        %v1039 = vld [vmem:[%s964 + $0x7a] sm:$0xff]
        %v1040 = vld [vmem:[%s964 + $0x82] sm:$0xff]
        %v1041 = vld [vmem:[%s964 + $0x92] sm:$0xff]
        %v1042 = vld [vmem:[%s964 + $0x9a] sm:$0xff]
        %v1043 = vld [vmem:[%s964 + $0xaa] sm:$0xff]
        %v1044 = vld [vmem:[%s964 + $0xb2] sm:$0xff]
        %v1045 = vld [vmem:[%s964 + $0xc2] sm:$0xff]
        %v1046 = vld [vmem:[%s964 + $0xca] sm:$0xff]
        %v1047 = vld [vmem:[%s964 + $0xda] sm:$0xff]
        %v1048 = vld [vmem:[%s964 + $0xe2] sm:$0xff]
        %v1049 = vld [vmem:[%s964 + $0xf2] sm:$0xff]
        %v1050 = vld [vmem:[%s964 + $0xfa] sm:$0xff]
        %v1051 = vld [vmem:[%s964 + $0x10a] sm:$0xff]
        %v1052 = vld [vmem:[%s964 + $0x112] sm:$0xff]
        %v1053 = vld [vmem:[%s964 + $0x122] sm:$0xff]
        %v1054 = vld [vmem:[%s964 + $0x12a] sm:$0xff]
        %v1055 = vld [vmem:[%s964 + $0x13a] sm:$0xff]
        %v1056 = vld [vmem:[%s964 + $0x142] sm:$0xff]
        %v1057 = vld [vmem:[%s964 + $0x152] sm:$0xff]
        %v1058 = vld [vmem:[%s964 + $0x15a] sm:$0xff]
        %v1059 = vld [vmem:[%s964 + $0x16a] sm:$0xff]
        %v1060 = vld [vmem:[%s964 + $0x172] sm:$0xff]
        %v1061 = vpack.c.bf16 %v966, %v965
        %v1062 = vpack.c.bf16 %v998, %v997
        %v1063 = vpack.c.bf16 %v1030, %v1029
        %v1064 = vpack.c.bf16 %v968, %v967
        %v1065 = vpack.c.bf16 %v1000, %v999
        %v1066 = vpack.c.bf16 %v1032, %v1031
        %v1067 = vpack.c.bf16 %v970, %v969
        %v1068 = vpack.c.bf16 %v1002, %v1001
        %v1069 = vpack.c.bf16 %v1034, %v1033
        %v1070 = vpack.c.bf16 %v972, %v971
        %v1071 = vpack.c.bf16 %v1004, %v1003
        %v1072 = vpack.c.bf16 %v1036, %v1035
        %v1073 = vpack.c.bf16 %v974, %v973
        %v1074 = vpack.c.bf16 %v1006, %v1005
        %v1075 = vpack.c.bf16 %v1038, %v1037
        %v1076 = vpack.c.bf16 %v976, %v975
        %v1077 = vpack.c.bf16 %v1008, %v1007
        %v1078 = vpack.c.bf16 %v1040, %v1039
        %v1079 = vpack.c.bf16 %v978, %v977
        %v1080 = vpack.c.bf16 %v1010, %v1009
        %v1081 = vpack.c.bf16 %v1042, %v1041
        %v1082 = vpack.c.bf16 %v980, %v979
        %v1083 = vpack.c.bf16 %v1012, %v1011
        %v1084 = vpack.c.bf16 %v1044, %v1043
        %v1085 = vpack.c.bf16 %v982, %v981
        %v1086 = vpack.c.bf16 %v1014, %v1013
        %v1087 = vpack.c.bf16 %v1046, %v1045
        %v1088 = vpack.c.bf16 %v984, %v983
        %v1089 = vpack.c.bf16 %v1016, %v1015
        %v1090 = vpack.c.bf16 %v1048, %v1047
        %v1091 = vpack.c.bf16 %v986, %v985
        %v1092 = vpack.c.bf16 %v1018, %v1017
        %v1093 = vpack.c.bf16 %v1050, %v1049
        %v1094 = vpack.c.bf16 %v988, %v987
        %v1095 = vpack.c.bf16 %v1020, %v1019
        %v1096 = vpack.c.bf16 %v1052, %v1051
        %v1097 = vpack.c.bf16 %v990, %v989
        %v1098 = vpack.c.bf16 %v1022, %v1021
        %v1099 = vpack.c.bf16 %v1054, %v1053
        %v1100 = vpack.c.bf16 %v992, %v991
        %v1101 = vpack.c.bf16 %v1024, %v1023
        %v1102 = vpack.c.bf16 %v1056, %v1055
        %v1103 = vpack.c.bf16 %v994, %v993
        %v1104 = vpack.c.bf16 %v1026, %v1025
        %v1105 = vpack.c.bf16 %v1058, %v1057
        %v1106 = vpack.c.bf16 %v996, %v995
        %v1107 = vpack.c.bf16 %v1028, %v1027
        %v1108 = vpack.c.bf16 %v1060, %v1059
        %s1109 = scalar_lea.vmem %s2, 192
        %v1110 = vld [vmem:[%s1109] sm:$0xf]
        %v1111 = vld [vmem:[%s1109 + $0x4] sm:$0xf]
        %v1112 = vld [vmem:[%s1109 + $0x8] sm:$0xf]
        %v1113 = vld [vmem:[%s1109 + $0xc] sm:$0xf]
        %v1114 = vld [vmem:[%s1109 + $0x10] sm:$0xf]
        %v1115 = vld [vmem:[%s1109 + $0x14] sm:$0xf]
        %v1116 = vld [vmem:[%s1109 + $0x18] sm:$0xf]
        %v1117 = vld [vmem:[%s1109 + $0x1c] sm:$0xf]
        %v1118 = vld [vmem:[%s1109 + $0x20] sm:$0xf]
        %v1119 = vld [vmem:[%s1109 + $0x24] sm:$0xf]
        %v1120 = vld [vmem:[%s1109 + $0x28] sm:$0xf]
        %v1121 = vld [vmem:[%s1109 + $0x2c] sm:$0xf]
        %v1122 = vld [vmem:[%s1109 + $0x30] sm:$0xf]
        %v1123 = vld [vmem:[%s1109 + $0x34] sm:$0xf]
        %v1124 = vld [vmem:[%s1109 + $0x38] sm:$0xf]
        %v1125 = vld [vmem:[%s1109 + $0x3c] sm:$0xf]
        %v1126 = vld [vmem:[%s1109 + $0x40] sm:$0xf]
        %v1127 = vld [vmem:[%s1109 + $0x44] sm:$0xf]
        %v1128 = vld [vmem:[%s1109 + $0x48] sm:$0xf]
        %v1129 = vld [vmem:[%s1109 + $0x4c] sm:$0xf]
        %v1130 = vld [vmem:[%s1109 + $0x50] sm:$0xf]
        %v1131 = vld [vmem:[%s1109 + $0x54] sm:$0xf]
        %v1132 = vld [vmem:[%s1109 + $0x58] sm:$0xf]
        %v1133 = vld [vmem:[%s1109 + $0x5c] sm:$0xf]
        %v1134 = vld [vmem:[%s1109 + $0x60] sm:$0xf]
        %v1135 = vld [vmem:[%s1109 + $0x64] sm:$0xf]
        %v1136 = vld [vmem:[%s1109 + $0x68] sm:$0xf]
        %v1137 = vld [vmem:[%s1109 + $0x6c] sm:$0xf]
        %v1138 = vld [vmem:[%s1109 + $0x70] sm:$0xf]
        %v1139 = vld [vmem:[%s1109 + $0x74] sm:$0xf]
        %v1140 = vld [vmem:[%s1109 + $0x78] sm:$0xf]
        %v1141 = vld [vmem:[%s1109 + $0x7c] sm:$0xf]
        %v1142 = vld [vmem:[%s1109 + $0x80] sm:$0xf]
        %v1143 = vld [vmem:[%s1109 + $0x84] sm:$0xf]
        %v1144 = vld [vmem:[%s1109 + $0x88] sm:$0xf]
        %v1145 = vld [vmem:[%s1109 + $0x8c] sm:$0xf]
        %v1146 = vld [vmem:[%s1109 + $0x90] sm:$0xf]
        %v1147 = vld [vmem:[%s1109 + $0x94] sm:$0xf]
        %v1148 = vld [vmem:[%s1109 + $0x98] sm:$0xf]
        %v1149 = vld [vmem:[%s1109 + $0x9c] sm:$0xf]
        %v1150 = vld [vmem:[%s1109 + $0xa0] sm:$0xf]
        %v1151 = vld [vmem:[%s1109 + $0xa4] sm:$0xf]
        %v1152 = vld [vmem:[%s1109 + $0xa8] sm:$0xf]
        %v1153 = vld [vmem:[%s1109 + $0xac] sm:$0xf]
        %v1154 = vld [vmem:[%s1109 + $0xb0] sm:$0xf]
        %v1155 = vld [vmem:[%s1109 + $0xb4] sm:$0xf]
        %v1156 = vld [vmem:[%s1109 + $0xb8] sm:$0xf]
        %v1157 = vld [vmem:[%s1109 + $0xbc] sm:$0xf]
        %v1206 = vunpack.c.l.b16 %v1110
        %v1207 = vunpack.c.l.b16 %v1111
        %v1208 = vunpack.c.l.b16 %v1112
        %v1209 = vunpack.c.l.b16 %v1113
        %v1210 = vunpack.c.l.b16 %v1114
        %v1211 = vunpack.c.l.b16 %v1115
        %v1212 = vunpack.c.l.b16 %v1116
        %v1213 = vunpack.c.l.b16 %v1117
        %v1214 = vunpack.c.l.b16 %v1118
        %v1215 = vunpack.c.l.b16 %v1119
        %v1216 = vunpack.c.l.b16 %v1120
        %v1217 = vunpack.c.l.b16 %v1121
        %v1218 = vunpack.c.l.b16 %v1122
        %v1219 = vunpack.c.l.b16 %v1123
        %v1220 = vunpack.c.l.b16 %v1124
        %v1221 = vunpack.c.l.b16 %v1125
        %v1222 = vunpack.c.l.b16 %v1126
        %v1223 = vunpack.c.l.b16 %v1127
        %v1224 = vunpack.c.l.b16 %v1128
        %v1225 = vunpack.c.l.b16 %v1129
        %v1226 = vunpack.c.l.b16 %v1130
        %v1227 = vunpack.c.l.b16 %v1131
        %v1228 = vunpack.c.l.b16 %v1132
        %v1229 = vunpack.c.l.b16 %v1133
        %v1230 = vunpack.c.l.b16 %v1134
        %v1231 = vunpack.c.l.b16 %v1135
        %v1232 = vunpack.c.l.b16 %v1136
        %v1233 = vunpack.c.l.b16 %v1137
        %v1234 = vunpack.c.l.b16 %v1138
        %v1235 = vunpack.c.l.b16 %v1139
        %v1236 = vunpack.c.l.b16 %v1140
        %v1237 = vunpack.c.l.b16 %v1141
        %v1238 = vunpack.c.l.b16 %v1142
        %v1239 = vunpack.c.l.b16 %v1143
        %v1240 = vunpack.c.l.b16 %v1144
        %v1241 = vunpack.c.l.b16 %v1145
        %v1242 = vunpack.c.l.b16 %v1146
        %v1243 = vunpack.c.l.b16 %v1147
        %v1244 = vunpack.c.l.b16 %v1148
        %v1245 = vunpack.c.l.b16 %v1149
        %v1246 = vunpack.c.l.b16 %v1150
        %v1247 = vunpack.c.l.b16 %v1151
        %v1248 = vunpack.c.l.b16 %v1152
        %v1249 = vunpack.c.l.b16 %v1153
        %v1250 = vunpack.c.l.b16 %v1154
        %v1251 = vunpack.c.l.b16 %v1155
        %v1252 = vunpack.c.l.b16 %v1156
        %v1253 = vunpack.c.l.b16 %v1157
        %v1254 = vpack.c.b16 %v1207, %v1206
        %v1255 = vpack.c.b16 %v1209, %v1208
        %v1256 = vpack.c.b16 %v1211, %v1210
        %v1257 = vpack.c.b16 %v1213, %v1212
        %v1258 = vpack.c.b16 %v1215, %v1214
        %v1259 = vpack.c.b16 %v1217, %v1216
        %v1260 = vpack.c.b16 %v1219, %v1218
        %v1261 = vpack.c.b16 %v1221, %v1220
        %v1262 = vpack.c.b16 %v1223, %v1222
        %v1263 = vpack.c.b16 %v1225, %v1224
        %v1264 = vpack.c.b16 %v1227, %v1226
        %v1265 = vpack.c.b16 %v1229, %v1228
        %v1266 = vpack.c.b16 %v1231, %v1230
        %v1267 = vpack.c.b16 %v1233, %v1232
        %v1268 = vpack.c.b16 %v1235, %v1234
        %v1269 = vpack.c.b16 %v1237, %v1236
        %v1270 = vpack.c.b16 %v1239, %v1238
        %v1271 = vpack.c.b16 %v1241, %v1240
        %v1272 = vpack.c.b16 %v1243, %v1242
        %v1273 = vpack.c.b16 %v1245, %v1244
        %v1274 = vpack.c.b16 %v1247, %v1246
        %v1275 = vpack.c.b16 %v1249, %v1248
        %v1276 = vpack.c.b16 %v1251, %v1250
        %v1277 = vpack.c.b16 %v1253, %v1252
        %1302 = vmatprep.subr.bf16.mxu0 0
        %1303 = vmatpush1.bf16.msra.mxu0 %v1261
        %1304 = vmatprep.subr.bf16.mxu0 0
        %1305 = vmatpush1.bf16.msra.mxu0 %v1260
        %1306 = vmatprep.subr.bf16.mxu0 0
        %1307 = vmatpush1.bf16.msra.mxu0 %v1259
        %1308 = vmatprep.subr.bf16.mxu0 0
        %1309 = vmatpush1.bf16.msra.mxu0 %v1258
        %1310 = vmatprep.subr.bf16.mxu0 0
        %1311 = vmatpush1.bf16.msra.mxu0 %v1257
        %1312 = vmatprep.subr.bf16.mxu0 0
        %1313 = vmatpush1.bf16.msra.mxu0 %v1256
        %1314 = vmatprep.subr.bf16.mxu0 0
        %1315 = vmatpush1.bf16.msra.mxu0 %v1255
        %1316 = vmatprep.subr.bf16.mxu0 0
        %1317 = vmatpush1.bf16.msra.mxu0 %v1254
        %1318 = vmatprep.subr.bf16.mxu0 0
        %1319 = vmatpush2.bf16.msra.mxu0 %v1269
        %1320 = vmatprep.subr.bf16.mxu0 0
        %1321 = vmatpush2.bf16.msra.mxu0 %v1268
        %1322 = vmatprep.subr.bf16.mxu0 0
        %1323 = vmatpush2.bf16.msra.mxu0 %v1267
        %1324 = vmatprep.subr.bf16.mxu0 0
        %1325 = vmatpush2.bf16.msra.mxu0 %v1266
        %1326 = vmatprep.subr.bf16.mxu0 0
        %1327 = vmatpush2.bf16.msra.mxu0 %v1265
        %1328 = vmatprep.subr.bf16.mxu0 0
        %1329 = vmatpush2.bf16.msra.mxu0 %v1264
        %1330 = vmatprep.subr.bf16.mxu0 0
        %1331 = vmatpush2.bf16.msra.mxu0 %v1263
        %1332 = vmatprep.subr.bf16.mxu0 0
        %1333 = vmatpush2.bf16.msra.mxu0 %v1262
        %1334 = vmatprep.mubr.bf16.mxu0 %v1062
        %1335 = vmatmul.mubr.bf16.gmra.mxu0 %v1061
        %v1336 = vpop.f32.mrf.mxu0
        %v1337 = vadd.f32 0.0, %v1336
        %v1338 = vpop.f32.mrf.mxu0
        %v1339 = vpop.f32.mrf.mxu0
        %v1340 = vadd.f32 0.0, %v1339
        %v1341 = vpop.f32.mrf.mxu0
        %1342 = vmatprep.mubr.bf16.mxu0 %v1065
        %1343 = vmatmul.mubr.bf16.gmra.mxu0 %v1064
        %v1344 = vpop.f32.mrf.mxu0
        %v1345 = vadd.f32 0.0, %v1344
        %v1346 = vpop.f32.mrf.mxu0
        %v1347 = vpop.f32.mrf.mxu0
        %v1348 = vadd.f32 0.0, %v1347
        %v1349 = vpop.f32.mrf.mxu0
        %1350 = vmatprep.mubr.bf16.mxu0 %v1068
        %1351 = vmatmul.mubr.bf16.gmra.mxu0 %v1067
        %v1352 = vpop.f32.mrf.mxu0
        %v1353 = vadd.f32 0.0, %v1352
        %v1354 = vpop.f32.mrf.mxu0
        %v1355 = vpop.f32.mrf.mxu0
        %v1356 = vadd.f32 0.0, %v1355
        %v1357 = vpop.f32.mrf.mxu0
        %1358 = vmatprep.mubr.bf16.mxu0 %v1071
        %1359 = vmatmul.mubr.bf16.gmra.mxu0 %v1070
        %v1360 = vpop.f32.mrf.mxu0
        %v1361 = vadd.f32 0.0, %v1360
        %v1362 = vpop.f32.mrf.mxu0
        %v1363 = vpop.f32.mrf.mxu0
        %v1364 = vadd.f32 0.0, %v1363
        %v1365 = vpop.f32.mrf.mxu0
        %1366 = vmatprep.mubr.bf16.mxu0 %v1074
        %1367 = vmatmul.mubr.bf16.gmra.mxu0 %v1073
        %v1368 = vpop.f32.mrf.mxu0
        %v1369 = vadd.f32 0.0, %v1368
        %v1370 = vpop.f32.mrf.mxu0
        %v1371 = vpop.f32.mrf.mxu0
        %v1372 = vadd.f32 0.0, %v1371
        %v1373 = vpop.f32.mrf.mxu0
        %1374 = vmatprep.mubr.bf16.mxu0 %v1077
        %1375 = vmatmul.mubr.bf16.gmra.mxu0 %v1076
        %v1376 = vpop.f32.mrf.mxu0
        %v1377 = vadd.f32 0.0, %v1376
        %v1378 = vpop.f32.mrf.mxu0
        %v1379 = vpop.f32.mrf.mxu0
        %v1380 = vadd.f32 0.0, %v1379
        %v1381 = vpop.f32.mrf.mxu0
        %1382 = vmatprep.mubr.bf16.mxu0 %v1080
        %1383 = vmatmul.mubr.bf16.gmra.mxu0 %v1079
        %v1384 = vpop.f32.mrf.mxu0
        %v1385 = vadd.f32 0.0, %v1384
        %v1386 = vpop.f32.mrf.mxu0
        %v1387 = vpop.f32.mrf.mxu0
        %v1388 = vadd.f32 0.0, %v1387
        %v1389 = vpop.f32.mrf.mxu0
        %1390 = vmatprep.mubr.bf16.mxu0 %v1083
        %1391 = vmatmul.mubr.bf16.gmra.mxu0 %v1082
        %v1392 = vpop.f32.mrf.mxu0
        %v1393 = vadd.f32 0.0, %v1392
        %v1394 = vpop.f32.mrf.mxu0
        %v1395 = vpop.f32.mrf.mxu0
        %v1396 = vadd.f32 0.0, %v1395
        %v1397 = vpop.f32.mrf.mxu0
        %1398 = vmatprep.mubr.bf16.mxu0 %v1086
        %1399 = vmatmul.mubr.bf16.gmra.mxu0 %v1085
        %v1400 = vpop.f32.mrf.mxu0
        %v1401 = vadd.f32 0.0, %v1400
        %v1402 = vpop.f32.mrf.mxu0
        %v1403 = vpop.f32.mrf.mxu0
        %v1404 = vadd.f32 0.0, %v1403
        %v1405 = vpop.f32.mrf.mxu0
        %1406 = vmatprep.mubr.bf16.mxu0 %v1089
        %1407 = vmatmul.mubr.bf16.gmra.mxu0 %v1088
        %v1408 = vpop.f32.mrf.mxu0
        %v1409 = vadd.f32 0.0, %v1408
        %v1410 = vpop.f32.mrf.mxu0
        %v1411 = vpop.f32.mrf.mxu0
        %v1412 = vadd.f32 0.0, %v1411
        %v1413 = vpop.f32.mrf.mxu0
        %1414 = vmatprep.mubr.bf16.mxu0 %v1092
        %1415 = vmatmul.mubr.bf16.gmra.mxu0 %v1091
        %v1416 = vpop.f32.mrf.mxu0
        %v1417 = vadd.f32 0.0, %v1416
        %v1418 = vpop.f32.mrf.mxu0
        %v1419 = vpop.f32.mrf.mxu0
        %v1420 = vadd.f32 0.0, %v1419
        %v1421 = vpop.f32.mrf.mxu0
        %1422 = vmatprep.mubr.bf16.mxu0 %v1095
        %1423 = vmatmul.mubr.bf16.gmra.mxu0 %v1094
        %v1424 = vpop.f32.mrf.mxu0
        %v1425 = vadd.f32 0.0, %v1424
        %v1426 = vpop.f32.mrf.mxu0
        %v1427 = vpop.f32.mrf.mxu0
        %v1428 = vadd.f32 0.0, %v1427
        %v1429 = vpop.f32.mrf.mxu0
        %1430 = vmatprep.mubr.bf16.mxu0 %v1098
        %1431 = vmatmul.mubr.bf16.gmra.mxu0 %v1097
        %v1432 = vpop.f32.mrf.mxu0
        %v1433 = vadd.f32 0.0, %v1432
        %v1434 = vpop.f32.mrf.mxu0
        %v1435 = vpop.f32.mrf.mxu0
        %v1436 = vadd.f32 0.0, %v1435
        %v1437 = vpop.f32.mrf.mxu0
        %1438 = vmatprep.mubr.bf16.mxu0 %v1101
        %1439 = vmatmul.mubr.bf16.gmra.mxu0 %v1100
        %v1440 = vpop.f32.mrf.mxu0
        %v1441 = vadd.f32 0.0, %v1440
        %v1442 = vpop.f32.mrf.mxu0
        %v1443 = vpop.f32.mrf.mxu0
        %v1444 = vadd.f32 0.0, %v1443
        %v1445 = vpop.f32.mrf.mxu0
        %1446 = vmatprep.mubr.bf16.mxu0 %v1104
        %1447 = vmatmul.mubr.bf16.gmra.mxu0 %v1103
        %v1448 = vpop.f32.mrf.mxu0
        %v1449 = vadd.f32 0.0, %v1448
        %v1450 = vpop.f32.mrf.mxu0
        %v1451 = vpop.f32.mrf.mxu0
        %v1452 = vadd.f32 0.0, %v1451
        %v1453 = vpop.f32.mrf.mxu0
        %1454 = vmatprep.mubr.bf16.mxu0 %v1107
        %1455 = vmatmul.mubr.bf16.gmra.mxu0 %v1106
        %v1456 = vpop.f32.mrf.mxu0
        %v1457 = vadd.f32 0.0, %v1456
        %v1458 = vpop.f32.mrf.mxu0
        %v1459 = vpop.f32.mrf.mxu0
        %v1460 = vadd.f32 0.0, %v1459
        %v1461 = vpop.f32.mrf.mxu0
        %1462 = vdwg.mxu0
        %1463 = vmatprep.subr.bf16.mxu0 0
        %1464 = vmatpush1.bf16.msra.mxu0 %v1277
        %1465 = vmatprep.subr.bf16.mxu0 0
        %1466 = vmatpush1.bf16.msra.mxu0 %v1276
        %1467 = vmatprep.subr.bf16.mxu0 0
        %1468 = vmatpush1.bf16.msra.mxu0 %v1275
        %1469 = vmatprep.subr.bf16.mxu0 0
        %1470 = vmatpush1.bf16.msra.mxu0 %v1274
        %1471 = vmatprep.subr.bf16.mxu0 0
        %1472 = vmatpush1.bf16.msra.mxu0 %v1273
        %1473 = vmatprep.subr.bf16.mxu0 0
        %1474 = vmatpush1.bf16.msra.mxu0 %v1272
        %1475 = vmatprep.subr.bf16.mxu0 0
        %1476 = vmatpush1.bf16.msra.mxu0 %v1271
        %1477 = vmatprep.subr.bf16.mxu0 0
        %1478 = vmatpush1.bf16.msra.mxu0 %v1270
        %1479 = vmatprep.subr.bf16.mxu0 0
        %1480 = vmatpush2.bf16.msra.mxu0 0
        %1481 = vmatprep.subr.bf16.mxu0 0
        %1482 = vmatpush2.bf16.msra.mxu0 0
        %1483 = vmatprep.subr.bf16.mxu0 0
        %1484 = vmatpush2.bf16.msra.mxu0 0
        %1485 = vmatprep.subr.bf16.mxu0 0
        %1486 = vmatpush2.bf16.msra.mxu0 0
        %1487 = vmatprep.subr.bf16.mxu0 0
        %1488 = vmatpush2.bf16.msra.mxu0 0
        %1489 = vmatprep.subr.bf16.mxu0 0
        %1490 = vmatpush2.bf16.msra.mxu0 0
        %1491 = vmatprep.subr.bf16.mxu0 0
        %1492 = vmatpush2.bf16.msra.mxu0 0
        %1493 = vmatprep.subr.bf16.mxu0 0
        %1494 = vmatpush2.bf16.msra.mxu0 0
        %1495 = vmatprep.mubr.bf16.mxu0 0
        %1496 = vmatmul.mubr.bf16.gmra.mxu0 %v1063
        %v1497 = vpop.f32.mrf.mxu0
        %v1498 = vadd.f32 %v1337, %v1497
        %v1499 = vpop.f32.mrf.mxu0
        %v1500 = vpop.f32.mrf.mxu0
        %v1501 = vadd.f32 %v1340, %v1500
        %v1502 = vpop.f32.mrf.mxu0
        %1503 = vmatprep.mubr.bf16.mxu0 0
        %1504 = vmatmul.mubr.bf16.gmra.mxu0 %v1066
        %v1505 = vpop.f32.mrf.mxu0
        %v1506 = vadd.f32 %v1345, %v1505
        %v1507 = vpop.f32.mrf.mxu0
        %v1508 = vpop.f32.mrf.mxu0
        %v1509 = vadd.f32 %v1348, %v1508
        %v1510 = vpop.f32.mrf.mxu0
        %1511 = vmatprep.mubr.bf16.mxu0 0
        %1512 = vmatmul.mubr.bf16.gmra.mxu0 %v1069
        %v1513 = vpop.f32.mrf.mxu0
        %v1514 = vadd.f32 %v1353, %v1513
        %v1515 = vpop.f32.mrf.mxu0
        %v1516 = vpop.f32.mrf.mxu0
        %v1517 = vadd.f32 %v1356, %v1516
        %v1518 = vpop.f32.mrf.mxu0
        %1519 = vmatprep.mubr.bf16.mxu0 0
        %1520 = vmatmul.mubr.bf16.gmra.mxu0 %v1072
        %v1521 = vpop.f32.mrf.mxu0
        %v1522 = vadd.f32 %v1361, %v1521
        %v1523 = vpop.f32.mrf.mxu0
        %v1524 = vpop.f32.mrf.mxu0
        %v1525 = vadd.f32 %v1364, %v1524
        %v1526 = vpop.f32.mrf.mxu0
        %1527 = vmatprep.mubr.bf16.mxu0 0
        %1528 = vmatmul.mubr.bf16.gmra.mxu0 %v1075
        %v1529 = vpop.f32.mrf.mxu0
        %v1530 = vadd.f32 %v1369, %v1529
        %v1531 = vpop.f32.mrf.mxu0
        %v1532 = vpop.f32.mrf.mxu0
        %v1533 = vadd.f32 %v1372, %v1532
        %v1534 = vpop.f32.mrf.mxu0
        %1535 = vmatprep.mubr.bf16.mxu0 0
        %1536 = vmatmul.mubr.bf16.gmra.mxu0 %v1078
        %v1537 = vpop.f32.mrf.mxu0
        %v1538 = vadd.f32 %v1377, %v1537
        %v1539 = vpop.f32.mrf.mxu0
        %v1540 = vpop.f32.mrf.mxu0
        %v1541 = vadd.f32 %v1380, %v1540
        %v1542 = vpop.f32.mrf.mxu0
        %1543 = vmatprep.mubr.bf16.mxu0 0
        %1544 = vmatmul.mubr.bf16.gmra.mxu0 %v1081
        %v1545 = vpop.f32.mrf.mxu0
        %v1546 = vadd.f32 %v1385, %v1545
        %v1547 = vpop.f32.mrf.mxu0
        %v1548 = vpop.f32.mrf.mxu0
        %v1549 = vadd.f32 %v1388, %v1548
        %v1550 = vpop.f32.mrf.mxu0
        %1551 = vmatprep.mubr.bf16.mxu0 0
        %1552 = vmatmul.mubr.bf16.gmra.mxu0 %v1084
        %v1553 = vpop.f32.mrf.mxu0
        %v1554 = vadd.f32 %v1393, %v1553
        %v1555 = vpop.f32.mrf.mxu0
        %v1556 = vpop.f32.mrf.mxu0
        %v1557 = vadd.f32 %v1396, %v1556
        %v1558 = vpop.f32.mrf.mxu0
        %1559 = vmatprep.mubr.bf16.mxu0 0
        %1560 = vmatmul.mubr.bf16.gmra.mxu0 %v1087
        %v1561 = vpop.f32.mrf.mxu0
        %v1562 = vadd.f32 %v1401, %v1561
        %v1563 = vpop.f32.mrf.mxu0
        %v1564 = vpop.f32.mrf.mxu0
        %v1565 = vadd.f32 %v1404, %v1564
        %v1566 = vpop.f32.mrf.mxu0
        %1567 = vmatprep.mubr.bf16.mxu0 0
        %1568 = vmatmul.mubr.bf16.gmra.mxu0 %v1090
        %v1569 = vpop.f32.mrf.mxu0
        %v1570 = vadd.f32 %v1409, %v1569
        %v1571 = vpop.f32.mrf.mxu0
        %v1572 = vpop.f32.mrf.mxu0
        %v1573 = vadd.f32 %v1412, %v1572
        %v1574 = vpop.f32.mrf.mxu0
        %1575 = vmatprep.mubr.bf16.mxu0 0
        %1576 = vmatmul.mubr.bf16.gmra.mxu0 %v1093
        %v1577 = vpop.f32.mrf.mxu0
        %v1578 = vadd.f32 %v1417, %v1577
        %v1579 = vpop.f32.mrf.mxu0
        %v1580 = vpop.f32.mrf.mxu0
        %v1581 = vadd.f32 %v1420, %v1580
        %v1582 = vpop.f32.mrf.mxu0
        %1583 = vmatprep.mubr.bf16.mxu0 0
        %1584 = vmatmul.mubr.bf16.gmra.mxu0 %v1096
        %v1585 = vpop.f32.mrf.mxu0
        %v1586 = vadd.f32 %v1425, %v1585
        %v1587 = vpop.f32.mrf.mxu0
        %v1588 = vpop.f32.mrf.mxu0
        %v1589 = vadd.f32 %v1428, %v1588
        %v1590 = vpop.f32.mrf.mxu0
        %1591 = vmatprep.mubr.bf16.mxu0 0
        %1592 = vmatmul.mubr.bf16.gmra.mxu0 %v1099
        %v1593 = vpop.f32.mrf.mxu0
        %v1594 = vadd.f32 %v1433, %v1593
        %v1595 = vpop.f32.mrf.mxu0
        %v1596 = vpop.f32.mrf.mxu0
        %v1597 = vadd.f32 %v1436, %v1596
        %v1598 = vpop.f32.mrf.mxu0
        %1599 = vmatprep.mubr.bf16.mxu0 0
        %1600 = vmatmul.mubr.bf16.gmra.mxu0 %v1102
        %v1601 = vpop.f32.mrf.mxu0
        %v1602 = vadd.f32 %v1441, %v1601
        %v1603 = vpop.f32.mrf.mxu0
        %v1604 = vpop.f32.mrf.mxu0
        %v1605 = vadd.f32 %v1444, %v1604
        %v1606 = vpop.f32.mrf.mxu0
        %1607 = vmatprep.mubr.bf16.mxu0 0
        %1608 = vmatmul.mubr.bf16.gmra.mxu0 %v1105
        %v1609 = vpop.f32.mrf.mxu0
        %v1610 = vadd.f32 %v1449, %v1609
        %v1611 = vpop.f32.mrf.mxu0
        %v1612 = vpop.f32.mrf.mxu0
        %v1613 = vadd.f32 %v1452, %v1612
        %v1614 = vpop.f32.mrf.mxu0
        %1615 = vmatprep.mubr.bf16.mxu0 0
        %1616 = vmatmul.mubr.bf16.gmra.mxu0 %v1108
        %v1617 = vpop.f32.mrf.mxu0
        %v1618 = vadd.f32 %v1457, %v1617
        %v1619 = vpop.f32.mrf.mxu0
        %v1620 = vpop.f32.mrf.mxu0
        %v1621 = vadd.f32 %v1460, %v1620
        %v1622 = vpop.f32.mrf.mxu0
        %1623 = vdwg.mxu0
        %v1672 = vunpack.c.l.b16 %v916
        %v1673 = vunpack.c.l.b16 %v917
        %v1674 = vunpack.c.l.b16 %v918
        %v1675 = vunpack.c.l.b16 %v919
        %v1676 = vunpack.c.l.b16 %v920
        %v1677 = vunpack.c.l.b16 %v921
        %v1678 = vunpack.c.l.b16 %v922
        %v1679 = vunpack.c.l.b16 %v923
        %v1680 = vunpack.c.l.b16 %v924
        %v1681 = vunpack.c.l.b16 %v925
        %v1682 = vunpack.c.l.b16 %v926
        %v1683 = vunpack.c.l.b16 %v927
        %v1684 = vunpack.c.l.b16 %v928
        %v1685 = vunpack.c.l.b16 %v929
        %v1686 = vunpack.c.l.b16 %v930
        %v1687 = vunpack.c.l.b16 %v931
        %v1688 = vunpack.c.l.b16 %v932
        %v1689 = vunpack.c.l.b16 %v933
        %v1690 = vunpack.c.l.b16 %v934
        %v1691 = vunpack.c.l.b16 %v935
        %v1692 = vunpack.c.l.b16 %v936
        %v1693 = vunpack.c.l.b16 %v937
        %v1694 = vunpack.c.l.b16 %v938
        %v1695 = vunpack.c.l.b16 %v939
        %v1696 = vunpack.c.l.b16 %v940
        %v1697 = vunpack.c.l.b16 %v941
        %v1698 = vunpack.c.l.b16 %v942
        %v1699 = vunpack.c.l.b16 %v943
        %v1700 = vunpack.c.l.b16 %v944
        %v1701 = vunpack.c.l.b16 %v945
        %v1702 = vunpack.c.l.b16 %v946
        %v1703 = vunpack.c.l.b16 %v947
        %v1704 = vunpack.c.l.b16 %v948
        %v1705 = vunpack.c.l.b16 %v949
        %v1706 = vunpack.c.l.b16 %v950
        %v1707 = vunpack.c.l.b16 %v951
        %v1708 = vunpack.c.l.b16 %v952
        %v1709 = vunpack.c.l.b16 %v953
        %v1710 = vunpack.c.l.b16 %v954
        %v1711 = vunpack.c.l.b16 %v955
        %v1712 = vunpack.c.l.b16 %v956
        %v1713 = vunpack.c.l.b16 %v957
        %v1714 = vunpack.c.l.b16 %v958
        %v1715 = vunpack.c.l.b16 %v959
        %v1716 = vunpack.c.l.b16 %v960
        %v1717 = vunpack.c.l.b16 %v961
        %v1718 = vunpack.c.l.b16 %v962
        %v1719 = vunpack.c.l.b16 %v963
        %v1720 = vpack.c.b16 %v1673, %v1672
        %v1721 = vpack.c.b16 %v1675, %v1674
        %v1722 = vpack.c.b16 %v1677, %v1676
        %v1723 = vpack.c.b16 %v1679, %v1678
        %v1724 = vpack.c.b16 %v1681, %v1680
        %v1725 = vpack.c.b16 %v1683, %v1682
        %v1726 = vpack.c.b16 %v1685, %v1684
        %v1727 = vpack.c.b16 %v1687, %v1686
        %v1728 = vpack.c.b16 %v1689, %v1688
        %v1729 = vpack.c.b16 %v1691, %v1690
        %v1730 = vpack.c.b16 %v1693, %v1692
        %v1731 = vpack.c.b16 %v1695, %v1694
        %v1732 = vpack.c.b16 %v1697, %v1696
        %v1733 = vpack.c.b16 %v1699, %v1698
        %v1734 = vpack.c.b16 %v1701, %v1700
        %v1735 = vpack.c.b16 %v1703, %v1702
        %v1736 = vpack.c.b16 %v1705, %v1704
        %v1737 = vpack.c.b16 %v1707, %v1706
        %v1738 = vpack.c.b16 %v1709, %v1708
        %v1739 = vpack.c.b16 %v1711, %v1710
        %v1740 = vpack.c.b16 %v1713, %v1712
        %v1741 = vpack.c.b16 %v1715, %v1714
        %v1742 = vpack.c.b16 %v1717, %v1716
        %v1743 = vpack.c.b16 %v1719, %v1718
        %1768 = vmatprep.subr.bf16.mxu0 0
        %1769 = vmatpush1.bf16.msra.mxu0 %v1727
        %1770 = vmatprep.subr.bf16.mxu0 0
        %1771 = vmatpush1.bf16.msra.mxu0 %v1726
        %1772 = vmatprep.subr.bf16.mxu0 0
        %1773 = vmatpush1.bf16.msra.mxu0 %v1725
        %1774 = vmatprep.subr.bf16.mxu0 0
        %1775 = vmatpush1.bf16.msra.mxu0 %v1724
        %1776 = vmatprep.subr.bf16.mxu0 0
        %1777 = vmatpush1.bf16.msra.mxu0 %v1723
        %1778 = vmatprep.subr.bf16.mxu0 0
        %1779 = vmatpush1.bf16.msra.mxu0 %v1722
        %1780 = vmatprep.subr.bf16.mxu0 0
        %1781 = vmatpush1.bf16.msra.mxu0 %v1721
        %1782 = vmatprep.subr.bf16.mxu0 0
        %1783 = vmatpush1.bf16.msra.mxu0 %v1720
        %1784 = vmatprep.subr.bf16.mxu0 0
        %1785 = vmatpush2.bf16.msra.mxu0 %v1735
        %1786 = vmatprep.subr.bf16.mxu0 0
        %1787 = vmatpush2.bf16.msra.mxu0 %v1734
        %1788 = vmatprep.subr.bf16.mxu0 0
        %1789 = vmatpush2.bf16.msra.mxu0 %v1733
        %1790 = vmatprep.subr.bf16.mxu0 0
        %1791 = vmatpush2.bf16.msra.mxu0 %v1732
        %1792 = vmatprep.subr.bf16.mxu0 0
        %1793 = vmatpush2.bf16.msra.mxu0 %v1731
        %1794 = vmatprep.subr.bf16.mxu0 0
        %1795 = vmatpush2.bf16.msra.mxu0 %v1730
        %1796 = vmatprep.subr.bf16.mxu0 0
        %1797 = vmatpush2.bf16.msra.mxu0 %v1729
        %1798 = vmatprep.subr.bf16.mxu0 0
        %1799 = vmatpush2.bf16.msra.mxu0 %v1728
        %1800 = vmatprep.mubr.bf16.mxu0 %v869
        %1801 = vmatmul.mubr.bf16.gmra.mxu0 %v868
        %v1802 = vpop.f32.mrf.mxu0
        %v1803 = vadd.f32 %v1498, %v1802
        %v1804 = vpop.f32.mrf.mxu0
        %v1805 = vpop.f32.mrf.mxu0
        %v1806 = vadd.f32 %v1501, %v1805
        %v1807 = vpop.f32.mrf.mxu0
        %1808 = vmatprep.mubr.bf16.mxu0 %v872
        %1809 = vmatmul.mubr.bf16.gmra.mxu0 %v871
        %v1810 = vpop.f32.mrf.mxu0
        %v1811 = vadd.f32 %v1506, %v1810
        %v1812 = vpop.f32.mrf.mxu0
        %v1813 = vpop.f32.mrf.mxu0
        %v1814 = vadd.f32 %v1509, %v1813
        %v1815 = vpop.f32.mrf.mxu0
        %1816 = vmatprep.mubr.bf16.mxu0 %v875
        %1817 = vmatmul.mubr.bf16.gmra.mxu0 %v874
        %v1818 = vpop.f32.mrf.mxu0
        %v1819 = vadd.f32 %v1514, %v1818
        %v1820 = vpop.f32.mrf.mxu0
        %v1821 = vpop.f32.mrf.mxu0
        %v1822 = vadd.f32 %v1517, %v1821
        %v1823 = vpop.f32.mrf.mxu0
        %1824 = vmatprep.mubr.bf16.mxu0 %v878
        %1825 = vmatmul.mubr.bf16.gmra.mxu0 %v877
        %v1826 = vpop.f32.mrf.mxu0
        %v1827 = vadd.f32 %v1522, %v1826
        %v1828 = vpop.f32.mrf.mxu0
        %v1829 = vpop.f32.mrf.mxu0
        %v1830 = vadd.f32 %v1525, %v1829
        %v1831 = vpop.f32.mrf.mxu0
        %1832 = vmatprep.mubr.bf16.mxu0 %v881
        %1833 = vmatmul.mubr.bf16.gmra.mxu0 %v880
        %v1834 = vpop.f32.mrf.mxu0
        %v1835 = vadd.f32 %v1530, %v1834
        %v1836 = vpop.f32.mrf.mxu0
        %v1837 = vpop.f32.mrf.mxu0
        %v1838 = vadd.f32 %v1533, %v1837
        %v1839 = vpop.f32.mrf.mxu0
        %1840 = vmatprep.mubr.bf16.mxu0 %v884
        %1841 = vmatmul.mubr.bf16.gmra.mxu0 %v883
        %v1842 = vpop.f32.mrf.mxu0
        %v1843 = vadd.f32 %v1538, %v1842
        %v1844 = vpop.f32.mrf.mxu0
        %v1845 = vpop.f32.mrf.mxu0
        %v1846 = vadd.f32 %v1541, %v1845
        %v1847 = vpop.f32.mrf.mxu0
        %1848 = vmatprep.mubr.bf16.mxu0 %v887
        %1849 = vmatmul.mubr.bf16.gmra.mxu0 %v886
        %v1850 = vpop.f32.mrf.mxu0
        %v1851 = vadd.f32 %v1546, %v1850
        %v1852 = vpop.f32.mrf.mxu0
        %v1853 = vpop.f32.mrf.mxu0
        %v1854 = vadd.f32 %v1549, %v1853
        %v1855 = vpop.f32.mrf.mxu0
        %1856 = vmatprep.mubr.bf16.mxu0 %v890
        %1857 = vmatmul.mubr.bf16.gmra.mxu0 %v889
        %v1858 = vpop.f32.mrf.mxu0
        %v1859 = vadd.f32 %v1554, %v1858
        %v1860 = vpop.f32.mrf.mxu0
        %v1861 = vpop.f32.mrf.mxu0
        %v1862 = vadd.f32 %v1557, %v1861
        %v1863 = vpop.f32.mrf.mxu0
        %1864 = vmatprep.mubr.bf16.mxu0 %v893
        %1865 = vmatmul.mubr.bf16.gmra.mxu0 %v892
        %v1866 = vpop.f32.mrf.mxu0
        %v1867 = vadd.f32 %v1562, %v1866
        %v1868 = vpop.f32.mrf.mxu0
        %v1869 = vpop.f32.mrf.mxu0
        %v1870 = vadd.f32 %v1565, %v1869
        %v1871 = vpop.f32.mrf.mxu0
        %1872 = vmatprep.mubr.bf16.mxu0 %v896
        %1873 = vmatmul.mubr.bf16.gmra.mxu0 %v895
        %v1874 = vpop.f32.mrf.mxu0
        %v1875 = vadd.f32 %v1570, %v1874
        %v1876 = vpop.f32.mrf.mxu0
        %v1877 = vpop.f32.mrf.mxu0
        %v1878 = vadd.f32 %v1573, %v1877
        %v1879 = vpop.f32.mrf.mxu0
        %1880 = vmatprep.mubr.bf16.mxu0 %v899
        %1881 = vmatmul.mubr.bf16.gmra.mxu0 %v898
        %v1882 = vpop.f32.mrf.mxu0
        %v1883 = vadd.f32 %v1578, %v1882
        %v1884 = vpop.f32.mrf.mxu0
        %v1885 = vpop.f32.mrf.mxu0
        %v1886 = vadd.f32 %v1581, %v1885
        %v1887 = vpop.f32.mrf.mxu0
        %1888 = vmatprep.mubr.bf16.mxu0 %v902
        %1889 = vmatmul.mubr.bf16.gmra.mxu0 %v901
        %v1890 = vpop.f32.mrf.mxu0
        %v1891 = vadd.f32 %v1586, %v1890
        %v1892 = vpop.f32.mrf.mxu0
        %v1893 = vpop.f32.mrf.mxu0
        %v1894 = vadd.f32 %v1589, %v1893
        %v1895 = vpop.f32.mrf.mxu0
        %1896 = vmatprep.mubr.bf16.mxu0 %v905
        %1897 = vmatmul.mubr.bf16.gmra.mxu0 %v904
        %v1898 = vpop.f32.mrf.mxu0
        %v1899 = vadd.f32 %v1594, %v1898
        %v1900 = vpop.f32.mrf.mxu0
        %v1901 = vpop.f32.mrf.mxu0
        %v1902 = vadd.f32 %v1597, %v1901
        %v1903 = vpop.f32.mrf.mxu0
        %1904 = vmatprep.mubr.bf16.mxu0 %v908
        %1905 = vmatmul.mubr.bf16.gmra.mxu0 %v907
        %v1906 = vpop.f32.mrf.mxu0
        %v1907 = vadd.f32 %v1602, %v1906
        %v1908 = vpop.f32.mrf.mxu0
        %v1909 = vpop.f32.mrf.mxu0
        %v1910 = vadd.f32 %v1605, %v1909
        %v1911 = vpop.f32.mrf.mxu0
        %1912 = vmatprep.mubr.bf16.mxu0 %v911
        %1913 = vmatmul.mubr.bf16.gmra.mxu0 %v910
        %v1914 = vpop.f32.mrf.mxu0
        %v1915 = vadd.f32 %v1610, %v1914
        %v1916 = vpop.f32.mrf.mxu0
        %v1917 = vpop.f32.mrf.mxu0
        %v1918 = vadd.f32 %v1613, %v1917
        %v1919 = vpop.f32.mrf.mxu0
        %1920 = vmatprep.mubr.bf16.mxu0 %v914
        %1921 = vmatmul.mubr.bf16.gmra.mxu0 %v913
        %v1922 = vpop.f32.mrf.mxu0
        %v1923 = vadd.f32 %v1618, %v1922
        %v1924 = vpop.f32.mrf.mxu0
        %v1925 = vpop.f32.mrf.mxu0
        %v1926 = vadd.f32 %v1621, %v1925
        %v1927 = vpop.f32.mrf.mxu0
        %1928 = vdwg.mxu0
        %1929 = vmatprep.subr.bf16.mxu0 0
        %1930 = vmatpush1.bf16.msra.mxu0 %v1743
        %1931 = vmatprep.subr.bf16.mxu0 0
        %1932 = vmatpush1.bf16.msra.mxu0 %v1742
        %1933 = vmatprep.subr.bf16.mxu0 0
        %1934 = vmatpush1.bf16.msra.mxu0 %v1741
        %1935 = vmatprep.subr.bf16.mxu0 0
        %1936 = vmatpush1.bf16.msra.mxu0 %v1740
        %1937 = vmatprep.subr.bf16.mxu0 0
        %1938 = vmatpush1.bf16.msra.mxu0 %v1739
        %1939 = vmatprep.subr.bf16.mxu0 0
        %1940 = vmatpush1.bf16.msra.mxu0 %v1738
        %1941 = vmatprep.subr.bf16.mxu0 0
        %1942 = vmatpush1.bf16.msra.mxu0 %v1737
        %1943 = vmatprep.subr.bf16.mxu0 0
        %1944 = vmatpush1.bf16.msra.mxu0 %v1736
        %1945 = vmatprep.subr.bf16.mxu0 0
        %1946 = vmatpush2.bf16.msra.mxu0 0
        %1947 = vmatprep.subr.bf16.mxu0 0
        %1948 = vmatpush2.bf16.msra.mxu0 0
        %1949 = vmatprep.subr.bf16.mxu0 0
        %1950 = vmatpush2.bf16.msra.mxu0 0
        %1951 = vmatprep.subr.bf16.mxu0 0
        %1952 = vmatpush2.bf16.msra.mxu0 0
        %1953 = vmatprep.subr.bf16.mxu0 0
        %1954 = vmatpush2.bf16.msra.mxu0 0
        %1955 = vmatprep.subr.bf16.mxu0 0
        %1956 = vmatpush2.bf16.msra.mxu0 0
        %1957 = vmatprep.subr.bf16.mxu0 0
        %1958 = vmatpush2.bf16.msra.mxu0 0
        %1959 = vmatprep.subr.bf16.mxu0 0
        %1960 = vmatpush2.bf16.msra.mxu0 0
        %1961 = vmatprep.mubr.bf16.mxu0 0
        %1962 = vmatmul.mubr.bf16.gmra.mxu0 %v870
        %v1963 = vpop.f32.mrf.mxu0
        %v1964 = vadd.f32 %v1803, %v1963
        %v1965 = vpop.f32.mrf.mxu0
        %v1966 = vpop.f32.mrf.mxu0
        %v1967 = vadd.f32 %v1806, %v1966
        %v1968 = vpop.f32.mrf.mxu0
        %1969 = vmatprep.mubr.bf16.mxu0 0
        %1970 = vmatmul.mubr.bf16.gmra.mxu0 %v873
        %v1971 = vpop.f32.mrf.mxu0
        %v1972 = vadd.f32 %v1811, %v1971
        %v1973 = vpop.f32.mrf.mxu0
        %v1974 = vpop.f32.mrf.mxu0
        %v1975 = vadd.f32 %v1814, %v1974
        %v1976 = vpop.f32.mrf.mxu0
        %1977 = vmatprep.mubr.bf16.mxu0 0
        %1978 = vmatmul.mubr.bf16.gmra.mxu0 %v876
        %v1979 = vpop.f32.mrf.mxu0
        %v1980 = vadd.f32 %v1819, %v1979
        %v1981 = vpop.f32.mrf.mxu0
        %v1982 = vpop.f32.mrf.mxu0
        %v1983 = vadd.f32 %v1822, %v1982
        %v1984 = vpop.f32.mrf.mxu0
        %1985 = vmatprep.mubr.bf16.mxu0 0
        %1986 = vmatmul.mubr.bf16.gmra.mxu0 %v879
        %v1987 = vpop.f32.mrf.mxu0
        %v1988 = vadd.f32 %v1827, %v1987
        %v1989 = vpop.f32.mrf.mxu0
        %v1990 = vpop.f32.mrf.mxu0
        %v1991 = vadd.f32 %v1830, %v1990
        %v1992 = vpop.f32.mrf.mxu0
        %1993 = vmatprep.mubr.bf16.mxu0 0
        %1994 = vmatmul.mubr.bf16.gmra.mxu0 %v882
        %v1995 = vpop.f32.mrf.mxu0
        %v1996 = vadd.f32 %v1835, %v1995
        %v1997 = vpop.f32.mrf.mxu0
        %v1998 = vpop.f32.mrf.mxu0
        %v1999 = vadd.f32 %v1838, %v1998
        %v2000 = vpop.f32.mrf.mxu0
        %2001 = vmatprep.mubr.bf16.mxu0 0
        %2002 = vmatmul.mubr.bf16.gmra.mxu0 %v885
        %v2003 = vpop.f32.mrf.mxu0
        %v2004 = vadd.f32 %v1843, %v2003
        %v2005 = vpop.f32.mrf.mxu0
        %v2006 = vpop.f32.mrf.mxu0
        %v2007 = vadd.f32 %v1846, %v2006
        %v2008 = vpop.f32.mrf.mxu0
        %2009 = vmatprep.mubr.bf16.mxu0 0
        %2010 = vmatmul.mubr.bf16.gmra.mxu0 %v888
        %v2011 = vpop.f32.mrf.mxu0
        %v2012 = vadd.f32 %v1851, %v2011
        %v2013 = vpop.f32.mrf.mxu0
        %v2014 = vpop.f32.mrf.mxu0
        %v2015 = vadd.f32 %v1854, %v2014
        %v2016 = vpop.f32.mrf.mxu0
        %2017 = vmatprep.mubr.bf16.mxu0 0
        %2018 = vmatmul.mubr.bf16.gmra.mxu0 %v891
        %v2019 = vpop.f32.mrf.mxu0
        %v2020 = vadd.f32 %v1859, %v2019
        %v2021 = vpop.f32.mrf.mxu0
        %v2022 = vpop.f32.mrf.mxu0
        %v2023 = vadd.f32 %v1862, %v2022
        %v2024 = vpop.f32.mrf.mxu0
        %2025 = vmatprep.mubr.bf16.mxu0 0
        %2026 = vmatmul.mubr.bf16.gmra.mxu0 %v894
        %v2027 = vpop.f32.mrf.mxu0
        %v2028 = vadd.f32 %v1867, %v2027
        %v2029 = vpop.f32.mrf.mxu0
        %v2030 = vpop.f32.mrf.mxu0
        %v2031 = vadd.f32 %v1870, %v2030
        %v2032 = vpop.f32.mrf.mxu0
        %2033 = vmatprep.mubr.bf16.mxu0 0
        %2034 = vmatmul.mubr.bf16.gmra.mxu0 %v897
        %v2035 = vpop.f32.mrf.mxu0
        %v2036 = vadd.f32 %v1875, %v2035
        %v2037 = vpop.f32.mrf.mxu0
        %v2038 = vpop.f32.mrf.mxu0
        %v2039 = vadd.f32 %v1878, %v2038
        %v2040 = vpop.f32.mrf.mxu0
        %2041 = vmatprep.mubr.bf16.mxu0 0
        %2042 = vmatmul.mubr.bf16.gmra.mxu0 %v900
        %v2043 = vpop.f32.mrf.mxu0
        %v2044 = vadd.f32 %v1883, %v2043
        %v2045 = vpop.f32.mrf.mxu0
        %v2046 = vpop.f32.mrf.mxu0
        %v2047 = vadd.f32 %v1886, %v2046
        %v2048 = vpop.f32.mrf.mxu0
        %2049 = vmatprep.mubr.bf16.mxu0 0
        %2050 = vmatmul.mubr.bf16.gmra.mxu0 %v903
        %v2051 = vpop.f32.mrf.mxu0
        %v2052 = vadd.f32 %v1891, %v2051
        %v2053 = vpop.f32.mrf.mxu0
        %v2054 = vpop.f32.mrf.mxu0
        %v2055 = vadd.f32 %v1894, %v2054
        %v2056 = vpop.f32.mrf.mxu0
        %2057 = vmatprep.mubr.bf16.mxu0 0
        %2058 = vmatmul.mubr.bf16.gmra.mxu0 %v906
        %v2059 = vpop.f32.mrf.mxu0
        %v2060 = vadd.f32 %v1899, %v2059
        %v2061 = vpop.f32.mrf.mxu0
        %v2062 = vpop.f32.mrf.mxu0
        %v2063 = vadd.f32 %v1902, %v2062
        %v2064 = vpop.f32.mrf.mxu0
        %2065 = vmatprep.mubr.bf16.mxu0 0
        %2066 = vmatmul.mubr.bf16.gmra.mxu0 %v909
        %v2067 = vpop.f32.mrf.mxu0
        %v2068 = vadd.f32 %v1907, %v2067
        %v2069 = vpop.f32.mrf.mxu0
        %v2070 = vpop.f32.mrf.mxu0
        %v2071 = vadd.f32 %v1910, %v2070
        %v2072 = vpop.f32.mrf.mxu0
        %2073 = vmatprep.mubr.bf16.mxu0 0
        %2074 = vmatmul.mubr.bf16.gmra.mxu0 %v912
        %v2075 = vpop.f32.mrf.mxu0
        %v2076 = vadd.f32 %v1915, %v2075
        %v2077 = vpop.f32.mrf.mxu0
        %v2078 = vpop.f32.mrf.mxu0
        %v2079 = vadd.f32 %v1918, %v2078
        %v2080 = vpop.f32.mrf.mxu0
        %2081 = vmatprep.mubr.bf16.mxu0 0
        %2082 = vmatmul.mubr.bf16.gmra.mxu0 %v915
        %v2083 = vpop.f32.mrf.mxu0
        %v2084 = vadd.f32 %v1923, %v2083
        %v2085 = vpop.f32.mrf.mxu0
        %v2086 = vpop.f32.mrf.mxu0
        %v2087 = vadd.f32 %v1926, %v2086
        %v2088 = vpop.f32.mrf.mxu0
        %2089 = vdwg.mxu0
        %s2090 = scalar_lea.vmem [#allocation2], 48
        %v2091 = vld [vmem:[%s2090] sm:$0xff]
        %v2092 = vld [vmem:[%s2090 + $0x8] sm:$0xff]
        %v2093 = vld [vmem:[%s2090 + $0x18] sm:$0xff]
        %v2094 = vld [vmem:[%s2090 + $0x20] sm:$0xff]
        %v2095 = vld [vmem:[%s2090 + $0x30] sm:$0xff]
        %v2096 = vld [vmem:[%s2090 + $0x38] sm:$0xff]
        %v2097 = vld [vmem:[%s2090 + $0x48] sm:$0xff]
        %v2098 = vld [vmem:[%s2090 + $0x50] sm:$0xff]
        %v2099 = vld [vmem:[%s2090 + $0x60] sm:$0xff]
        %v2100 = vld [vmem:[%s2090 + $0x68] sm:$0xff]
        %v2101 = vld [vmem:[%s2090 + $0x78] sm:$0xff]
        %v2102 = vld [vmem:[%s2090 + $0x80] sm:$0xff]
        %v2103 = vld [vmem:[%s2090 + $0x90] sm:$0xff]
        %v2104 = vld [vmem:[%s2090 + $0x98] sm:$0xff]
        %v2105 = vld [vmem:[%s2090 + $0xa8] sm:$0xff]
        %v2106 = vld [vmem:[%s2090 + $0xb0] sm:$0xff]
        %v2107 = vld [vmem:[%s2090 + $0xc0] sm:$0xff]
        %v2108 = vld [vmem:[%s2090 + $0xc8] sm:$0xff]
        %v2109 = vld [vmem:[%s2090 + $0xd8] sm:$0xff]
        %v2110 = vld [vmem:[%s2090 + $0xe0] sm:$0xff]
        %v2111 = vld [vmem:[%s2090 + $0xf0] sm:$0xff]
        %v2112 = vld [vmem:[%s2090 + $0xf8] sm:$0xff]
        %v2113 = vld [vmem:[%s2090 + $0x108] sm:$0xff]
        %v2114 = vld [vmem:[%s2090 + $0x110] sm:$0xff]
        %v2115 = vld [vmem:[%s2090 + $0x120] sm:$0xff]
        %v2116 = vld [vmem:[%s2090 + $0x128] sm:$0xff]
        %v2117 = vld [vmem:[%s2090 + $0x138] sm:$0xff]
        %v2118 = vld [vmem:[%s2090 + $0x140] sm:$0xff]
        %v2119 = vld [vmem:[%s2090 + $0x150] sm:$0xff]
        %v2120 = vld [vmem:[%s2090 + $0x158] sm:$0xff]
        %v2121 = vld [vmem:[%s2090 + $0x168] sm:$0xff]
        %v2122 = vld [vmem:[%s2090 + $0x170] sm:$0xff]
        %v2123 = vld [vmem:[%s2090 + $0x1] sm:$0xff]
        %v2124 = vld [vmem:[%s2090 + $0x9] sm:$0xff]
        %v2125 = vld [vmem:[%s2090 + $0x19] sm:$0xff]
        %v2126 = vld [vmem:[%s2090 + $0x21] sm:$0xff]
        %v2127 = vld [vmem:[%s2090 + $0x31] sm:$0xff]
        %v2128 = vld [vmem:[%s2090 + $0x39] sm:$0xff]
        %v2129 = vld [vmem:[%s2090 + $0x49] sm:$0xff]
        %v2130 = vld [vmem:[%s2090 + $0x51] sm:$0xff]
        %v2131 = vld [vmem:[%s2090 + $0x61] sm:$0xff]
        %v2132 = vld [vmem:[%s2090 + $0x69] sm:$0xff]
        %v2133 = vld [vmem:[%s2090 + $0x79] sm:$0xff]
        %v2134 = vld [vmem:[%s2090 + $0x81] sm:$0xff]
        %v2135 = vld [vmem:[%s2090 + $0x91] sm:$0xff]
        %v2136 = vld [vmem:[%s2090 + $0x99] sm:$0xff]
        %v2137 = vld [vmem:[%s2090 + $0xa9] sm:$0xff]
        %v2138 = vld [vmem:[%s2090 + $0xb1] sm:$0xff]
        %v2139 = vld [vmem:[%s2090 + $0xc1] sm:$0xff]
        %v2140 = vld [vmem:[%s2090 + $0xc9] sm:$0xff]
        %v2141 = vld [vmem:[%s2090 + $0xd9] sm:$0xff]
        %v2142 = vld [vmem:[%s2090 + $0xe1] sm:$0xff]
        %v2143 = vld [vmem:[%s2090 + $0xf1] sm:$0xff]
        %v2144 = vld [vmem:[%s2090 + $0xf9] sm:$0xff]
        %v2145 = vld [vmem:[%s2090 + $0x109] sm:$0xff]
        %v2146 = vld [vmem:[%s2090 + $0x111] sm:$0xff]
        %v2147 = vld [vmem:[%s2090 + $0x121] sm:$0xff]
        %v2148 = vld [vmem:[%s2090 + $0x129] sm:$0xff]
        %v2149 = vld [vmem:[%s2090 + $0x139] sm:$0xff]
        %v2150 = vld [vmem:[%s2090 + $0x141] sm:$0xff]
        %v2151 = vld [vmem:[%s2090 + $0x151] sm:$0xff]
        %v2152 = vld [vmem:[%s2090 + $0x159] sm:$0xff]
        %v2153 = vld [vmem:[%s2090 + $0x169] sm:$0xff]
        %v2154 = vld [vmem:[%s2090 + $0x171] sm:$0xff]
        %v2155 = vld [vmem:[%s2090 + $0x2] sm:$0xff]
        %v2156 = vld [vmem:[%s2090 + $0xa] sm:$0xff]
        %v2157 = vld [vmem:[%s2090 + $0x1a] sm:$0xff]
        %v2158 = vld [vmem:[%s2090 + $0x22] sm:$0xff]
        %v2159 = vld [vmem:[%s2090 + $0x32] sm:$0xff]
        %v2160 = vld [vmem:[%s2090 + $0x3a] sm:$0xff]
        %v2161 = vld [vmem:[%s2090 + $0x4a] sm:$0xff]
        %v2162 = vld [vmem:[%s2090 + $0x52] sm:$0xff]
        %v2163 = vld [vmem:[%s2090 + $0x62] sm:$0xff]
        %v2164 = vld [vmem:[%s2090 + $0x6a] sm:$0xff]
        %v2165 = vld [vmem:[%s2090 + $0x7a] sm:$0xff]
        %v2166 = vld [vmem:[%s2090 + $0x82] sm:$0xff]
        %v2167 = vld [vmem:[%s2090 + $0x92] sm:$0xff]
        %v2168 = vld [vmem:[%s2090 + $0x9a] sm:$0xff]
        %v2169 = vld [vmem:[%s2090 + $0xaa] sm:$0xff]
        %v2170 = vld [vmem:[%s2090 + $0xb2] sm:$0xff]
        %v2171 = vld [vmem:[%s2090 + $0xc2] sm:$0xff]
        %v2172 = vld [vmem:[%s2090 + $0xca] sm:$0xff]
        %v2173 = vld [vmem:[%s2090 + $0xda] sm:$0xff]
        %v2174 = vld [vmem:[%s2090 + $0xe2] sm:$0xff]
        %v2175 = vld [vmem:[%s2090 + $0xf2] sm:$0xff]
        %v2176 = vld [vmem:[%s2090 + $0xfa] sm:$0xff]
        %v2177 = vld [vmem:[%s2090 + $0x10a] sm:$0xff]
        %v2178 = vld [vmem:[%s2090 + $0x112] sm:$0xff]
        %v2179 = vld [vmem:[%s2090 + $0x122] sm:$0xff]
        %v2180 = vld [vmem:[%s2090 + $0x12a] sm:$0xff]
        %v2181 = vld [vmem:[%s2090 + $0x13a] sm:$0xff]
        %v2182 = vld [vmem:[%s2090 + $0x142] sm:$0xff]
        %v2183 = vld [vmem:[%s2090 + $0x152] sm:$0xff]
        %v2184 = vld [vmem:[%s2090 + $0x15a] sm:$0xff]
        %v2185 = vld [vmem:[%s2090 + $0x16a] sm:$0xff]
        %v2186 = vld [vmem:[%s2090 + $0x172] sm:$0xff]
        %v2187 = vpack.c.bf16 %v2092, %v2091
        %v2188 = vpack.c.bf16 %v2124, %v2123
        %v2189 = vpack.c.bf16 %v2156, %v2155
        %v2190 = vpack.c.bf16 %v2094, %v2093
        %v2191 = vpack.c.bf16 %v2126, %v2125
        %v2192 = vpack.c.bf16 %v2158, %v2157
        %v2193 = vpack.c.bf16 %v2096, %v2095
        %v2194 = vpack.c.bf16 %v2128, %v2127
        %v2195 = vpack.c.bf16 %v2160, %v2159
        %v2196 = vpack.c.bf16 %v2098, %v2097
        %v2197 = vpack.c.bf16 %v2130, %v2129
        %v2198 = vpack.c.bf16 %v2162, %v2161
        %v2199 = vpack.c.bf16 %v2100, %v2099
        %v2200 = vpack.c.bf16 %v2132, %v2131
        %v2201 = vpack.c.bf16 %v2164, %v2163
        %v2202 = vpack.c.bf16 %v2102, %v2101
        %v2203 = vpack.c.bf16 %v2134, %v2133
        %v2204 = vpack.c.bf16 %v2166, %v2165
        %v2205 = vpack.c.bf16 %v2104, %v2103
        %v2206 = vpack.c.bf16 %v2136, %v2135
        %v2207 = vpack.c.bf16 %v2168, %v2167
        %v2208 = vpack.c.bf16 %v2106, %v2105
        %v2209 = vpack.c.bf16 %v2138, %v2137
        %v2210 = vpack.c.bf16 %v2170, %v2169
        %v2211 = vpack.c.bf16 %v2108, %v2107
        %v2212 = vpack.c.bf16 %v2140, %v2139
        %v2213 = vpack.c.bf16 %v2172, %v2171
        %v2214 = vpack.c.bf16 %v2110, %v2109
        %v2215 = vpack.c.bf16 %v2142, %v2141
        %v2216 = vpack.c.bf16 %v2174, %v2173
        %v2217 = vpack.c.bf16 %v2112, %v2111
        %v2218 = vpack.c.bf16 %v2144, %v2143
        %v2219 = vpack.c.bf16 %v2176, %v2175
        %v2220 = vpack.c.bf16 %v2114, %v2113
        %v2221 = vpack.c.bf16 %v2146, %v2145
        %v2222 = vpack.c.bf16 %v2178, %v2177
        %v2223 = vpack.c.bf16 %v2116, %v2115
        %v2224 = vpack.c.bf16 %v2148, %v2147
        %v2225 = vpack.c.bf16 %v2180, %v2179
        %v2226 = vpack.c.bf16 %v2118, %v2117
        %v2227 = vpack.c.bf16 %v2150, %v2149
        %v2228 = vpack.c.bf16 %v2182, %v2181
        %v2229 = vpack.c.bf16 %v2120, %v2119
        %v2230 = vpack.c.bf16 %v2152, %v2151
        %v2231 = vpack.c.bf16 %v2184, %v2183
        %v2232 = vpack.c.bf16 %v2122, %v2121
        %v2233 = vpack.c.bf16 %v2154, %v2153
        %v2234 = vpack.c.bf16 %v2186, %v2185
        %s2235 = scalar_lea.vmem %s2, 384
        %v2236 = vld [vmem:[%s2235] sm:$0xf]
        %v2237 = vld [vmem:[%s2235 + $0x4] sm:$0xf]
        %v2238 = vld [vmem:[%s2235 + $0x8] sm:$0xf]
        %v2239 = vld [vmem:[%s2235 + $0xc] sm:$0xf]
        %v2240 = vld [vmem:[%s2235 + $0x10] sm:$0xf]
        %v2241 = vld [vmem:[%s2235 + $0x14] sm:$0xf]
        %v2242 = vld [vmem:[%s2235 + $0x18] sm:$0xf]
        %v2243 = vld [vmem:[%s2235 + $0x1c] sm:$0xf]
        %v2244 = vld [vmem:[%s2235 + $0x20] sm:$0xf]
        %v2245 = vld [vmem:[%s2235 + $0x24] sm:$0xf]
        %v2246 = vld [vmem:[%s2235 + $0x28] sm:$0xf]
        %v2247 = vld [vmem:[%s2235 + $0x2c] sm:$0xf]
        %v2248 = vld [vmem:[%s2235 + $0x30] sm:$0xf]
        %v2249 = vld [vmem:[%s2235 + $0x34] sm:$0xf]
        %v2250 = vld [vmem:[%s2235 + $0x38] sm:$0xf]
        %v2251 = vld [vmem:[%s2235 + $0x3c] sm:$0xf]
        %v2252 = vld [vmem:[%s2235 + $0x40] sm:$0xf]
        %v2253 = vld [vmem:[%s2235 + $0x44] sm:$0xf]
        %v2254 = vld [vmem:[%s2235 + $0x48] sm:$0xf]
        %v2255 = vld [vmem:[%s2235 + $0x4c] sm:$0xf]
        %v2256 = vld [vmem:[%s2235 + $0x50] sm:$0xf]
        %v2257 = vld [vmem:[%s2235 + $0x54] sm:$0xf]
        %v2258 = vld [vmem:[%s2235 + $0x58] sm:$0xf]
        %v2259 = vld [vmem:[%s2235 + $0x5c] sm:$0xf]
        %v2260 = vld [vmem:[%s2235 + $0x60] sm:$0xf]
        %v2261 = vld [vmem:[%s2235 + $0x64] sm:$0xf]
        %v2262 = vld [vmem:[%s2235 + $0x68] sm:$0xf]
        %v2263 = vld [vmem:[%s2235 + $0x6c] sm:$0xf]
        %v2264 = vld [vmem:[%s2235 + $0x70] sm:$0xf]
        %v2265 = vld [vmem:[%s2235 + $0x74] sm:$0xf]
        %v2266 = vld [vmem:[%s2235 + $0x78] sm:$0xf]
        %v2267 = vld [vmem:[%s2235 + $0x7c] sm:$0xf]
        %v2268 = vld [vmem:[%s2235 + $0x80] sm:$0xf]
        %v2269 = vld [vmem:[%s2235 + $0x84] sm:$0xf]
        %v2270 = vld [vmem:[%s2235 + $0x88] sm:$0xf]
        %v2271 = vld [vmem:[%s2235 + $0x8c] sm:$0xf]
        %v2272 = vld [vmem:[%s2235 + $0x90] sm:$0xf]
        %v2273 = vld [vmem:[%s2235 + $0x94] sm:$0xf]
        %v2274 = vld [vmem:[%s2235 + $0x98] sm:$0xf]
        %v2275 = vld [vmem:[%s2235 + $0x9c] sm:$0xf]
        %v2276 = vld [vmem:[%s2235 + $0xa0] sm:$0xf]
        %v2277 = vld [vmem:[%s2235 + $0xa4] sm:$0xf]
        %v2278 = vld [vmem:[%s2235 + $0xa8] sm:$0xf]
        %v2279 = vld [vmem:[%s2235 + $0xac] sm:$0xf]
        %v2280 = vld [vmem:[%s2235 + $0xb0] sm:$0xf]
        %v2281 = vld [vmem:[%s2235 + $0xb4] sm:$0xf]
        %v2282 = vld [vmem:[%s2235 + $0xb8] sm:$0xf]
        %v2283 = vld [vmem:[%s2235 + $0xbc] sm:$0xf]
        %v2332 = vunpack.c.l.b16 %v2236
        %v2333 = vunpack.c.l.b16 %v2237
        %v2334 = vunpack.c.l.b16 %v2238
        %v2335 = vunpack.c.l.b16 %v2239
        %v2336 = vunpack.c.l.b16 %v2240
        %v2337 = vunpack.c.l.b16 %v2241
        %v2338 = vunpack.c.l.b16 %v2242
        %v2339 = vunpack.c.l.b16 %v2243
        %v2340 = vunpack.c.l.b16 %v2244
        %v2341 = vunpack.c.l.b16 %v2245
        %v2342 = vunpack.c.l.b16 %v2246
        %v2343 = vunpack.c.l.b16 %v2247
        %v2344 = vunpack.c.l.b16 %v2248
        %v2345 = vunpack.c.l.b16 %v2249
        %v2346 = vunpack.c.l.b16 %v2250
        %v2347 = vunpack.c.l.b16 %v2251
        %v2348 = vunpack.c.l.b16 %v2252
        %v2349 = vunpack.c.l.b16 %v2253
        %v2350 = vunpack.c.l.b16 %v2254
        %v2351 = vunpack.c.l.b16 %v2255
        %v2352 = vunpack.c.l.b16 %v2256
        %v2353 = vunpack.c.l.b16 %v2257
        %v2354 = vunpack.c.l.b16 %v2258
        %v2355 = vunpack.c.l.b16 %v2259
        %v2356 = vunpack.c.l.b16 %v2260
        %v2357 = vunpack.c.l.b16 %v2261
        %v2358 = vunpack.c.l.b16 %v2262
        %v2359 = vunpack.c.l.b16 %v2263
        %v2360 = vunpack.c.l.b16 %v2264
        %v2361 = vunpack.c.l.b16 %v2265
        %v2362 = vunpack.c.l.b16 %v2266
        %v2363 = vunpack.c.l.b16 %v2267
        %v2364 = vunpack.c.l.b16 %v2268
        %v2365 = vunpack.c.l.b16 %v2269
        %v2366 = vunpack.c.l.b16 %v2270
        %v2367 = vunpack.c.l.b16 %v2271
        %v2368 = vunpack.c.l.b16 %v2272
        %v2369 = vunpack.c.l.b16 %v2273
        %v2370 = vunpack.c.l.b16 %v2274
        %v2371 = vunpack.c.l.b16 %v2275
        %v2372 = vunpack.c.l.b16 %v2276
        %v2373 = vunpack.c.l.b16 %v2277
        %v2374 = vunpack.c.l.b16 %v2278
        %v2375 = vunpack.c.l.b16 %v2279
        %v2376 = vunpack.c.l.b16 %v2280
        %v2377 = vunpack.c.l.b16 %v2281
        %v2378 = vunpack.c.l.b16 %v2282
        %v2379 = vunpack.c.l.b16 %v2283
        %v2380 = vpack.c.b16 %v2333, %v2332
        %v2381 = vpack.c.b16 %v2335, %v2334
        %v2382 = vpack.c.b16 %v2337, %v2336
        %v2383 = vpack.c.b16 %v2339, %v2338
        %v2384 = vpack.c.b16 %v2341, %v2340
        %v2385 = vpack.c.b16 %v2343, %v2342
        %v2386 = vpack.c.b16 %v2345, %v2344
        %v2387 = vpack.c.b16 %v2347, %v2346
        %v2388 = vpack.c.b16 %v2349, %v2348
        %v2389 = vpack.c.b16 %v2351, %v2350
        %v2390 = vpack.c.b16 %v2353, %v2352
        %v2391 = vpack.c.b16 %v2355, %v2354
        %v2392 = vpack.c.b16 %v2357, %v2356
        %v2393 = vpack.c.b16 %v2359, %v2358
        %v2394 = vpack.c.b16 %v2361, %v2360
        %v2395 = vpack.c.b16 %v2363, %v2362
        %v2396 = vpack.c.b16 %v2365, %v2364
        %v2397 = vpack.c.b16 %v2367, %v2366
        %v2398 = vpack.c.b16 %v2369, %v2368
        %v2399 = vpack.c.b16 %v2371, %v2370
        %v2400 = vpack.c.b16 %v2373, %v2372
        %v2401 = vpack.c.b16 %v2375, %v2374
        %v2402 = vpack.c.b16 %v2377, %v2376
        %v2403 = vpack.c.b16 %v2379, %v2378
        %2428 = vmatprep.subr.bf16.mxu0 0
        %2429 = vmatpush1.bf16.msra.mxu0 %v2387
        %2430 = vmatprep.subr.bf16.mxu0 0
        %2431 = vmatpush1.bf16.msra.mxu0 %v2386
        %2432 = vmatprep.subr.bf16.mxu0 0
        %2433 = vmatpush1.bf16.msra.mxu0 %v2385
        %2434 = vmatprep.subr.bf16.mxu0 0
        %2435 = vmatpush1.bf16.msra.mxu0 %v2384
        %2436 = vmatprep.subr.bf16.mxu0 0
        %2437 = vmatpush1.bf16.msra.mxu0 %v2383
        %2438 = vmatprep.subr.bf16.mxu0 0
        %2439 = vmatpush1.bf16.msra.mxu0 %v2382
        %2440 = vmatprep.subr.bf16.mxu0 0
        %2441 = vmatpush1.bf16.msra.mxu0 %v2381
        %2442 = vmatprep.subr.bf16.mxu0 0
        %2443 = vmatpush1.bf16.msra.mxu0 %v2380
        %2444 = vmatprep.subr.bf16.mxu0 0
        %2445 = vmatpush2.bf16.msra.mxu0 %v2395
        %2446 = vmatprep.subr.bf16.mxu0 0
        %2447 = vmatpush2.bf16.msra.mxu0 %v2394
        %2448 = vmatprep.subr.bf16.mxu0 0
        %2449 = vmatpush2.bf16.msra.mxu0 %v2393
        %2450 = vmatprep.subr.bf16.mxu0 0
        %2451 = vmatpush2.bf16.msra.mxu0 %v2392
        %2452 = vmatprep.subr.bf16.mxu0 0
        %2453 = vmatpush2.bf16.msra.mxu0 %v2391
        %2454 = vmatprep.subr.bf16.mxu0 0
        %2455 = vmatpush2.bf16.msra.mxu0 %v2390
        %2456 = vmatprep.subr.bf16.mxu0 0
        %2457 = vmatpush2.bf16.msra.mxu0 %v2389
        %2458 = vmatprep.subr.bf16.mxu0 0
        %2459 = vmatpush2.bf16.msra.mxu0 %v2388
        %2460 = vmatprep.mubr.bf16.mxu0 %v2188
        %2461 = vmatmul.mubr.bf16.gmra.mxu0 %v2187
        %v2462 = vpop.f32.mrf.mxu0
        %v2463 = vadd.f32 0.0, %v2462
        %v2464 = vpop.f32.mrf.mxu0
        %v2465 = vpop.f32.mrf.mxu0
        %v2466 = vadd.f32 0.0, %v2465
        %v2467 = vpop.f32.mrf.mxu0
        %2468 = vmatprep.mubr.bf16.mxu0 %v2191
        %2469 = vmatmul.mubr.bf16.gmra.mxu0 %v2190
        %v2470 = vpop.f32.mrf.mxu0
        %v2471 = vadd.f32 0.0, %v2470
        %v2472 = vpop.f32.mrf.mxu0
        %v2473 = vpop.f32.mrf.mxu0
        %v2474 = vadd.f32 0.0, %v2473
        %v2475 = vpop.f32.mrf.mxu0
        %2476 = vmatprep.mubr.bf16.mxu0 %v2194
        %2477 = vmatmul.mubr.bf16.gmra.mxu0 %v2193
        %v2478 = vpop.f32.mrf.mxu0
        %v2479 = vadd.f32 0.0, %v2478
        %v2480 = vpop.f32.mrf.mxu0
        %v2481 = vpop.f32.mrf.mxu0
        %v2482 = vadd.f32 0.0, %v2481
        %v2483 = vpop.f32.mrf.mxu0
        %2484 = vmatprep.mubr.bf16.mxu0 %v2197
        %2485 = vmatmul.mubr.bf16.gmra.mxu0 %v2196
        %v2486 = vpop.f32.mrf.mxu0
        %v2487 = vadd.f32 0.0, %v2486
        %v2488 = vpop.f32.mrf.mxu0
        %v2489 = vpop.f32.mrf.mxu0
        %v2490 = vadd.f32 0.0, %v2489
        %v2491 = vpop.f32.mrf.mxu0
        %2492 = vmatprep.mubr.bf16.mxu0 %v2200
        %2493 = vmatmul.mubr.bf16.gmra.mxu0 %v2199
        %v2494 = vpop.f32.mrf.mxu0
        %v2495 = vadd.f32 0.0, %v2494
        %v2496 = vpop.f32.mrf.mxu0
        %v2497 = vpop.f32.mrf.mxu0
        %v2498 = vadd.f32 0.0, %v2497
        %v2499 = vpop.f32.mrf.mxu0
        %2500 = vmatprep.mubr.bf16.mxu0 %v2203
        %2501 = vmatmul.mubr.bf16.gmra.mxu0 %v2202
        %v2502 = vpop.f32.mrf.mxu0
        %v2503 = vadd.f32 0.0, %v2502
        %v2504 = vpop.f32.mrf.mxu0
        %v2505 = vpop.f32.mrf.mxu0
        %v2506 = vadd.f32 0.0, %v2505
        %v2507 = vpop.f32.mrf.mxu0
        %2508 = vmatprep.mubr.bf16.mxu0 %v2206
        %2509 = vmatmul.mubr.bf16.gmra.mxu0 %v2205
        %v2510 = vpop.f32.mrf.mxu0
        %v2511 = vadd.f32 0.0, %v2510
        %v2512 = vpop.f32.mrf.mxu0
        %v2513 = vpop.f32.mrf.mxu0
        %v2514 = vadd.f32 0.0, %v2513
        %v2515 = vpop.f32.mrf.mxu0
        %2516 = vmatprep.mubr.bf16.mxu0 %v2209
        %2517 = vmatmul.mubr.bf16.gmra.mxu0 %v2208
        %v2518 = vpop.f32.mrf.mxu0
        %v2519 = vadd.f32 0.0, %v2518
        %v2520 = vpop.f32.mrf.mxu0
        %v2521 = vpop.f32.mrf.mxu0
        %v2522 = vadd.f32 0.0, %v2521
        %v2523 = vpop.f32.mrf.mxu0
        %2524 = vmatprep.mubr.bf16.mxu0 %v2212
        %2525 = vmatmul.mubr.bf16.gmra.mxu0 %v2211
        %v2526 = vpop.f32.mrf.mxu0
        %v2527 = vadd.f32 0.0, %v2526
        %v2528 = vpop.f32.mrf.mxu0
        %v2529 = vpop.f32.mrf.mxu0
        %v2530 = vadd.f32 0.0, %v2529
        %v2531 = vpop.f32.mrf.mxu0
        %2532 = vmatprep.mubr.bf16.mxu0 %v2215
        %2533 = vmatmul.mubr.bf16.gmra.mxu0 %v2214
        %v2534 = vpop.f32.mrf.mxu0
        %v2535 = vadd.f32 0.0, %v2534
        %v2536 = vpop.f32.mrf.mxu0
        %v2537 = vpop.f32.mrf.mxu0
        %v2538 = vadd.f32 0.0, %v2537
        %v2539 = vpop.f32.mrf.mxu0
        %2540 = vmatprep.mubr.bf16.mxu0 %v2218
        %2541 = vmatmul.mubr.bf16.gmra.mxu0 %v2217
        %v2542 = vpop.f32.mrf.mxu0
        %v2543 = vadd.f32 0.0, %v2542
        %v2544 = vpop.f32.mrf.mxu0
        %v2545 = vpop.f32.mrf.mxu0
        %v2546 = vadd.f32 0.0, %v2545
        %v2547 = vpop.f32.mrf.mxu0
        %2548 = vmatprep.mubr.bf16.mxu0 %v2221
        %2549 = vmatmul.mubr.bf16.gmra.mxu0 %v2220
        %v2550 = vpop.f32.mrf.mxu0
        %v2551 = vadd.f32 0.0, %v2550
        %v2552 = vpop.f32.mrf.mxu0
        %v2553 = vpop.f32.mrf.mxu0
        %v2554 = vadd.f32 0.0, %v2553
        %v2555 = vpop.f32.mrf.mxu0
        %2556 = vmatprep.mubr.bf16.mxu0 %v2224
        %2557 = vmatmul.mubr.bf16.gmra.mxu0 %v2223
        %v2558 = vpop.f32.mrf.mxu0
        %v2559 = vadd.f32 0.0, %v2558
        %v2560 = vpop.f32.mrf.mxu0
        %v2561 = vpop.f32.mrf.mxu0
        %v2562 = vadd.f32 0.0, %v2561
        %v2563 = vpop.f32.mrf.mxu0
        %2564 = vmatprep.mubr.bf16.mxu0 %v2227
        %2565 = vmatmul.mubr.bf16.gmra.mxu0 %v2226
        %v2566 = vpop.f32.mrf.mxu0
        %v2567 = vadd.f32 0.0, %v2566
        %v2568 = vpop.f32.mrf.mxu0
        %v2569 = vpop.f32.mrf.mxu0
        %v2570 = vadd.f32 0.0, %v2569
        %v2571 = vpop.f32.mrf.mxu0
        %2572 = vmatprep.mubr.bf16.mxu0 %v2230
        %2573 = vmatmul.mubr.bf16.gmra.mxu0 %v2229
        %v2574 = vpop.f32.mrf.mxu0
        %v2575 = vadd.f32 0.0, %v2574
        %v2576 = vpop.f32.mrf.mxu0
        %v2577 = vpop.f32.mrf.mxu0
        %v2578 = vadd.f32 0.0, %v2577
        %v2579 = vpop.f32.mrf.mxu0
        %2580 = vmatprep.mubr.bf16.mxu0 %v2233
        %2581 = vmatmul.mubr.bf16.gmra.mxu0 %v2232
        %v2582 = vpop.f32.mrf.mxu0
        %v2583 = vadd.f32 0.0, %v2582
        %v2584 = vpop.f32.mrf.mxu0
        %v2585 = vpop.f32.mrf.mxu0
        %v2586 = vadd.f32 0.0, %v2585
        %v2587 = vpop.f32.mrf.mxu0
        %2588 = vdwg.mxu0
        %2589 = vmatprep.subr.bf16.mxu0 0
        %2590 = vmatpush1.bf16.msra.mxu0 %v2403
        %2591 = vmatprep.subr.bf16.mxu0 0
        %2592 = vmatpush1.bf16.msra.mxu0 %v2402
        %2593 = vmatprep.subr.bf16.mxu0 0
        %2594 = vmatpush1.bf16.msra.mxu0 %v2401
        %2595 = vmatprep.subr.bf16.mxu0 0
        %2596 = vmatpush1.bf16.msra.mxu0 %v2400
        %2597 = vmatprep.subr.bf16.mxu0 0
        %2598 = vmatpush1.bf16.msra.mxu0 %v2399
        %2599 = vmatprep.subr.bf16.mxu0 0
        %2600 = vmatpush1.bf16.msra.mxu0 %v2398
        %2601 = vmatprep.subr.bf16.mxu0 0
        %2602 = vmatpush1.bf16.msra.mxu0 %v2397
        %2603 = vmatprep.subr.bf16.mxu0 0
        %2604 = vmatpush1.bf16.msra.mxu0 %v2396
        %2605 = vmatprep.subr.bf16.mxu0 0
        %2606 = vmatpush2.bf16.msra.mxu0 0
        %2607 = vmatprep.subr.bf16.mxu0 0
        %2608 = vmatpush2.bf16.msra.mxu0 0
        %2609 = vmatprep.subr.bf16.mxu0 0
        %2610 = vmatpush2.bf16.msra.mxu0 0
        %2611 = vmatprep.subr.bf16.mxu0 0
        %2612 = vmatpush2.bf16.msra.mxu0 0
        %2613 = vmatprep.subr.bf16.mxu0 0
        %2614 = vmatpush2.bf16.msra.mxu0 0
        %2615 = vmatprep.subr.bf16.mxu0 0
        %2616 = vmatpush2.bf16.msra.mxu0 0
        %2617 = vmatprep.subr.bf16.mxu0 0
        %2618 = vmatpush2.bf16.msra.mxu0 0
        %2619 = vmatprep.subr.bf16.mxu0 0
        %2620 = vmatpush2.bf16.msra.mxu0 0
        %2621 = vmatprep.mubr.bf16.mxu0 0
        %2622 = vmatmul.mubr.bf16.gmra.mxu0 %v2189
        %v2623 = vpop.f32.mrf.mxu0
        %v2624 = vadd.f32 %v2463, %v2623
        %v2625 = vpop.f32.mrf.mxu0
        %v2626 = vpop.f32.mrf.mxu0
        %v2627 = vadd.f32 %v2466, %v2626
        %v2628 = vpop.f32.mrf.mxu0
        %2629 = vmatprep.mubr.bf16.mxu0 0
        %2630 = vmatmul.mubr.bf16.gmra.mxu0 %v2192
        %v2631 = vpop.f32.mrf.mxu0
        %v2632 = vadd.f32 %v2471, %v2631
        %v2633 = vpop.f32.mrf.mxu0
        %v2634 = vpop.f32.mrf.mxu0
        %v2635 = vadd.f32 %v2474, %v2634
        %v2636 = vpop.f32.mrf.mxu0
        %2637 = vmatprep.mubr.bf16.mxu0 0
        %2638 = vmatmul.mubr.bf16.gmra.mxu0 %v2195
        %v2639 = vpop.f32.mrf.mxu0
        %v2640 = vadd.f32 %v2479, %v2639
        %v2641 = vpop.f32.mrf.mxu0
        %v2642 = vpop.f32.mrf.mxu0
        %v2643 = vadd.f32 %v2482, %v2642
        %v2644 = vpop.f32.mrf.mxu0
        %2645 = vmatprep.mubr.bf16.mxu0 0
        %2646 = vmatmul.mubr.bf16.gmra.mxu0 %v2198
        %v2647 = vpop.f32.mrf.mxu0
        %v2648 = vadd.f32 %v2487, %v2647
        %v2649 = vpop.f32.mrf.mxu0
        %v2650 = vpop.f32.mrf.mxu0
        %v2651 = vadd.f32 %v2490, %v2650
        %v2652 = vpop.f32.mrf.mxu0
        %2653 = vmatprep.mubr.bf16.mxu0 0
        %2654 = vmatmul.mubr.bf16.gmra.mxu0 %v2201
        %v2655 = vpop.f32.mrf.mxu0
        %v2656 = vadd.f32 %v2495, %v2655
        %v2657 = vpop.f32.mrf.mxu0
        %v2658 = vpop.f32.mrf.mxu0
        %v2659 = vadd.f32 %v2498, %v2658
        %v2660 = vpop.f32.mrf.mxu0
        %2661 = vmatprep.mubr.bf16.mxu0 0
        %2662 = vmatmul.mubr.bf16.gmra.mxu0 %v2204
        %v2663 = vpop.f32.mrf.mxu0
        %v2664 = vadd.f32 %v2503, %v2663
        %v2665 = vpop.f32.mrf.mxu0
        %v2666 = vpop.f32.mrf.mxu0
        %v2667 = vadd.f32 %v2506, %v2666
        %v2668 = vpop.f32.mrf.mxu0
        %2669 = vmatprep.mubr.bf16.mxu0 0
        %2670 = vmatmul.mubr.bf16.gmra.mxu0 %v2207
        %v2671 = vpop.f32.mrf.mxu0
        %v2672 = vadd.f32 %v2511, %v2671
        %v2673 = vpop.f32.mrf.mxu0
        %v2674 = vpop.f32.mrf.mxu0
        %v2675 = vadd.f32 %v2514, %v2674
        %v2676 = vpop.f32.mrf.mxu0
        %2677 = vmatprep.mubr.bf16.mxu0 0
        %2678 = vmatmul.mubr.bf16.gmra.mxu0 %v2210
        %v2679 = vpop.f32.mrf.mxu0
        %v2680 = vadd.f32 %v2519, %v2679
        %v2681 = vpop.f32.mrf.mxu0
        %v2682 = vpop.f32.mrf.mxu0
        %v2683 = vadd.f32 %v2522, %v2682
        %v2684 = vpop.f32.mrf.mxu0
        %2685 = vmatprep.mubr.bf16.mxu0 0
        %2686 = vmatmul.mubr.bf16.gmra.mxu0 %v2213
        %v2687 = vpop.f32.mrf.mxu0
        %v2688 = vadd.f32 %v2527, %v2687
        %v2689 = vpop.f32.mrf.mxu0
        %v2690 = vpop.f32.mrf.mxu0
        %v2691 = vadd.f32 %v2530, %v2690
        %v2692 = vpop.f32.mrf.mxu0
        %2693 = vmatprep.mubr.bf16.mxu0 0
        %2694 = vmatmul.mubr.bf16.gmra.mxu0 %v2216
        %v2695 = vpop.f32.mrf.mxu0
        %v2696 = vadd.f32 %v2535, %v2695
        %v2697 = vpop.f32.mrf.mxu0
        %v2698 = vpop.f32.mrf.mxu0
        %v2699 = vadd.f32 %v2538, %v2698
        %v2700 = vpop.f32.mrf.mxu0
        %2701 = vmatprep.mubr.bf16.mxu0 0
        %2702 = vmatmul.mubr.bf16.gmra.mxu0 %v2219
        %v2703 = vpop.f32.mrf.mxu0
        %v2704 = vadd.f32 %v2543, %v2703
        %v2705 = vpop.f32.mrf.mxu0
        %v2706 = vpop.f32.mrf.mxu0
        %v2707 = vadd.f32 %v2546, %v2706
        %v2708 = vpop.f32.mrf.mxu0
        %2709 = vmatprep.mubr.bf16.mxu0 0
        %2710 = vmatmul.mubr.bf16.gmra.mxu0 %v2222
        %v2711 = vpop.f32.mrf.mxu0
        %v2712 = vadd.f32 %v2551, %v2711
        %v2713 = vpop.f32.mrf.mxu0
        %v2714 = vpop.f32.mrf.mxu0
        %v2715 = vadd.f32 %v2554, %v2714
        %v2716 = vpop.f32.mrf.mxu0
        %2717 = vmatprep.mubr.bf16.mxu0 0
        %2718 = vmatmul.mubr.bf16.gmra.mxu0 %v2225
        %v2719 = vpop.f32.mrf.mxu0
        %v2720 = vadd.f32 %v2559, %v2719
        %v2721 = vpop.f32.mrf.mxu0
        %v2722 = vpop.f32.mrf.mxu0
        %v2723 = vadd.f32 %v2562, %v2722
        %v2724 = vpop.f32.mrf.mxu0
        %2725 = vmatprep.mubr.bf16.mxu0 0
        %2726 = vmatmul.mubr.bf16.gmra.mxu0 %v2228
        %v2727 = vpop.f32.mrf.mxu0
        %v2728 = vadd.f32 %v2567, %v2727
        %v2729 = vpop.f32.mrf.mxu0
        %v2730 = vpop.f32.mrf.mxu0
        %v2731 = vadd.f32 %v2570, %v2730
        %v2732 = vpop.f32.mrf.mxu0
        %2733 = vmatprep.mubr.bf16.mxu0 0
        %2734 = vmatmul.mubr.bf16.gmra.mxu0 %v2231
        %v2735 = vpop.f32.mrf.mxu0
        %v2736 = vadd.f32 %v2575, %v2735
        %v2737 = vpop.f32.mrf.mxu0
        %v2738 = vpop.f32.mrf.mxu0
        %v2739 = vadd.f32 %v2578, %v2738
        %v2740 = vpop.f32.mrf.mxu0
        %2741 = vmatprep.mubr.bf16.mxu0 0
        %2742 = vmatmul.mubr.bf16.gmra.mxu0 %v2234
        %v2743 = vpop.f32.mrf.mxu0
        %v2744 = vadd.f32 %v2583, %v2743
        %v2745 = vpop.f32.mrf.mxu0
        %v2746 = vpop.f32.mrf.mxu0
        %v2747 = vadd.f32 %v2586, %v2746
        %v2748 = vpop.f32.mrf.mxu0
        %2749 = vdwg.mxu0
        %v2750 = vadd.f32 %v1964, %v2624
        %v2751 = vadd.f32 %v1967, %v2627
        %v2752 = vadd.f32 %v1972, %v2632
        %v2753 = vadd.f32 %v1975, %v2635
        %v2754 = vadd.f32 %v1980, %v2640
        %v2755 = vadd.f32 %v1983, %v2643
        %v2756 = vadd.f32 %v1988, %v2648
        %v2757 = vadd.f32 %v1991, %v2651
        %v2758 = vadd.f32 %v1996, %v2656
        %v2759 = vadd.f32 %v1999, %v2659
        %v2760 = vadd.f32 %v2004, %v2664
        %v2761 = vadd.f32 %v2007, %v2667
        %v2762 = vadd.f32 %v2012, %v2672
        %v2763 = vadd.f32 %v2015, %v2675
        %v2764 = vadd.f32 %v2020, %v2680
        %v2765 = vadd.f32 %v2023, %v2683
        %v2766 = vadd.f32 %v2028, %v2688
        %v2767 = vadd.f32 %v2031, %v2691
        %v2768 = vadd.f32 %v2036, %v2696
        %v2769 = vadd.f32 %v2039, %v2699
        %v2770 = vadd.f32 %v2044, %v2704
        %v2771 = vadd.f32 %v2047, %v2707
        %v2772 = vadd.f32 %v2052, %v2712
        %v2773 = vadd.f32 %v2055, %v2715
        %v2774 = vadd.f32 %v2060, %v2720
        %v2775 = vadd.f32 %v2063, %v2723
        %v2776 = vadd.f32 %v2068, %v2728
        %v2777 = vadd.f32 %v2071, %v2731
        %v2778 = vadd.f32 %v2076, %v2736
        %v2779 = vadd.f32 %v2079, %v2739
        %v2780 = vadd.f32 %v2084, %v2744
        %v2781 = vadd.f32 %v2087, %v2747
        %v2782 = vld [vmem:[%s3] sm:$0x1]
        %v2784 = vlaneseq
        %v2785 = vshrl.u32 %v2784, 7
        %v2786 = vsub.s32 0, %v2785
        %v2787 = vrot.slane %v2782, %v2786
        %v2789 = vmul.f32 %v2750, %v2787
        %v2790 = vmul.f32 %v2751, %v2787
        %v2791 = vmul.f32 %v2752, %v2787
        %v2792 = vmul.f32 %v2753, %v2787
        %v2793 = vmul.f32 %v2754, %v2787
        %v2794 = vmul.f32 %v2755, %v2787
        %v2795 = vmul.f32 %v2756, %v2787
        %v2796 = vmul.f32 %v2757, %v2787
        %v2797 = vmul.f32 %v2758, %v2787
        %v2798 = vmul.f32 %v2759, %v2787
        %v2799 = vmul.f32 %v2760, %v2787
        %v2800 = vmul.f32 %v2761, %v2787
        %v2801 = vmul.f32 %v2762, %v2787
        %v2802 = vmul.f32 %v2763, %v2787
        %v2803 = vmul.f32 %v2764, %v2787
        %v2804 = vmul.f32 %v2765, %v2787
        %v2805 = vmul.f32 %v2766, %v2787
        %v2806 = vmul.f32 %v2767, %v2787
        %v2807 = vmul.f32 %v2768, %v2787
        %v2808 = vmul.f32 %v2769, %v2787
        %v2809 = vmul.f32 %v2770, %v2787
        %v2810 = vmul.f32 %v2771, %v2787
        %v2811 = vmul.f32 %v2772, %v2787
        %v2812 = vmul.f32 %v2773, %v2787
        %v2813 = vmul.f32 %v2774, %v2787
        %v2814 = vmul.f32 %v2775, %v2787
        %v2815 = vmul.f32 %v2776, %v2787
        %v2816 = vmul.f32 %v2777, %v2787
        %v2817 = vmul.f32 %v2778, %v2787
        %v2818 = vmul.f32 %v2779, %v2787
        %v2819 = vmul.f32 %v2780, %v2787
        %v2820 = vmul.f32 %v2781, %v2787
        %v2821 = vld [vmem:[%s4] sm:$0x1]
        %v2823 = vlaneseq
        %v2824 = vshrl.u32 %v2823, 7
        %v2825 = vsub.s32 0, %v2824
        %v2826 = vrot.slane %v2821, %v2825
        %v2828 = vadd.f32 %v2789, %v2826
        %v2829 = vadd.f32 %v2790, %v2826
        %v2830 = vadd.f32 %v2791, %v2826
        %v2831 = vadd.f32 %v2792, %v2826
        %v2832 = vadd.f32 %v2793, %v2826
        %v2833 = vadd.f32 %v2794, %v2826
        %v2834 = vadd.f32 %v2795, %v2826
        %v2835 = vadd.f32 %v2796, %v2826
        %v2836 = vadd.f32 %v2797, %v2826
        %v2837 = vadd.f32 %v2798, %v2826
        %v2838 = vadd.f32 %v2799, %v2826
        %v2839 = vadd.f32 %v2800, %v2826
        %v2840 = vadd.f32 %v2801, %v2826
        %v2841 = vadd.f32 %v2802, %v2826
        %v2842 = vadd.f32 %v2803, %v2826
        %v2843 = vadd.f32 %v2804, %v2826
        %v2844 = vadd.f32 %v2805, %v2826
        %v2845 = vadd.f32 %v2806, %v2826
        %v2846 = vadd.f32 %v2807, %v2826
        %v2847 = vadd.f32 %v2808, %v2826
        %v2848 = vadd.f32 %v2809, %v2826
        %v2849 = vadd.f32 %v2810, %v2826
        %v2850 = vadd.f32 %v2811, %v2826
        %v2851 = vadd.f32 %v2812, %v2826
        %v2852 = vadd.f32 %v2813, %v2826
        %v2853 = vadd.f32 %v2814, %v2826
        %v2854 = vadd.f32 %v2815, %v2826
        %v2855 = vadd.f32 %v2816, %v2826
        %v2856 = vadd.f32 %v2817, %v2826
        %v2857 = vadd.f32 %v2818, %v2826
        %v2858 = vadd.f32 %v2819, %v2826
        %v2859 = vadd.f32 %v2820, %v2826
        %vm2860 = vcmp.ge.f32.partialorder %v2828, 0.0
        %vm2861 = vcmp.ge.f32.partialorder %v2829, 0.0
        %vm2862 = vcmp.ge.f32.partialorder %v2830, 0.0
        %vm2863 = vcmp.ge.f32.partialorder %v2831, 0.0
        %vm2864 = vcmp.ge.f32.partialorder %v2832, 0.0
        %vm2865 = vcmp.ge.f32.partialorder %v2833, 0.0
        %vm2866 = vcmp.ge.f32.partialorder %v2834, 0.0
        %vm2867 = vcmp.ge.f32.partialorder %v2835, 0.0
        %vm2868 = vcmp.ge.f32.partialorder %v2836, 0.0
        %vm2869 = vcmp.ge.f32.partialorder %v2837, 0.0
        %vm2870 = vcmp.ge.f32.partialorder %v2838, 0.0
        %vm2871 = vcmp.ge.f32.partialorder %v2839, 0.0
        %vm2872 = vcmp.ge.f32.partialorder %v2840, 0.0
        %vm2873 = vcmp.ge.f32.partialorder %v2841, 0.0
        %vm2874 = vcmp.ge.f32.partialorder %v2842, 0.0
        %vm2875 = vcmp.ge.f32.partialorder %v2843, 0.0
        %vm2876 = vcmp.ge.f32.partialorder %v2844, 0.0
        %vm2877 = vcmp.ge.f32.partialorder %v2845, 0.0
        %vm2878 = vcmp.ge.f32.partialorder %v2846, 0.0
        %vm2879 = vcmp.ge.f32.partialorder %v2847, 0.0
        %vm2880 = vcmp.ge.f32.partialorder %v2848, 0.0
        %vm2881 = vcmp.ge.f32.partialorder %v2849, 0.0
        %vm2882 = vcmp.ge.f32.partialorder %v2850, 0.0
        %vm2883 = vcmp.ge.f32.partialorder %v2851, 0.0
        %vm2884 = vcmp.ge.f32.partialorder %v2852, 0.0
        %vm2885 = vcmp.ge.f32.partialorder %v2853, 0.0
        %vm2886 = vcmp.ge.f32.partialorder %v2854, 0.0
        %vm2887 = vcmp.ge.f32.partialorder %v2855, 0.0
        %vm2888 = vcmp.ge.f32.partialorder %v2856, 0.0
        %vm2889 = vcmp.ge.f32.partialorder %v2857, 0.0
        %vm2890 = vcmp.ge.f32.partialorder %v2858, 0.0
        %vm2891 = vcmp.ge.f32.partialorder %v2859, 0.0
        %v2892 = vmul.f32 %v2828, 0.01
        %v2893 = vmul.f32 %v2829, 0.01
        %v2894 = vmul.f32 %v2830, 0.01
        %v2895 = vmul.f32 %v2831, 0.01
        %v2896 = vmul.f32 %v2832, 0.01
        %v2897 = vmul.f32 %v2833, 0.01
        %v2898 = vmul.f32 %v2834, 0.01
        %v2899 = vmul.f32 %v2835, 0.01
        %v2900 = vmul.f32 %v2836, 0.01
        %v2901 = vmul.f32 %v2837, 0.01
        %v2902 = vmul.f32 %v2838, 0.01
        %v2903 = vmul.f32 %v2839, 0.01
        %v2904 = vmul.f32 %v2840, 0.01
        %v2905 = vmul.f32 %v2841, 0.01
        %v2906 = vmul.f32 %v2842, 0.01
        %v2907 = vmul.f32 %v2843, 0.01
        %v2908 = vmul.f32 %v2844, 0.01
        %v2909 = vmul.f32 %v2845, 0.01
        %v2910 = vmul.f32 %v2846, 0.01
        %v2911 = vmul.f32 %v2847, 0.01
        %v2912 = vmul.f32 %v2848, 0.01
        %v2913 = vmul.f32 %v2849, 0.01
        %v2914 = vmul.f32 %v2850, 0.01
        %v2915 = vmul.f32 %v2851, 0.01
        %v2916 = vmul.f32 %v2852, 0.01
        %v2917 = vmul.f32 %v2853, 0.01
        %v2918 = vmul.f32 %v2854, 0.01
        %v2919 = vmul.f32 %v2855, 0.01
        %v2920 = vmul.f32 %v2856, 0.01
        %v2921 = vmul.f32 %v2857, 0.01
        %v2922 = vmul.f32 %v2858, 0.01
        %v2923 = vmul.f32 %v2859, 0.01
        %v2924 = vsel %vm2860, %v2828, %v2892
        %v2925 = vsel %vm2861, %v2829, %v2893
        %v2926 = vsel %vm2862, %v2830, %v2894
        %v2927 = vsel %vm2863, %v2831, %v2895
        %v2928 = vsel %vm2864, %v2832, %v2896
        %v2929 = vsel %vm2865, %v2833, %v2897
        %v2930 = vsel %vm2866, %v2834, %v2898
        %v2931 = vsel %vm2867, %v2835, %v2899
        %v2932 = vsel %vm2868, %v2836, %v2900
        %v2933 = vsel %vm2869, %v2837, %v2901
        %v2934 = vsel %vm2870, %v2838, %v2902
        %v2935 = vsel %vm2871, %v2839, %v2903
        %v2936 = vsel %vm2872, %v2840, %v2904
        %v2937 = vsel %vm2873, %v2841, %v2905
        %v2938 = vsel %vm2874, %v2842, %v2906
        %v2939 = vsel %vm2875, %v2843, %v2907
        %v2940 = vsel %vm2876, %v2844, %v2908
        %v2941 = vsel %vm2877, %v2845, %v2909
        %v2942 = vsel %vm2878, %v2846, %v2910
        %v2943 = vsel %vm2879, %v2847, %v2911
        %v2944 = vsel %vm2880, %v2848, %v2912
        %v2945 = vsel %vm2881, %v2849, %v2913
        %v2946 = vsel %vm2882, %v2850, %v2914
        %v2947 = vsel %vm2883, %v2851, %v2915
        %v2948 = vsel %vm2884, %v2852, %v2916
        %v2949 = vsel %vm2885, %v2853, %v2917
        %v2950 = vsel %vm2886, %v2854, %v2918
        %v2951 = vsel %vm2887, %v2855, %v2919
        %v2952 = vsel %vm2888, %v2856, %v2920
        %v2953 = vsel %vm2889, %v2857, %v2921
        %v2954 = vsel %vm2890, %v2858, %v2922
        %v2955 = vsel %vm2891, %v2859, %v2923
        %v2988 = vrot.slane %v2924, 7
        %v2989 = vrot.slane %v2925, 7
        %v2990 = vsel %vm583, %v2988, %v2989
        %v2991 = vrot.slane %v2926, 7
        %v2992 = vrot.slane %v2927, 7
        %v2993 = vsel %vm583, %v2991, %v2992
        %v2994 = vrot.slane %v2928, 7
        %v2995 = vrot.slane %v2929, 7
        %v2996 = vsel %vm583, %v2994, %v2995
        %v2997 = vrot.slane %v2930, 7
        %v2998 = vrot.slane %v2931, 7
        %v2999 = vsel %vm583, %v2997, %v2998
        %v3000 = vrot.slane %v2932, 7
        %v3001 = vrot.slane %v2933, 7
        %v3002 = vsel %vm583, %v3000, %v3001
        %v3003 = vrot.slane %v2934, 7
        %v3004 = vrot.slane %v2935, 7
        %v3005 = vsel %vm583, %v3003, %v3004
        %v3006 = vrot.slane %v2936, 7
        %v3007 = vrot.slane %v2937, 7
        %v3008 = vsel %vm583, %v3006, %v3007
        %v3009 = vrot.slane %v2938, 7
        %v3010 = vrot.slane %v2939, 7
        %v3011 = vsel %vm583, %v3009, %v3010
        %v3012 = vrot.slane %v2940, 7
        %v3013 = vrot.slane %v2941, 7
        %v3014 = vsel %vm583, %v3012, %v3013
        %v3015 = vrot.slane %v2942, 7
        %v3016 = vrot.slane %v2943, 7
        %v3017 = vsel %vm583, %v3015, %v3016
        %v3018 = vrot.slane %v2944, 7
        %v3019 = vrot.slane %v2945, 7
        %v3020 = vsel %vm583, %v3018, %v3019
        %v3021 = vrot.slane %v2946, 7
        %v3022 = vrot.slane %v2947, 7
        %v3023 = vsel %vm583, %v3021, %v3022
        %v3024 = vrot.slane %v2948, 7
        %v3025 = vrot.slane %v2949, 7
        %v3026 = vsel %vm583, %v3024, %v3025
        %v3027 = vrot.slane %v2950, 7
        %v3028 = vrot.slane %v2951, 7
        %v3029 = vsel %vm583, %v3027, %v3028
        %v3030 = vrot.slane %v2952, 7
        %v3031 = vrot.slane %v2953, 7
        %v3032 = vsel %vm583, %v3030, %v3031
        %v3033 = vrot.slane %v2954, 7
        %v3034 = vrot.slane %v2955, 7
        %v3035 = vsel %vm583, %v3033, %v3034
        %v3084 = vsel %vm583, 0.0, %v2988
        %v3085 = vsel %vm583, 0.0, %v2991
        %v3086 = vsel %vm583, 0.0, %v2994
        %v3087 = vsel %vm583, 0.0, %v2997
        %v3088 = vsel %vm583, 0.0, %v3000
        %v3089 = vsel %vm583, 0.0, %v3003
        %v3090 = vsel %vm583, 0.0, %v3006
        %v3091 = vsel %vm583, 0.0, %v3009
        %v3092 = vsel %vm583, 0.0, %v3012
        %v3093 = vsel %vm583, 0.0, %v3015
        %v3094 = vsel %vm583, 0.0, %v3018
        %v3095 = vsel %vm583, 0.0, %v3021
        %v3096 = vsel %vm583, 0.0, %v3024
        %v3097 = vsel %vm583, 0.0, %v3027
        %v3098 = vsel %vm583, 0.0, %v3030
        %v3099 = vsel %vm583, 0.0, %v3033
        %v3100 = vsel %vm583, %v2989, 0.0
        %v3101 = vsel %vm583, %v2992, 0.0
        %v3102 = vsel %vm583, %v2995, 0.0
        %v3103 = vsel %vm583, %v2998, 0.0
        %v3104 = vsel %vm583, %v3001, 0.0
        %v3105 = vsel %vm583, %v3004, 0.0
        %v3106 = vsel %vm583, %v3007, 0.0
        %v3107 = vsel %vm583, %v3010, 0.0
        %v3108 = vsel %vm583, %v3013, 0.0
        %v3109 = vsel %vm583, %v3016, 0.0
        %v3110 = vsel %vm583, %v3019, 0.0
        %v3111 = vsel %vm583, %v3022, 0.0
        %v3112 = vsel %vm583, %v3025, 0.0
        %v3113 = vsel %vm583, %v3028, 0.0
        %v3114 = vsel %vm583, %v3031, 0.0
        %v3115 = vsel %vm583, %v3034, 0.0
        %3116 = vst.msk [vmem:[#allocation3] sm:$0xff] %vm517, %v684
        %3117 = vst.msk [vmem:[#allocation3 + $0x8] sm:$0xff] %vm517, %v585
        %vm3118 = vcmask 517120
        %3119 = vst.msk [vmem:[#allocation3 + $0x10] sm:$0x3] %vm3118, %v701
        %3120 = vst.msk [vmem:[#allocation3 + $0x18] sm:$0xff] %vm517, %v3084
        %3121 = vst.msk [vmem:[#allocation3 + $0x20] sm:$0xff] %vm517, %v2990
        %3122 = vst.msk [vmem:[#allocation3 + $0x28] sm:$0x3] %vm3118, %v3100
        %3123 = vst.msk [vmem:[#allocation3 + $0x30] sm:$0xff] %vm517, %v3085
        %3124 = vst.msk [vmem:[#allocation3 + $0x38] sm:$0xff] %vm517, %v2993
        %3125 = vst.msk [vmem:[#allocation3 + $0x40] sm:$0x3] %vm3118, %v3101
        %3126 = vst.msk [vmem:[#allocation3 + $0x48] sm:$0xff] %vm517, %v3086
        %3127 = vst.msk [vmem:[#allocation3 + $0x50] sm:$0xff] %vm517, %v2996
        %3128 = vst.msk [vmem:[#allocation3 + $0x58] sm:$0x3] %vm3118, %v3102
        %3129 = vst.msk [vmem:[#allocation3 + $0x60] sm:$0xff] %vm517, %v3087
        %3130 = vst.msk [vmem:[#allocation3 + $0x68] sm:$0xff] %vm517, %v2999
        %3131 = vst.msk [vmem:[#allocation3 + $0x70] sm:$0x3] %vm3118, %v3103
        %3132 = vst.msk [vmem:[#allocation3 + $0x78] sm:$0xff] %vm517, %v3088
        %3133 = vst.msk [vmem:[#allocation3 + $0x80] sm:$0xff] %vm517, %v3002
        %3134 = vst.msk [vmem:[#allocation3 + $0x88] sm:$0x3] %vm3118, %v3104
        %3135 = vst.msk [vmem:[#allocation3 + $0x90] sm:$0xff] %vm517, %v3089
        %3136 = vst.msk [vmem:[#allocation3 + $0x98] sm:$0xff] %vm517, %v3005
        %3137 = vst.msk [vmem:[#allocation3 + $0xa0] sm:$0x3] %vm3118, %v3105
        %3138 = vst.msk [vmem:[#allocation3 + $0xa8] sm:$0xff] %vm517, %v3090
        %3139 = vst.msk [vmem:[#allocation3 + $0xb0] sm:$0xff] %vm517, %v3008
        %3140 = vst.msk [vmem:[#allocation3 + $0xb8] sm:$0x3] %vm3118, %v3106
        %3141 = vst.msk [vmem:[#allocation3 + $0xc0] sm:$0xff] %vm517, %v3091
        %3142 = vst.msk [vmem:[#allocation3 + $0xc8] sm:$0xff] %vm517, %v3011
        %3143 = vst.msk [vmem:[#allocation3 + $0xd0] sm:$0x3] %vm3118, %v3107
        %3144 = vst.msk [vmem:[#allocation3 + $0xd8] sm:$0xff] %vm517, %v3092
        %3145 = vst.msk [vmem:[#allocation3 + $0xe0] sm:$0xff] %vm517, %v3014
        %3146 = vst.msk [vmem:[#allocation3 + $0xe8] sm:$0x3] %vm3118, %v3108
        %3147 = vst.msk [vmem:[#allocation3 + $0xf0] sm:$0xff] %vm517, %v3093
        %3148 = vst.msk [vmem:[#allocation3 + $0xf8] sm:$0xff] %vm517, %v3017
        %3149 = vst.msk [vmem:[#allocation3 + $0x100] sm:$0x3] %vm3118, %v3109
        %3150 = vst.msk [vmem:[#allocation3 + $0x108] sm:$0xff] %vm517, %v3094
        %3151 = vst.msk [vmem:[#allocation3 + $0x110] sm:$0xff] %vm517, %v3020
        %3152 = vst.msk [vmem:[#allocation3 + $0x118] sm:$0x3] %vm3118, %v3110
        %3153 = vst.msk [vmem:[#allocation3 + $0x120] sm:$0xff] %vm517, %v3095
        %3154 = vst.msk [vmem:[#allocation3 + $0x128] sm:$0xff] %vm517, %v3023
        %3155 = vst.msk [vmem:[#allocation3 + $0x130] sm:$0x3] %vm3118, %v3111
        %3156 = vst.msk [vmem:[#allocation3 + $0x138] sm:$0xff] %vm517, %v3096
        %3157 = vst.msk [vmem:[#allocation3 + $0x140] sm:$0xff] %vm517, %v3026
        %3158 = vst.msk [vmem:[#allocation3 + $0x148] sm:$0x3] %vm3118, %v3112
        %3159 = vst.msk [vmem:[#allocation3 + $0x150] sm:$0xff] %vm517, %v3097
        %3160 = vst.msk [vmem:[#allocation3 + $0x158] sm:$0xff] %vm517, %v3029
        %3161 = vst.msk [vmem:[#allocation3 + $0x160] sm:$0x3] %vm3118, %v3113
        %3162 = vst.msk [vmem:[#allocation3 + $0x168] sm:$0xff] %vm517, %v3098
        %3163 = vst.msk [vmem:[#allocation3 + $0x170] sm:$0xff] %vm517, %v3032
        %3164 = vst.msk [vmem:[#allocation3 + $0x178] sm:$0x3] %vm3118, %v3114
        %3165 = vst.msk [vmem:[#allocation3 + $0x180] sm:$0xff] %vm517, %v3099
        %3166 = vst.msk [vmem:[#allocation3 + $0x188] sm:$0xff] %vm517, %v3035
        %3167 = vst.msk [vmem:[#allocation3 + $0x190] sm:$0x3] %vm3118, %v3115
        %3168 = vst.msk [vmem:[#allocation3 + $0x198] sm:$0xff] %vm517, %v684
        %3169 = vst.msk [vmem:[#allocation3 + $0x1a0] sm:$0xff] %vm517, %v585
        %3170 = vst.msk [vmem:[#allocation3 + $0x1a8] sm:$0x3] %vm3118, %v701
        %v3171 = vld [vmem:[#allocation3] sm:$0xff]
        %v3172 = vld [vmem:[#allocation3 + $0x8] sm:$0xff]
        %v3173 = vld [vmem:[#allocation3 + $0x18] sm:$0xff]
        %v3174 = vld [vmem:[#allocation3 + $0x20] sm:$0xff]
        %v3175 = vld [vmem:[#allocation3 + $0x30] sm:$0xff]
        %v3176 = vld [vmem:[#allocation3 + $0x38] sm:$0xff]
        %v3177 = vld [vmem:[#allocation3 + $0x48] sm:$0xff]
        %v3178 = vld [vmem:[#allocation3 + $0x50] sm:$0xff]
        %v3179 = vld [vmem:[#allocation3 + $0x60] sm:$0xff]
        %v3180 = vld [vmem:[#allocation3 + $0x68] sm:$0xff]
        %v3181 = vld [vmem:[#allocation3 + $0x78] sm:$0xff]
        %v3182 = vld [vmem:[#allocation3 + $0x80] sm:$0xff]
        %v3183 = vld [vmem:[#allocation3 + $0x90] sm:$0xff]
        %v3184 = vld [vmem:[#allocation3 + $0x98] sm:$0xff]
        %v3185 = vld [vmem:[#allocation3 + $0xa8] sm:$0xff]
        %v3186 = vld [vmem:[#allocation3 + $0xb0] sm:$0xff]
        %v3187 = vld [vmem:[#allocation3 + $0xc0] sm:$0xff]
        %v3188 = vld [vmem:[#allocation3 + $0xc8] sm:$0xff]
        %v3189 = vld [vmem:[#allocation3 + $0xd8] sm:$0xff]
        %v3190 = vld [vmem:[#allocation3 + $0xe0] sm:$0xff]
        %v3191 = vld [vmem:[#allocation3 + $0xf0] sm:$0xff]
        %v3192 = vld [vmem:[#allocation3 + $0xf8] sm:$0xff]
        %v3193 = vld [vmem:[#allocation3 + $0x108] sm:$0xff]
        %v3194 = vld [vmem:[#allocation3 + $0x110] sm:$0xff]
        %v3195 = vld [vmem:[#allocation3 + $0x120] sm:$0xff]
        %v3196 = vld [vmem:[#allocation3 + $0x128] sm:$0xff]
        %v3197 = vld [vmem:[#allocation3 + $0x138] sm:$0xff]
        %v3198 = vld [vmem:[#allocation3 + $0x140] sm:$0xff]
        %v3199 = vld [vmem:[#allocation3 + $0x150] sm:$0xff]
        %v3200 = vld [vmem:[#allocation3 + $0x158] sm:$0xff]
        %v3201 = vld [vmem:[#allocation3 + $0x168] sm:$0xff]
        %v3202 = vld [vmem:[#allocation3 + $0x170] sm:$0xff]
        %v3203 = vld [vmem:[#allocation3 + $0x1] sm:$0xff]
        %v3204 = vld [vmem:[#allocation3 + $0x9] sm:$0xff]
        %v3205 = vld [vmem:[#allocation3 + $0x19] sm:$0xff]
        %v3206 = vld [vmem:[#allocation3 + $0x21] sm:$0xff]
        %v3207 = vld [vmem:[#allocation3 + $0x31] sm:$0xff]
        %v3208 = vld [vmem:[#allocation3 + $0x39] sm:$0xff]
        %v3209 = vld [vmem:[#allocation3 + $0x49] sm:$0xff]
        %v3210 = vld [vmem:[#allocation3 + $0x51] sm:$0xff]
        %v3211 = vld [vmem:[#allocation3 + $0x61] sm:$0xff]
        %v3212 = vld [vmem:[#allocation3 + $0x69] sm:$0xff]
        %v3213 = vld [vmem:[#allocation3 + $0x79] sm:$0xff]
        %v3214 = vld [vmem:[#allocation3 + $0x81] sm:$0xff]
        %v3215 = vld [vmem:[#allocation3 + $0x91] sm:$0xff]
        %v3216 = vld [vmem:[#allocation3 + $0x99] sm:$0xff]
        %v3217 = vld [vmem:[#allocation3 + $0xa9] sm:$0xff]
        %v3218 = vld [vmem:[#allocation3 + $0xb1] sm:$0xff]
        %v3219 = vld [vmem:[#allocation3 + $0xc1] sm:$0xff]
        %v3220 = vld [vmem:[#allocation3 + $0xc9] sm:$0xff]
        %v3221 = vld [vmem:[#allocation3 + $0xd9] sm:$0xff]
        %v3222 = vld [vmem:[#allocation3 + $0xe1] sm:$0xff]
        %v3223 = vld [vmem:[#allocation3 + $0xf1] sm:$0xff]
        %v3224 = vld [vmem:[#allocation3 + $0xf9] sm:$0xff]
        %v3225 = vld [vmem:[#allocation3 + $0x109] sm:$0xff]
        %v3226 = vld [vmem:[#allocation3 + $0x111] sm:$0xff]
        %v3227 = vld [vmem:[#allocation3 + $0x121] sm:$0xff]
        %v3228 = vld [vmem:[#allocation3 + $0x129] sm:$0xff]
        %v3229 = vld [vmem:[#allocation3 + $0x139] sm:$0xff]
        %v3230 = vld [vmem:[#allocation3 + $0x141] sm:$0xff]
        %v3231 = vld [vmem:[#allocation3 + $0x151] sm:$0xff]
        %v3232 = vld [vmem:[#allocation3 + $0x159] sm:$0xff]
        %v3233 = vld [vmem:[#allocation3 + $0x169] sm:$0xff]
        %v3234 = vld [vmem:[#allocation3 + $0x171] sm:$0xff]
        %v3235 = vld [vmem:[#allocation3 + $0x2] sm:$0xff]
        %v3236 = vld [vmem:[#allocation3 + $0xa] sm:$0xff]
        %v3237 = vld [vmem:[#allocation3 + $0x1a] sm:$0xff]
        %v3238 = vld [vmem:[#allocation3 + $0x22] sm:$0xff]
        %v3239 = vld [vmem:[#allocation3 + $0x32] sm:$0xff]
        %v3240 = vld [vmem:[#allocation3 + $0x3a] sm:$0xff]
        %v3241 = vld [vmem:[#allocation3 + $0x4a] sm:$0xff]
        %v3242 = vld [vmem:[#allocation3 + $0x52] sm:$0xff]
        %v3243 = vld [vmem:[#allocation3 + $0x62] sm:$0xff]
        %v3244 = vld [vmem:[#allocation3 + $0x6a] sm:$0xff]
        %v3245 = vld [vmem:[#allocation3 + $0x7a] sm:$0xff]
        %v3246 = vld [vmem:[#allocation3 + $0x82] sm:$0xff]
        %v3247 = vld [vmem:[#allocation3 + $0x92] sm:$0xff]
        %v3248 = vld [vmem:[#allocation3 + $0x9a] sm:$0xff]
        %v3249 = vld [vmem:[#allocation3 + $0xaa] sm:$0xff]
        %v3250 = vld [vmem:[#allocation3 + $0xb2] sm:$0xff]
        %v3251 = vld [vmem:[#allocation3 + $0xc2] sm:$0xff]
        %v3252 = vld [vmem:[#allocation3 + $0xca] sm:$0xff]
        %v3253 = vld [vmem:[#allocation3 + $0xda] sm:$0xff]
        %v3254 = vld [vmem:[#allocation3 + $0xe2] sm:$0xff]
        %v3255 = vld [vmem:[#allocation3 + $0xf2] sm:$0xff]
        %v3256 = vld [vmem:[#allocation3 + $0xfa] sm:$0xff]
        %v3257 = vld [vmem:[#allocation3 + $0x10a] sm:$0xff]
        %v3258 = vld [vmem:[#allocation3 + $0x112] sm:$0xff]
        %v3259 = vld [vmem:[#allocation3 + $0x122] sm:$0xff]
        %v3260 = vld [vmem:[#allocation3 + $0x12a] sm:$0xff]
        %v3261 = vld [vmem:[#allocation3 + $0x13a] sm:$0xff]
        %v3262 = vld [vmem:[#allocation3 + $0x142] sm:$0xff]
        %v3263 = vld [vmem:[#allocation3 + $0x152] sm:$0xff]
        %v3264 = vld [vmem:[#allocation3 + $0x15a] sm:$0xff]
        %v3265 = vld [vmem:[#allocation3 + $0x16a] sm:$0xff]
        %v3266 = vld [vmem:[#allocation3 + $0x172] sm:$0xff]
        %3299 = vrot.lane.b32.xlu0 %v3203, 64
        %v3300 = vpop.permute.xlu0 %3299
        %3301 = vrot.lane.b32.xlu0 %v3204, 64
        %v3302 = vpop.permute.xlu0 %3301
        %3303 = vrot.lane.b32.xlu0 %v3205, 64
        %v3304 = vpop.permute.xlu0 %3303
        %3305 = vrot.lane.b32.xlu0 %v3206, 64
        %v3306 = vpop.permute.xlu0 %3305
        %3307 = vrot.lane.b32.xlu0 %v3207, 64
        %v3308 = vpop.permute.xlu0 %3307
        %3309 = vrot.lane.b32.xlu0 %v3208, 64
        %v3310 = vpop.permute.xlu0 %3309
        %3311 = vrot.lane.b32.xlu0 %v3209, 64
        %v3312 = vpop.permute.xlu0 %3311
        %3313 = vrot.lane.b32.xlu0 %v3210, 64
        %v3314 = vpop.permute.xlu0 %3313
        %3315 = vrot.lane.b32.xlu0 %v3211, 64
        %v3316 = vpop.permute.xlu0 %3315
        %3317 = vrot.lane.b32.xlu0 %v3212, 64
        %v3318 = vpop.permute.xlu0 %3317
        %3319 = vrot.lane.b32.xlu0 %v3213, 64
        %v3320 = vpop.permute.xlu0 %3319
        %3321 = vrot.lane.b32.xlu0 %v3214, 64
        %v3322 = vpop.permute.xlu0 %3321
        %3323 = vrot.lane.b32.xlu0 %v3215, 64
        %v3324 = vpop.permute.xlu0 %3323
        %3325 = vrot.lane.b32.xlu0 %v3216, 64
        %v3326 = vpop.permute.xlu0 %3325
        %3327 = vrot.lane.b32.xlu0 %v3217, 64
        %v3328 = vpop.permute.xlu0 %3327
        %3329 = vrot.lane.b32.xlu0 %v3218, 64
        %v3330 = vpop.permute.xlu0 %3329
        %3331 = vrot.lane.b32.xlu0 %v3219, 64
        %v3332 = vpop.permute.xlu0 %3331
        %3333 = vrot.lane.b32.xlu0 %v3220, 64
        %v3334 = vpop.permute.xlu0 %3333
        %3335 = vrot.lane.b32.xlu0 %v3221, 64
        %v3336 = vpop.permute.xlu0 %3335
        %3337 = vrot.lane.b32.xlu0 %v3222, 64
        %v3338 = vpop.permute.xlu0 %3337
        %3339 = vrot.lane.b32.xlu0 %v3223, 64
        %v3340 = vpop.permute.xlu0 %3339
        %3341 = vrot.lane.b32.xlu0 %v3224, 64
        %v3342 = vpop.permute.xlu0 %3341
        %3343 = vrot.lane.b32.xlu0 %v3225, 64
        %v3344 = vpop.permute.xlu0 %3343
        %3345 = vrot.lane.b32.xlu0 %v3226, 64
        %v3346 = vpop.permute.xlu0 %3345
        %3347 = vrot.lane.b32.xlu0 %v3227, 64
        %v3348 = vpop.permute.xlu0 %3347
        %3349 = vrot.lane.b32.xlu0 %v3228, 64
        %v3350 = vpop.permute.xlu0 %3349
        %3351 = vrot.lane.b32.xlu0 %v3229, 64
        %v3352 = vpop.permute.xlu0 %3351
        %3353 = vrot.lane.b32.xlu0 %v3230, 64
        %v3354 = vpop.permute.xlu0 %3353
        %3355 = vrot.lane.b32.xlu0 %v3231, 64
        %v3356 = vpop.permute.xlu0 %3355
        %3357 = vrot.lane.b32.xlu0 %v3232, 64
        %v3358 = vpop.permute.xlu0 %3357
        %3359 = vrot.lane.b32.xlu0 %v3233, 64
        %v3360 = vpop.permute.xlu0 %3359
        %3361 = vrot.lane.b32.xlu0 %v3234, 64
        %v3362 = vpop.permute.xlu0 %3361
        %v3395 = vsel %vm517, %v3171, %v3300
        %v3396 = vsel %vm517, %v3172, %v3302
        %v3397 = vsel %vm517, %v3173, %v3304
        %v3398 = vsel %vm517, %v3174, %v3306
        %v3399 = vsel %vm517, %v3175, %v3308
        %v3400 = vsel %vm517, %v3176, %v3310
        %v3401 = vsel %vm517, %v3177, %v3312
        %v3402 = vsel %vm517, %v3178, %v3314
        %v3403 = vsel %vm517, %v3179, %v3316
        %v3404 = vsel %vm517, %v3180, %v3318
        %v3405 = vsel %vm517, %v3181, %v3320
        %v3406 = vsel %vm517, %v3182, %v3322
        %v3407 = vsel %vm517, %v3183, %v3324
        %v3408 = vsel %vm517, %v3184, %v3326
        %v3409 = vsel %vm517, %v3185, %v3328
        %v3410 = vsel %vm517, %v3186, %v3330
        %v3411 = vsel %vm517, %v3187, %v3332
        %v3412 = vsel %vm517, %v3188, %v3334
        %v3413 = vsel %vm517, %v3189, %v3336
        %v3414 = vsel %vm517, %v3190, %v3338
        %v3415 = vsel %vm517, %v3191, %v3340
        %v3416 = vsel %vm517, %v3192, %v3342
        %v3417 = vsel %vm517, %v3193, %v3344
        %v3418 = vsel %vm517, %v3194, %v3346
        %v3419 = vsel %vm517, %v3195, %v3348
        %v3420 = vsel %vm517, %v3196, %v3350
        %v3421 = vsel %vm517, %v3197, %v3352
        %v3422 = vsel %vm517, %v3198, %v3354
        %v3423 = vsel %vm517, %v3199, %v3356
        %v3424 = vsel %vm517, %v3200, %v3358
        %v3425 = vsel %vm517, %v3201, %v3360
        %v3426 = vsel %vm517, %v3202, %v3362
        %v3427 = vpack.c.bf16 %v3396, %v3395
        %v3428 = vpack.c.bf16 %v3236, %v3235
        %v3429 = vpack.c.bf16 %v3398, %v3397
        %v3430 = vpack.c.bf16 %v3238, %v3237
        %v3431 = vpack.c.bf16 %v3400, %v3399
        %v3432 = vpack.c.bf16 %v3240, %v3239
        %v3433 = vpack.c.bf16 %v3402, %v3401
        %v3434 = vpack.c.bf16 %v3242, %v3241
        %v3435 = vpack.c.bf16 %v3404, %v3403
        %v3436 = vpack.c.bf16 %v3244, %v3243
        %v3437 = vpack.c.bf16 %v3406, %v3405
        %v3438 = vpack.c.bf16 %v3246, %v3245
        %v3439 = vpack.c.bf16 %v3408, %v3407
        %v3440 = vpack.c.bf16 %v3248, %v3247
        %v3441 = vpack.c.bf16 %v3410, %v3409
        %v3442 = vpack.c.bf16 %v3250, %v3249
        %v3443 = vpack.c.bf16 %v3412, %v3411
        %v3444 = vpack.c.bf16 %v3252, %v3251
        %v3445 = vpack.c.bf16 %v3414, %v3413
        %v3446 = vpack.c.bf16 %v3254, %v3253
        %v3447 = vpack.c.bf16 %v3416, %v3415
        %v3448 = vpack.c.bf16 %v3256, %v3255
        %v3449 = vpack.c.bf16 %v3418, %v3417
        %v3450 = vpack.c.bf16 %v3258, %v3257
        %v3451 = vpack.c.bf16 %v3420, %v3419
        %v3452 = vpack.c.bf16 %v3260, %v3259
        %v3453 = vpack.c.bf16 %v3422, %v3421
        %v3454 = vpack.c.bf16 %v3262, %v3261
        %v3455 = vpack.c.bf16 %v3424, %v3423
        %v3456 = vpack.c.bf16 %v3264, %v3263
        %v3457 = vpack.c.bf16 %v3426, %v3425
        %v3458 = vpack.c.bf16 %v3266, %v3265
        %v3459 = vld [vmem:[%s5] sm:$0xf]
        %v3460 = vld [vmem:[%s5 + $0x4] sm:$0xf]
        %v3461 = vld [vmem:[%s5 + $0x8] sm:$0xf]
        %v3462 = vld [vmem:[%s5 + $0xc] sm:$0xf]
        %v3463 = vld [vmem:[%s5 + $0x10] sm:$0xf]
        %v3464 = vld [vmem:[%s5 + $0x14] sm:$0xf]
        %v3465 = vld [vmem:[%s5 + $0x18] sm:$0xf]
        %v3466 = vld [vmem:[%s5 + $0x1c] sm:$0xf]
        %v3467 = vld [vmem:[%s5 + $0x20] sm:$0xf]
        %v3468 = vld [vmem:[%s5 + $0x24] sm:$0xf]
        %v3469 = vld [vmem:[%s5 + $0x28] sm:$0xf]
        %v3470 = vld [vmem:[%s5 + $0x2c] sm:$0xf]
        %v3471 = vld [vmem:[%s5 + $0x30] sm:$0xf]
        %v3472 = vld [vmem:[%s5 + $0x34] sm:$0xf]
        %v3473 = vld [vmem:[%s5 + $0x38] sm:$0xf]
        %v3474 = vld [vmem:[%s5 + $0x3c] sm:$0xf]
        %v3475 = vld [vmem:[%s5 + $0x40] sm:$0xf]
        %v3476 = vld [vmem:[%s5 + $0x44] sm:$0xf]
        %v3477 = vld [vmem:[%s5 + $0x48] sm:$0xf]
        %v3478 = vld [vmem:[%s5 + $0x4c] sm:$0xf]
        %v3479 = vld [vmem:[%s5 + $0x50] sm:$0xf]
        %v3480 = vld [vmem:[%s5 + $0x54] sm:$0xf]
        %v3481 = vld [vmem:[%s5 + $0x58] sm:$0xf]
        %v3482 = vld [vmem:[%s5 + $0x5c] sm:$0xf]
        %s3483 = scalar_lea.vmem [#allocation3], 24
        %v3484 = vld [vmem:[%s3483] sm:$0xff]
        %v3485 = vld [vmem:[%s3483 + $0x8] sm:$0xff]
        %v3486 = vld [vmem:[%s3483 + $0x18] sm:$0xff]
        %v3487 = vld [vmem:[%s3483 + $0x20] sm:$0xff]
        %v3488 = vld [vmem:[%s3483 + $0x30] sm:$0xff]
        %v3489 = vld [vmem:[%s3483 + $0x38] sm:$0xff]
        %v3490 = vld [vmem:[%s3483 + $0x48] sm:$0xff]
        %v3491 = vld [vmem:[%s3483 + $0x50] sm:$0xff]
        %v3492 = vld [vmem:[%s3483 + $0x60] sm:$0xff]
        %v3493 = vld [vmem:[%s3483 + $0x68] sm:$0xff]
        %v3494 = vld [vmem:[%s3483 + $0x78] sm:$0xff]
        %v3495 = vld [vmem:[%s3483 + $0x80] sm:$0xff]
        %v3496 = vld [vmem:[%s3483 + $0x90] sm:$0xff]
        %v3497 = vld [vmem:[%s3483 + $0x98] sm:$0xff]
        %v3498 = vld [vmem:[%s3483 + $0xa8] sm:$0xff]
        %v3499 = vld [vmem:[%s3483 + $0xb0] sm:$0xff]
        %v3500 = vld [vmem:[%s3483 + $0xc0] sm:$0xff]
        %v3501 = vld [vmem:[%s3483 + $0xc8] sm:$0xff]
        %v3502 = vld [vmem:[%s3483 + $0xd8] sm:$0xff]
        %v3503 = vld [vmem:[%s3483 + $0xe0] sm:$0xff]
        %v3504 = vld [vmem:[%s3483 + $0xf0] sm:$0xff]
        %v3505 = vld [vmem:[%s3483 + $0xf8] sm:$0xff]
        %v3506 = vld [vmem:[%s3483 + $0x108] sm:$0xff]
        %v3507 = vld [vmem:[%s3483 + $0x110] sm:$0xff]
        %v3508 = vld [vmem:[%s3483 + $0x120] sm:$0xff]
        %v3509 = vld [vmem:[%s3483 + $0x128] sm:$0xff]
        %v3510 = vld [vmem:[%s3483 + $0x138] sm:$0xff]
        %v3511 = vld [vmem:[%s3483 + $0x140] sm:$0xff]
        %v3512 = vld [vmem:[%s3483 + $0x150] sm:$0xff]
        %v3513 = vld [vmem:[%s3483 + $0x158] sm:$0xff]
        %v3514 = vld [vmem:[%s3483 + $0x168] sm:$0xff]
        %v3515 = vld [vmem:[%s3483 + $0x170] sm:$0xff]
        %v3516 = vld [vmem:[%s3483 + $0x1] sm:$0xff]
        %v3517 = vld [vmem:[%s3483 + $0x9] sm:$0xff]
        %v3518 = vld [vmem:[%s3483 + $0x19] sm:$0xff]
        %v3519 = vld [vmem:[%s3483 + $0x21] sm:$0xff]
        %v3520 = vld [vmem:[%s3483 + $0x31] sm:$0xff]
        %v3521 = vld [vmem:[%s3483 + $0x39] sm:$0xff]
        %v3522 = vld [vmem:[%s3483 + $0x49] sm:$0xff]
        %v3523 = vld [vmem:[%s3483 + $0x51] sm:$0xff]
        %v3524 = vld [vmem:[%s3483 + $0x61] sm:$0xff]
        %v3525 = vld [vmem:[%s3483 + $0x69] sm:$0xff]
        %v3526 = vld [vmem:[%s3483 + $0x79] sm:$0xff]
        %v3527 = vld [vmem:[%s3483 + $0x81] sm:$0xff]
        %v3528 = vld [vmem:[%s3483 + $0x91] sm:$0xff]
        %v3529 = vld [vmem:[%s3483 + $0x99] sm:$0xff]
        %v3530 = vld [vmem:[%s3483 + $0xa9] sm:$0xff]
        %v3531 = vld [vmem:[%s3483 + $0xb1] sm:$0xff]
        %v3532 = vld [vmem:[%s3483 + $0xc1] sm:$0xff]
        %v3533 = vld [vmem:[%s3483 + $0xc9] sm:$0xff]
        %v3534 = vld [vmem:[%s3483 + $0xd9] sm:$0xff]
        %v3535 = vld [vmem:[%s3483 + $0xe1] sm:$0xff]
        %v3536 = vld [vmem:[%s3483 + $0xf1] sm:$0xff]
        %v3537 = vld [vmem:[%s3483 + $0xf9] sm:$0xff]
        %v3538 = vld [vmem:[%s3483 + $0x109] sm:$0xff]
        %v3539 = vld [vmem:[%s3483 + $0x111] sm:$0xff]
        %v3540 = vld [vmem:[%s3483 + $0x121] sm:$0xff]
        %v3541 = vld [vmem:[%s3483 + $0x129] sm:$0xff]
        %v3542 = vld [vmem:[%s3483 + $0x139] sm:$0xff]
        %v3543 = vld [vmem:[%s3483 + $0x141] sm:$0xff]
        %v3544 = vld [vmem:[%s3483 + $0x151] sm:$0xff]
        %v3545 = vld [vmem:[%s3483 + $0x159] sm:$0xff]
        %v3546 = vld [vmem:[%s3483 + $0x169] sm:$0xff]
        %v3547 = vld [vmem:[%s3483 + $0x171] sm:$0xff]
        %v3548 = vld [vmem:[%s3483 + $0x2] sm:$0xff]
        %v3549 = vld [vmem:[%s3483 + $0xa] sm:$0xff]
        %v3550 = vld [vmem:[%s3483 + $0x1a] sm:$0xff]
        %v3551 = vld [vmem:[%s3483 + $0x22] sm:$0xff]
        %v3552 = vld [vmem:[%s3483 + $0x32] sm:$0xff]
        %v3553 = vld [vmem:[%s3483 + $0x3a] sm:$0xff]
        %v3554 = vld [vmem:[%s3483 + $0x4a] sm:$0xff]
        %v3555 = vld [vmem:[%s3483 + $0x52] sm:$0xff]
        %v3556 = vld [vmem:[%s3483 + $0x62] sm:$0xff]
        %v3557 = vld [vmem:[%s3483 + $0x6a] sm:$0xff]
        %v3558 = vld [vmem:[%s3483 + $0x7a] sm:$0xff]
        %v3559 = vld [vmem:[%s3483 + $0x82] sm:$0xff]
        %v3560 = vld [vmem:[%s3483 + $0x92] sm:$0xff]
        %v3561 = vld [vmem:[%s3483 + $0x9a] sm:$0xff]
        %v3562 = vld [vmem:[%s3483 + $0xaa] sm:$0xff]
        %v3563 = vld [vmem:[%s3483 + $0xb2] sm:$0xff]
        %v3564 = vld [vmem:[%s3483 + $0xc2] sm:$0xff]
        %v3565 = vld [vmem:[%s3483 + $0xca] sm:$0xff]
        %v3566 = vld [vmem:[%s3483 + $0xda] sm:$0xff]
        %v3567 = vld [vmem:[%s3483 + $0xe2] sm:$0xff]
        %v3568 = vld [vmem:[%s3483 + $0xf2] sm:$0xff]
        %v3569 = vld [vmem:[%s3483 + $0xfa] sm:$0xff]
        %v3570 = vld [vmem:[%s3483 + $0x10a] sm:$0xff]
        %v3571 = vld [vmem:[%s3483 + $0x112] sm:$0xff]
        %v3572 = vld [vmem:[%s3483 + $0x122] sm:$0xff]
        %v3573 = vld [vmem:[%s3483 + $0x12a] sm:$0xff]
        %v3574 = vld [vmem:[%s3483 + $0x13a] sm:$0xff]
        %v3575 = vld [vmem:[%s3483 + $0x142] sm:$0xff]
        %v3576 = vld [vmem:[%s3483 + $0x152] sm:$0xff]
        %v3577 = vld [vmem:[%s3483 + $0x15a] sm:$0xff]
        %v3578 = vld [vmem:[%s3483 + $0x16a] sm:$0xff]
        %v3579 = vld [vmem:[%s3483 + $0x172] sm:$0xff]
        %3612 = vrot.lane.b32.xlu0 %v3516, 64
        %v3613 = vpop.permute.xlu0 %3612
        %3614 = vrot.lane.b32.xlu0 %v3517, 64
        %v3615 = vpop.permute.xlu0 %3614
        %3616 = vrot.lane.b32.xlu0 %v3518, 64
        %v3617 = vpop.permute.xlu0 %3616
        %3618 = vrot.lane.b32.xlu0 %v3519, 64
        %v3619 = vpop.permute.xlu0 %3618
        %3620 = vrot.lane.b32.xlu0 %v3520, 64
        %v3621 = vpop.permute.xlu0 %3620
        %3622 = vrot.lane.b32.xlu0 %v3521, 64
        %v3623 = vpop.permute.xlu0 %3622
        %3624 = vrot.lane.b32.xlu0 %v3522, 64
        %v3625 = vpop.permute.xlu0 %3624
        %3626 = vrot.lane.b32.xlu0 %v3523, 64
        %v3627 = vpop.permute.xlu0 %3626
        %3628 = vrot.lane.b32.xlu0 %v3524, 64
        %v3629 = vpop.permute.xlu0 %3628
        %3630 = vrot.lane.b32.xlu0 %v3525, 64
        %v3631 = vpop.permute.xlu0 %3630
        %3632 = vrot.lane.b32.xlu0 %v3526, 64
        %v3633 = vpop.permute.xlu0 %3632
        %3634 = vrot.lane.b32.xlu0 %v3527, 64
        %v3635 = vpop.permute.xlu0 %3634
        %3636 = vrot.lane.b32.xlu0 %v3528, 64
        %v3637 = vpop.permute.xlu0 %3636
        %3638 = vrot.lane.b32.xlu0 %v3529, 64
        %v3639 = vpop.permute.xlu0 %3638
        %3640 = vrot.lane.b32.xlu0 %v3530, 64
        %v3641 = vpop.permute.xlu0 %3640
        %3642 = vrot.lane.b32.xlu0 %v3531, 64
        %v3643 = vpop.permute.xlu0 %3642
        %3644 = vrot.lane.b32.xlu0 %v3532, 64
        %v3645 = vpop.permute.xlu0 %3644
        %3646 = vrot.lane.b32.xlu0 %v3533, 64
        %v3647 = vpop.permute.xlu0 %3646
        %3648 = vrot.lane.b32.xlu0 %v3534, 64
        %v3649 = vpop.permute.xlu0 %3648
        %3650 = vrot.lane.b32.xlu0 %v3535, 64
        %v3651 = vpop.permute.xlu0 %3650
        %3652 = vrot.lane.b32.xlu0 %v3536, 64
        %v3653 = vpop.permute.xlu0 %3652
        %3654 = vrot.lane.b32.xlu0 %v3537, 64
        %v3655 = vpop.permute.xlu0 %3654
        %3656 = vrot.lane.b32.xlu0 %v3538, 64
        %v3657 = vpop.permute.xlu0 %3656
        %3658 = vrot.lane.b32.xlu0 %v3539, 64
        %v3659 = vpop.permute.xlu0 %3658
        %3660 = vrot.lane.b32.xlu0 %v3540, 64
        %v3661 = vpop.permute.xlu0 %3660
        %3662 = vrot.lane.b32.xlu0 %v3541, 64
        %v3663 = vpop.permute.xlu0 %3662
        %3664 = vrot.lane.b32.xlu0 %v3542, 64
        %v3665 = vpop.permute.xlu0 %3664
        %3666 = vrot.lane.b32.xlu0 %v3543, 64
        %v3667 = vpop.permute.xlu0 %3666
        %3668 = vrot.lane.b32.xlu0 %v3544, 64
        %v3669 = vpop.permute.xlu0 %3668
        %3670 = vrot.lane.b32.xlu0 %v3545, 64
        %v3671 = vpop.permute.xlu0 %3670
        %3672 = vrot.lane.b32.xlu0 %v3546, 64
        %v3673 = vpop.permute.xlu0 %3672
        %3674 = vrot.lane.b32.xlu0 %v3547, 64
        %v3675 = vpop.permute.xlu0 %3674
        %v3708 = vsel %vm517, %v3484, %v3613
        %v3709 = vsel %vm517, %v3485, %v3615
        %v3710 = vsel %vm517, %v3486, %v3617
        %v3711 = vsel %vm517, %v3487, %v3619
        %v3712 = vsel %vm517, %v3488, %v3621
        %v3713 = vsel %vm517, %v3489, %v3623
        %v3714 = vsel %vm517, %v3490, %v3625
        %v3715 = vsel %vm517, %v3491, %v3627
        %v3716 = vsel %vm517, %v3492, %v3629
        %v3717 = vsel %vm517, %v3493, %v3631
        %v3718 = vsel %vm517, %v3494, %v3633
        %v3719 = vsel %vm517, %v3495, %v3635
        %v3720 = vsel %vm517, %v3496, %v3637
        %v3721 = vsel %vm517, %v3497, %v3639
        %v3722 = vsel %vm517, %v3498, %v3641
        %v3723 = vsel %vm517, %v3499, %v3643
        %v3724 = vsel %vm517, %v3500, %v3645
        %v3725 = vsel %vm517, %v3501, %v3647
        %v3726 = vsel %vm517, %v3502, %v3649
        %v3727 = vsel %vm517, %v3503, %v3651
        %v3728 = vsel %vm517, %v3504, %v3653
        %v3729 = vsel %vm517, %v3505, %v3655
        %v3730 = vsel %vm517, %v3506, %v3657
        %v3731 = vsel %vm517, %v3507, %v3659
        %v3732 = vsel %vm517, %v3508, %v3661
        %v3733 = vsel %vm517, %v3509, %v3663
        %v3734 = vsel %vm517, %v3510, %v3665
        %v3735 = vsel %vm517, %v3511, %v3667
        %v3736 = vsel %vm517, %v3512, %v3669
        %v3737 = vsel %vm517, %v3513, %v3671
        %v3738 = vsel %vm517, %v3514, %v3673
        %v3739 = vsel %vm517, %v3515, %v3675
        %v3740 = vpack.c.bf16 %v3709, %v3708
        %v3741 = vpack.c.bf16 %v3549, %v3548
        %v3742 = vpack.c.bf16 %v3711, %v3710
        %v3743 = vpack.c.bf16 %v3551, %v3550
        %v3744 = vpack.c.bf16 %v3713, %v3712
        %v3745 = vpack.c.bf16 %v3553, %v3552
        %v3746 = vpack.c.bf16 %v3715, %v3714
        %v3747 = vpack.c.bf16 %v3555, %v3554
        %v3748 = vpack.c.bf16 %v3717, %v3716
        %v3749 = vpack.c.bf16 %v3557, %v3556
        %v3750 = vpack.c.bf16 %v3719, %v3718
        %v3751 = vpack.c.bf16 %v3559, %v3558
        %v3752 = vpack.c.bf16 %v3721, %v3720
        %v3753 = vpack.c.bf16 %v3561, %v3560
        %v3754 = vpack.c.bf16 %v3723, %v3722
        %v3755 = vpack.c.bf16 %v3563, %v3562
        %v3756 = vpack.c.bf16 %v3725, %v3724
        %v3757 = vpack.c.bf16 %v3565, %v3564
        %v3758 = vpack.c.bf16 %v3727, %v3726
        %v3759 = vpack.c.bf16 %v3567, %v3566
        %v3760 = vpack.c.bf16 %v3729, %v3728
        %v3761 = vpack.c.bf16 %v3569, %v3568
        %v3762 = vpack.c.bf16 %v3731, %v3730
        %v3763 = vpack.c.bf16 %v3571, %v3570
        %v3764 = vpack.c.bf16 %v3733, %v3732
        %v3765 = vpack.c.bf16 %v3573, %v3572
        %v3766 = vpack.c.bf16 %v3735, %v3734
        %v3767 = vpack.c.bf16 %v3575, %v3574
        %v3768 = vpack.c.bf16 %v3737, %v3736
        %v3769 = vpack.c.bf16 %v3577, %v3576
        %v3770 = vpack.c.bf16 %v3739, %v3738
        %v3771 = vpack.c.bf16 %v3579, %v3578
        %s3772 = scalar_lea.vmem %s5, 96
        %v3773 = vld [vmem:[%s3772] sm:$0xf]
        %v3774 = vld [vmem:[%s3772 + $0x4] sm:$0xf]
        %v3775 = vld [vmem:[%s3772 + $0x8] sm:$0xf]
        %v3776 = vld [vmem:[%s3772 + $0xc] sm:$0xf]
        %v3777 = vld [vmem:[%s3772 + $0x10] sm:$0xf]
        %v3778 = vld [vmem:[%s3772 + $0x14] sm:$0xf]
        %v3779 = vld [vmem:[%s3772 + $0x18] sm:$0xf]
        %v3780 = vld [vmem:[%s3772 + $0x1c] sm:$0xf]
        %v3781 = vld [vmem:[%s3772 + $0x20] sm:$0xf]
        %v3782 = vld [vmem:[%s3772 + $0x24] sm:$0xf]
        %v3783 = vld [vmem:[%s3772 + $0x28] sm:$0xf]
        %v3784 = vld [vmem:[%s3772 + $0x2c] sm:$0xf]
        %v3785 = vld [vmem:[%s3772 + $0x30] sm:$0xf]
        %v3786 = vld [vmem:[%s3772 + $0x34] sm:$0xf]
        %v3787 = vld [vmem:[%s3772 + $0x38] sm:$0xf]
        %v3788 = vld [vmem:[%s3772 + $0x3c] sm:$0xf]
        %v3789 = vld [vmem:[%s3772 + $0x40] sm:$0xf]
        %v3790 = vld [vmem:[%s3772 + $0x44] sm:$0xf]
        %v3791 = vld [vmem:[%s3772 + $0x48] sm:$0xf]
        %v3792 = vld [vmem:[%s3772 + $0x4c] sm:$0xf]
        %v3793 = vld [vmem:[%s3772 + $0x50] sm:$0xf]
        %v3794 = vld [vmem:[%s3772 + $0x54] sm:$0xf]
        %v3795 = vld [vmem:[%s3772 + $0x58] sm:$0xf]
        %v3796 = vld [vmem:[%s3772 + $0x5c] sm:$0xf]
        %v3821 = vunpack.c.l.b16 %v3773
        %v3822 = vunpack.c.l.b16 %v3774
        %v3823 = vunpack.c.l.b16 %v3775
        %v3824 = vunpack.c.l.b16 %v3776
        %v3825 = vunpack.c.l.b16 %v3777
        %v3826 = vunpack.c.l.b16 %v3778
        %v3827 = vunpack.c.l.b16 %v3779
        %v3828 = vunpack.c.l.b16 %v3780
        %v3829 = vunpack.c.l.b16 %v3781
        %v3830 = vunpack.c.l.b16 %v3782
        %v3831 = vunpack.c.l.b16 %v3783
        %v3832 = vunpack.c.l.b16 %v3784
        %v3833 = vunpack.c.l.b16 %v3785
        %v3834 = vunpack.c.l.b16 %v3786
        %v3835 = vunpack.c.l.b16 %v3787
        %v3836 = vunpack.c.l.b16 %v3788
        %v3837 = vunpack.c.l.b16 %v3789
        %v3838 = vunpack.c.l.b16 %v3790
        %v3839 = vunpack.c.l.b16 %v3791
        %v3840 = vunpack.c.l.b16 %v3792
        %v3841 = vunpack.c.l.b16 %v3793
        %v3842 = vunpack.c.l.b16 %v3794
        %v3843 = vunpack.c.l.b16 %v3795
        %v3844 = vunpack.c.l.b16 %v3796
        %v3845 = vpack.c.b16 %v3822, %v3821
        %v3846 = vpack.c.b16 %v3824, %v3823
        %v3847 = vpack.c.b16 %v3826, %v3825
        %v3848 = vpack.c.b16 %v3828, %v3827
        %v3849 = vpack.c.b16 %v3830, %v3829
        %v3850 = vpack.c.b16 %v3832, %v3831
        %v3851 = vpack.c.b16 %v3834, %v3833
        %v3852 = vpack.c.b16 %v3836, %v3835
        %v3853 = vpack.c.b16 %v3838, %v3837
        %v3854 = vpack.c.b16 %v3840, %v3839
        %v3855 = vpack.c.b16 %v3842, %v3841
        %v3856 = vpack.c.b16 %v3844, %v3843
        %v3870 = vsel %vm517, %v3741, 0
        %v3873 = vsel %vm517, %v3743, 0
        %v3876 = vsel %vm517, %v3745, 0
        %v3879 = vsel %vm517, %v3747, 0
        %v3882 = vsel %vm517, %v3749, 0
        %v3885 = vsel %vm517, %v3751, 0
        %v3888 = vsel %vm517, %v3753, 0
        %v3891 = vsel %vm517, %v3755, 0
        %v3894 = vsel %vm517, %v3757, 0
        %v3897 = vsel %vm517, %v3759, 0
        %v3900 = vsel %vm517, %v3761, 0
        %v3903 = vsel %vm517, %v3763, 0
        %v3906 = vsel %vm517, %v3765, 0
        %v3909 = vsel %vm517, %v3767, 0
        %v3912 = vsel %vm517, %v3769, 0
        %v3915 = vsel %vm517, %v3771, 0
        %3917 = vmatprep.subr.bf16.mxu0 0
        %3918 = vmatpush1.bf16.msra.mxu0 %v3852
        %3919 = vmatprep.subr.bf16.mxu0 0
        %3920 = vmatpush1.bf16.msra.mxu0 %v3851
        %3921 = vmatprep.subr.bf16.mxu0 0
        %3922 = vmatpush1.bf16.msra.mxu0 %v3850
        %3923 = vmatprep.subr.bf16.mxu0 0
        %3924 = vmatpush1.bf16.msra.mxu0 %v3849
        %3925 = vmatprep.subr.bf16.mxu0 0
        %3926 = vmatpush1.bf16.msra.mxu0 %v3848
        %3927 = vmatprep.subr.bf16.mxu0 0
        %3928 = vmatpush1.bf16.msra.mxu0 %v3847
        %3929 = vmatprep.subr.bf16.mxu0 0
        %3930 = vmatpush1.bf16.msra.mxu0 %v3846
        %3931 = vmatprep.subr.bf16.mxu0 0
        %3932 = vmatpush1.bf16.msra.mxu0 %v3845
        %3933 = vmatprep.subr.bf16.mxu0 0
        %3934 = vmatpush2.bf16.msra.mxu0 0
        %3935 = vmatprep.subr.bf16.mxu0 0
        %3936 = vmatpush2.bf16.msra.mxu0 0
        %3937 = vmatprep.subr.bf16.mxu0 0
        %3938 = vmatpush2.bf16.msra.mxu0 0
        %3939 = vmatprep.subr.bf16.mxu0 0
        %3940 = vmatpush2.bf16.msra.mxu0 0
        %3941 = vmatprep.subr.bf16.mxu0 0
        %3942 = vmatpush2.bf16.msra.mxu0 %v3856
        %3943 = vmatprep.subr.bf16.mxu0 0
        %3944 = vmatpush2.bf16.msra.mxu0 %v3855
        %3945 = vmatprep.subr.bf16.mxu0 0
        %3946 = vmatpush2.bf16.msra.mxu0 %v3854
        %3947 = vmatprep.subr.bf16.mxu0 0
        %3948 = vmatpush2.bf16.msra.mxu0 %v3853
        %3949 = vmatprep.mubr.bf16.mxu0 %v3870
        %3950 = vmatmul.mubr.bf16.gmra.mxu0 %v3740
        %v3951 = vpop.f32.mrf.mxu0
        %v3952 = vadd.f32 0.0, %v3951
        %v3953 = vpop.f32.mrf.mxu0
        %v3954 = vpop.f32.mrf.mxu0
        %v3955 = vadd.f32 0.0, %v3954
        %v3956 = vpop.f32.mrf.mxu0
        %3957 = vmatprep.mubr.bf16.mxu0 %v3873
        %3958 = vmatmul.mubr.bf16.gmra.mxu0 %v3742
        %v3959 = vpop.f32.mrf.mxu0
        %v3960 = vadd.f32 0.0, %v3959
        %v3961 = vpop.f32.mrf.mxu0
        %v3962 = vpop.f32.mrf.mxu0
        %v3963 = vadd.f32 0.0, %v3962
        %v3964 = vpop.f32.mrf.mxu0
        %3965 = vmatprep.mubr.bf16.mxu0 %v3876
        %3966 = vmatmul.mubr.bf16.gmra.mxu0 %v3744
        %v3967 = vpop.f32.mrf.mxu0
        %v3968 = vadd.f32 0.0, %v3967
        %v3969 = vpop.f32.mrf.mxu0
        %v3970 = vpop.f32.mrf.mxu0
        %v3971 = vadd.f32 0.0, %v3970
        %v3972 = vpop.f32.mrf.mxu0
        %3973 = vmatprep.mubr.bf16.mxu0 %v3879
        %3974 = vmatmul.mubr.bf16.gmra.mxu0 %v3746
        %v3975 = vpop.f32.mrf.mxu0
        %v3976 = vadd.f32 0.0, %v3975
        %v3977 = vpop.f32.mrf.mxu0
        %v3978 = vpop.f32.mrf.mxu0
        %v3979 = vadd.f32 0.0, %v3978
        %v3980 = vpop.f32.mrf.mxu0
        %3981 = vmatprep.mubr.bf16.mxu0 %v3882
        %3982 = vmatmul.mubr.bf16.gmra.mxu0 %v3748
        %v3983 = vpop.f32.mrf.mxu0
        %v3984 = vadd.f32 0.0, %v3983
        %v3985 = vpop.f32.mrf.mxu0
        %v3986 = vpop.f32.mrf.mxu0
        %v3987 = vadd.f32 0.0, %v3986
        %v3988 = vpop.f32.mrf.mxu0
        %3989 = vmatprep.mubr.bf16.mxu0 %v3885
        %3990 = vmatmul.mubr.bf16.gmra.mxu0 %v3750
        %v3991 = vpop.f32.mrf.mxu0
        %v3992 = vadd.f32 0.0, %v3991
        %v3993 = vpop.f32.mrf.mxu0
        %v3994 = vpop.f32.mrf.mxu0
        %v3995 = vadd.f32 0.0, %v3994
        %v3996 = vpop.f32.mrf.mxu0
        %3997 = vmatprep.mubr.bf16.mxu0 %v3888
        %3998 = vmatmul.mubr.bf16.gmra.mxu0 %v3752
        %v3999 = vpop.f32.mrf.mxu0
        %v4000 = vadd.f32 0.0, %v3999
        %v4001 = vpop.f32.mrf.mxu0
        %v4002 = vpop.f32.mrf.mxu0
        %v4003 = vadd.f32 0.0, %v4002
        %v4004 = vpop.f32.mrf.mxu0
        %4005 = vmatprep.mubr.bf16.mxu0 %v3891
        %4006 = vmatmul.mubr.bf16.gmra.mxu0 %v3754
        %v4007 = vpop.f32.mrf.mxu0
        %v4008 = vadd.f32 0.0, %v4007
        %v4009 = vpop.f32.mrf.mxu0
        %v4010 = vpop.f32.mrf.mxu0
        %v4011 = vadd.f32 0.0, %v4010
        %v4012 = vpop.f32.mrf.mxu0
        %4013 = vmatprep.mubr.bf16.mxu0 %v3894
        %4014 = vmatmul.mubr.bf16.gmra.mxu0 %v3756
        %v4015 = vpop.f32.mrf.mxu0
        %v4016 = vadd.f32 0.0, %v4015
        %v4017 = vpop.f32.mrf.mxu0
        %v4018 = vpop.f32.mrf.mxu0
        %v4019 = vadd.f32 0.0, %v4018
        %v4020 = vpop.f32.mrf.mxu0
        %4021 = vmatprep.mubr.bf16.mxu0 %v3897
        %4022 = vmatmul.mubr.bf16.gmra.mxu0 %v3758
        %v4023 = vpop.f32.mrf.mxu0
        %v4024 = vadd.f32 0.0, %v4023
        %v4025 = vpop.f32.mrf.mxu0
        %v4026 = vpop.f32.mrf.mxu0
        %v4027 = vadd.f32 0.0, %v4026
        %v4028 = vpop.f32.mrf.mxu0
        %4029 = vmatprep.mubr.bf16.mxu0 %v3900
        %4030 = vmatmul.mubr.bf16.gmra.mxu0 %v3760
        %v4031 = vpop.f32.mrf.mxu0
        %v4032 = vadd.f32 0.0, %v4031
        %v4033 = vpop.f32.mrf.mxu0
        %v4034 = vpop.f32.mrf.mxu0
        %v4035 = vadd.f32 0.0, %v4034
        %v4036 = vpop.f32.mrf.mxu0
        %4037 = vmatprep.mubr.bf16.mxu0 %v3903
        %4038 = vmatmul.mubr.bf16.gmra.mxu0 %v3762
        %v4039 = vpop.f32.mrf.mxu0
        %v4040 = vadd.f32 0.0, %v4039
        %v4041 = vpop.f32.mrf.mxu0
        %v4042 = vpop.f32.mrf.mxu0
        %v4043 = vadd.f32 0.0, %v4042
        %v4044 = vpop.f32.mrf.mxu0
        %4045 = vmatprep.mubr.bf16.mxu0 %v3906
        %4046 = vmatmul.mubr.bf16.gmra.mxu0 %v3764
        %v4047 = vpop.f32.mrf.mxu0
        %v4048 = vadd.f32 0.0, %v4047
        %v4049 = vpop.f32.mrf.mxu0
        %v4050 = vpop.f32.mrf.mxu0
        %v4051 = vadd.f32 0.0, %v4050
        %v4052 = vpop.f32.mrf.mxu0
        %4053 = vmatprep.mubr.bf16.mxu0 %v3909
        %4054 = vmatmul.mubr.bf16.gmra.mxu0 %v3766
        %v4055 = vpop.f32.mrf.mxu0
        %v4056 = vadd.f32 0.0, %v4055
        %v4057 = vpop.f32.mrf.mxu0
        %v4058 = vpop.f32.mrf.mxu0
        %v4059 = vadd.f32 0.0, %v4058
        %v4060 = vpop.f32.mrf.mxu0
        %4061 = vmatprep.mubr.bf16.mxu0 %v3912
        %4062 = vmatmul.mubr.bf16.gmra.mxu0 %v3768
        %v4063 = vpop.f32.mrf.mxu0
        %v4064 = vadd.f32 0.0, %v4063
        %v4065 = vpop.f32.mrf.mxu0
        %v4066 = vpop.f32.mrf.mxu0
        %v4067 = vadd.f32 0.0, %v4066
        %v4068 = vpop.f32.mrf.mxu0
        %4069 = vmatprep.mubr.bf16.mxu0 %v3915
        %4070 = vmatmul.mubr.bf16.gmra.mxu0 %v3770
        %v4071 = vpop.f32.mrf.mxu0
        %v4072 = vadd.f32 0.0, %v4071
        %v4073 = vpop.f32.mrf.mxu0
        %v4074 = vpop.f32.mrf.mxu0
        %v4075 = vadd.f32 0.0, %v4074
        %v4076 = vpop.f32.mrf.mxu0
        %4077 = vdwg.mxu0
        %v4102 = vunpack.c.l.b16 %v3459
        %v4103 = vunpack.c.l.b16 %v3460
        %v4104 = vunpack.c.l.b16 %v3461
        %v4105 = vunpack.c.l.b16 %v3462
        %v4106 = vunpack.c.l.b16 %v3463
        %v4107 = vunpack.c.l.b16 %v3464
        %v4108 = vunpack.c.l.b16 %v3465
        %v4109 = vunpack.c.l.b16 %v3466
        %v4110 = vunpack.c.l.b16 %v3467
        %v4111 = vunpack.c.l.b16 %v3468
        %v4112 = vunpack.c.l.b16 %v3469
        %v4113 = vunpack.c.l.b16 %v3470
        %v4114 = vunpack.c.l.b16 %v3471
        %v4115 = vunpack.c.l.b16 %v3472
        %v4116 = vunpack.c.l.b16 %v3473
        %v4117 = vunpack.c.l.b16 %v3474
        %v4118 = vunpack.c.l.b16 %v3475
        %v4119 = vunpack.c.l.b16 %v3476
        %v4120 = vunpack.c.l.b16 %v3477
        %v4121 = vunpack.c.l.b16 %v3478
        %v4122 = vunpack.c.l.b16 %v3479
        %v4123 = vunpack.c.l.b16 %v3480
        %v4124 = vunpack.c.l.b16 %v3481
        %v4125 = vunpack.c.l.b16 %v3482
        %v4126 = vpack.c.b16 %v4103, %v4102
        %v4127 = vpack.c.b16 %v4105, %v4104
        %v4128 = vpack.c.b16 %v4107, %v4106
        %v4129 = vpack.c.b16 %v4109, %v4108
        %v4130 = vpack.c.b16 %v4111, %v4110
        %v4131 = vpack.c.b16 %v4113, %v4112
        %v4132 = vpack.c.b16 %v4115, %v4114
        %v4133 = vpack.c.b16 %v4117, %v4116
        %v4134 = vpack.c.b16 %v4119, %v4118
        %v4135 = vpack.c.b16 %v4121, %v4120
        %v4136 = vpack.c.b16 %v4123, %v4122
        %v4137 = vpack.c.b16 %v4125, %v4124
        %v4151 = vsel %vm517, %v3428, 0
        %v4154 = vsel %vm517, %v3430, 0
        %v4157 = vsel %vm517, %v3432, 0
        %v4160 = vsel %vm517, %v3434, 0
        %v4163 = vsel %vm517, %v3436, 0
        %v4166 = vsel %vm517, %v3438, 0
        %v4169 = vsel %vm517, %v3440, 0
        %v4172 = vsel %vm517, %v3442, 0
        %v4175 = vsel %vm517, %v3444, 0
        %v4178 = vsel %vm517, %v3446, 0
        %v4181 = vsel %vm517, %v3448, 0
        %v4184 = vsel %vm517, %v3450, 0
        %v4187 = vsel %vm517, %v3452, 0
        %v4190 = vsel %vm517, %v3454, 0
        %v4193 = vsel %vm517, %v3456, 0
        %v4196 = vsel %vm517, %v3458, 0
        %4198 = vmatprep.subr.bf16.mxu0 0
        %4199 = vmatpush1.bf16.msra.mxu0 %v4133
        %4200 = vmatprep.subr.bf16.mxu0 0
        %4201 = vmatpush1.bf16.msra.mxu0 %v4132
        %4202 = vmatprep.subr.bf16.mxu0 0
        %4203 = vmatpush1.bf16.msra.mxu0 %v4131
        %4204 = vmatprep.subr.bf16.mxu0 0
        %4205 = vmatpush1.bf16.msra.mxu0 %v4130
        %4206 = vmatprep.subr.bf16.mxu0 0
        %4207 = vmatpush1.bf16.msra.mxu0 %v4129
        %4208 = vmatprep.subr.bf16.mxu0 0
        %4209 = vmatpush1.bf16.msra.mxu0 %v4128
        %4210 = vmatprep.subr.bf16.mxu0 0
        %4211 = vmatpush1.bf16.msra.mxu0 %v4127
        %4212 = vmatprep.subr.bf16.mxu0 0
        %4213 = vmatpush1.bf16.msra.mxu0 %v4126
        %4214 = vmatprep.subr.bf16.mxu0 0
        %4215 = vmatpush2.bf16.msra.mxu0 0
        %4216 = vmatprep.subr.bf16.mxu0 0
        %4217 = vmatpush2.bf16.msra.mxu0 0
        %4218 = vmatprep.subr.bf16.mxu0 0
        %4219 = vmatpush2.bf16.msra.mxu0 0
        %4220 = vmatprep.subr.bf16.mxu0 0
        %4221 = vmatpush2.bf16.msra.mxu0 0
        %4222 = vmatprep.subr.bf16.mxu0 0
        %4223 = vmatpush2.bf16.msra.mxu0 %v4137
        %4224 = vmatprep.subr.bf16.mxu0 0
        %4225 = vmatpush2.bf16.msra.mxu0 %v4136
        %4226 = vmatprep.subr.bf16.mxu0 0
        %4227 = vmatpush2.bf16.msra.mxu0 %v4135
        %4228 = vmatprep.subr.bf16.mxu0 0
        %4229 = vmatpush2.bf16.msra.mxu0 %v4134
        %4230 = vmatprep.mubr.bf16.mxu0 %v4151
        %4231 = vmatmul.mubr.bf16.gmra.mxu0 %v3427
        %v4232 = vpop.f32.mrf.mxu0
        %v4233 = vadd.f32 %v3952, %v4232
        %v4234 = vpop.f32.mrf.mxu0
        %v4235 = vpop.f32.mrf.mxu0
        %v4236 = vadd.f32 %v3955, %v4235
        %v4237 = vpop.f32.mrf.mxu0
        %4238 = vmatprep.mubr.bf16.mxu0 %v4154
        %4239 = vmatmul.mubr.bf16.gmra.mxu0 %v3429
        %v4240 = vpop.f32.mrf.mxu0
        %v4241 = vadd.f32 %v3960, %v4240
        %v4242 = vpop.f32.mrf.mxu0
        %v4243 = vpop.f32.mrf.mxu0
        %v4244 = vadd.f32 %v3963, %v4243
        %v4245 = vpop.f32.mrf.mxu0
        %4246 = vmatprep.mubr.bf16.mxu0 %v4157
        %4247 = vmatmul.mubr.bf16.gmra.mxu0 %v3431
        %v4248 = vpop.f32.mrf.mxu0
        %v4249 = vadd.f32 %v3968, %v4248
        %v4250 = vpop.f32.mrf.mxu0
        %v4251 = vpop.f32.mrf.mxu0
        %v4252 = vadd.f32 %v3971, %v4251
        %v4253 = vpop.f32.mrf.mxu0
        %4254 = vmatprep.mubr.bf16.mxu0 %v4160
        %4255 = vmatmul.mubr.bf16.gmra.mxu0 %v3433
        %v4256 = vpop.f32.mrf.mxu0
        %v4257 = vadd.f32 %v3976, %v4256
        %v4258 = vpop.f32.mrf.mxu0
        %v4259 = vpop.f32.mrf.mxu0
        %v4260 = vadd.f32 %v3979, %v4259
        %v4261 = vpop.f32.mrf.mxu0
        %4262 = vmatprep.mubr.bf16.mxu0 %v4163
        %4263 = vmatmul.mubr.bf16.gmra.mxu0 %v3435
        %v4264 = vpop.f32.mrf.mxu0
        %v4265 = vadd.f32 %v3984, %v4264
        %v4266 = vpop.f32.mrf.mxu0
        %v4267 = vpop.f32.mrf.mxu0
        %v4268 = vadd.f32 %v3987, %v4267
        %v4269 = vpop.f32.mrf.mxu0
        %4270 = vmatprep.mubr.bf16.mxu0 %v4166
        %4271 = vmatmul.mubr.bf16.gmra.mxu0 %v3437
        %v4272 = vpop.f32.mrf.mxu0
        %v4273 = vadd.f32 %v3992, %v4272
        %v4274 = vpop.f32.mrf.mxu0
        %v4275 = vpop.f32.mrf.mxu0
        %v4276 = vadd.f32 %v3995, %v4275
        %v4277 = vpop.f32.mrf.mxu0
        %4278 = vmatprep.mubr.bf16.mxu0 %v4169
        %4279 = vmatmul.mubr.bf16.gmra.mxu0 %v3439
        %v4280 = vpop.f32.mrf.mxu0
        %v4281 = vadd.f32 %v4000, %v4280
        %v4282 = vpop.f32.mrf.mxu0
        %v4283 = vpop.f32.mrf.mxu0
        %v4284 = vadd.f32 %v4003, %v4283
        %v4285 = vpop.f32.mrf.mxu0
        %4286 = vmatprep.mubr.bf16.mxu0 %v4172
        %4287 = vmatmul.mubr.bf16.gmra.mxu0 %v3441
        %v4288 = vpop.f32.mrf.mxu0
        %v4289 = vadd.f32 %v4008, %v4288
        %v4290 = vpop.f32.mrf.mxu0
        %v4291 = vpop.f32.mrf.mxu0
        %v4292 = vadd.f32 %v4011, %v4291
        %v4293 = vpop.f32.mrf.mxu0
        %4294 = vmatprep.mubr.bf16.mxu0 %v4175
        %4295 = vmatmul.mubr.bf16.gmra.mxu0 %v3443
        %v4296 = vpop.f32.mrf.mxu0
        %v4297 = vadd.f32 %v4016, %v4296
        %v4298 = vpop.f32.mrf.mxu0
        %v4299 = vpop.f32.mrf.mxu0
        %v4300 = vadd.f32 %v4019, %v4299
        %v4301 = vpop.f32.mrf.mxu0
        %4302 = vmatprep.mubr.bf16.mxu0 %v4178
        %4303 = vmatmul.mubr.bf16.gmra.mxu0 %v3445
        %v4304 = vpop.f32.mrf.mxu0
        %v4305 = vadd.f32 %v4024, %v4304
        %v4306 = vpop.f32.mrf.mxu0
        %v4307 = vpop.f32.mrf.mxu0
        %v4308 = vadd.f32 %v4027, %v4307
        %v4309 = vpop.f32.mrf.mxu0
        %4310 = vmatprep.mubr.bf16.mxu0 %v4181
        %4311 = vmatmul.mubr.bf16.gmra.mxu0 %v3447
        %v4312 = vpop.f32.mrf.mxu0
        %v4313 = vadd.f32 %v4032, %v4312
        %v4314 = vpop.f32.mrf.mxu0
        %v4315 = vpop.f32.mrf.mxu0
        %v4316 = vadd.f32 %v4035, %v4315
        %v4317 = vpop.f32.mrf.mxu0
        %4318 = vmatprep.mubr.bf16.mxu0 %v4184
        %4319 = vmatmul.mubr.bf16.gmra.mxu0 %v3449
        %v4320 = vpop.f32.mrf.mxu0
        %v4321 = vadd.f32 %v4040, %v4320
        %v4322 = vpop.f32.mrf.mxu0
        %v4323 = vpop.f32.mrf.mxu0
        %v4324 = vadd.f32 %v4043, %v4323
        %v4325 = vpop.f32.mrf.mxu0
        %4326 = vmatprep.mubr.bf16.mxu0 %v4187
        %4327 = vmatmul.mubr.bf16.gmra.mxu0 %v3451
        %v4328 = vpop.f32.mrf.mxu0
        %v4329 = vadd.f32 %v4048, %v4328
        %v4330 = vpop.f32.mrf.mxu0
        %v4331 = vpop.f32.mrf.mxu0
        %v4332 = vadd.f32 %v4051, %v4331
        %v4333 = vpop.f32.mrf.mxu0
        %4334 = vmatprep.mubr.bf16.mxu0 %v4190
        %4335 = vmatmul.mubr.bf16.gmra.mxu0 %v3453
        %v4336 = vpop.f32.mrf.mxu0
        %v4337 = vadd.f32 %v4056, %v4336
        %v4338 = vpop.f32.mrf.mxu0
        %v4339 = vpop.f32.mrf.mxu0
        %v4340 = vadd.f32 %v4059, %v4339
        %v4341 = vpop.f32.mrf.mxu0
        %4342 = vmatprep.mubr.bf16.mxu0 %v4193
        %4343 = vmatmul.mubr.bf16.gmra.mxu0 %v3455
        %v4344 = vpop.f32.mrf.mxu0
        %v4345 = vadd.f32 %v4064, %v4344
        %v4346 = vpop.f32.mrf.mxu0
        %v4347 = vpop.f32.mrf.mxu0
        %v4348 = vadd.f32 %v4067, %v4347
        %v4349 = vpop.f32.mrf.mxu0
        %4350 = vmatprep.mubr.bf16.mxu0 %v4196
        %4351 = vmatmul.mubr.bf16.gmra.mxu0 %v3457
        %v4352 = vpop.f32.mrf.mxu0
        %v4353 = vadd.f32 %v4072, %v4352
        %v4354 = vpop.f32.mrf.mxu0
        %v4355 = vpop.f32.mrf.mxu0
        %v4356 = vadd.f32 %v4075, %v4355
        %v4357 = vpop.f32.mrf.mxu0
        %4358 = vdwg.mxu0
        %s4359 = scalar_lea.vmem [#allocation3], 48
        %v4360 = vld [vmem:[%s4359] sm:$0xff]
        %v4361 = vld [vmem:[%s4359 + $0x8] sm:$0xff]
        %v4362 = vld [vmem:[%s4359 + $0x18] sm:$0xff]
        %v4363 = vld [vmem:[%s4359 + $0x20] sm:$0xff]
        %v4364 = vld [vmem:[%s4359 + $0x30] sm:$0xff]
        %v4365 = vld [vmem:[%s4359 + $0x38] sm:$0xff]
        %v4366 = vld [vmem:[%s4359 + $0x48] sm:$0xff]
        %v4367 = vld [vmem:[%s4359 + $0x50] sm:$0xff]
        %v4368 = vld [vmem:[%s4359 + $0x60] sm:$0xff]
        %v4369 = vld [vmem:[%s4359 + $0x68] sm:$0xff]
        %v4370 = vld [vmem:[%s4359 + $0x78] sm:$0xff]
        %v4371 = vld [vmem:[%s4359 + $0x80] sm:$0xff]
        %v4372 = vld [vmem:[%s4359 + $0x90] sm:$0xff]
        %v4373 = vld [vmem:[%s4359 + $0x98] sm:$0xff]
        %v4374 = vld [vmem:[%s4359 + $0xa8] sm:$0xff]
        %v4375 = vld [vmem:[%s4359 + $0xb0] sm:$0xff]
        %v4376 = vld [vmem:[%s4359 + $0xc0] sm:$0xff]
        %v4377 = vld [vmem:[%s4359 + $0xc8] sm:$0xff]
        %v4378 = vld [vmem:[%s4359 + $0xd8] sm:$0xff]
        %v4379 = vld [vmem:[%s4359 + $0xe0] sm:$0xff]
        %v4380 = vld [vmem:[%s4359 + $0xf0] sm:$0xff]
        %v4381 = vld [vmem:[%s4359 + $0xf8] sm:$0xff]
        %v4382 = vld [vmem:[%s4359 + $0x108] sm:$0xff]
        %v4383 = vld [vmem:[%s4359 + $0x110] sm:$0xff]
        %v4384 = vld [vmem:[%s4359 + $0x120] sm:$0xff]
        %v4385 = vld [vmem:[%s4359 + $0x128] sm:$0xff]
        %v4386 = vld [vmem:[%s4359 + $0x138] sm:$0xff]
        %v4387 = vld [vmem:[%s4359 + $0x140] sm:$0xff]
        %v4388 = vld [vmem:[%s4359 + $0x150] sm:$0xff]
        %v4389 = vld [vmem:[%s4359 + $0x158] sm:$0xff]
        %v4390 = vld [vmem:[%s4359 + $0x168] sm:$0xff]
        %v4391 = vld [vmem:[%s4359 + $0x170] sm:$0xff]
        %v4392 = vld [vmem:[%s4359 + $0x1] sm:$0xff]
        %v4393 = vld [vmem:[%s4359 + $0x9] sm:$0xff]
        %v4394 = vld [vmem:[%s4359 + $0x19] sm:$0xff]
        %v4395 = vld [vmem:[%s4359 + $0x21] sm:$0xff]
        %v4396 = vld [vmem:[%s4359 + $0x31] sm:$0xff]
        %v4397 = vld [vmem:[%s4359 + $0x39] sm:$0xff]
        %v4398 = vld [vmem:[%s4359 + $0x49] sm:$0xff]
        %v4399 = vld [vmem:[%s4359 + $0x51] sm:$0xff]
        %v4400 = vld [vmem:[%s4359 + $0x61] sm:$0xff]
        %v4401 = vld [vmem:[%s4359 + $0x69] sm:$0xff]
        %v4402 = vld [vmem:[%s4359 + $0x79] sm:$0xff]
        %v4403 = vld [vmem:[%s4359 + $0x81] sm:$0xff]
        %v4404 = vld [vmem:[%s4359 + $0x91] sm:$0xff]
        %v4405 = vld [vmem:[%s4359 + $0x99] sm:$0xff]
        %v4406 = vld [vmem:[%s4359 + $0xa9] sm:$0xff]
        %v4407 = vld [vmem:[%s4359 + $0xb1] sm:$0xff]
        %v4408 = vld [vmem:[%s4359 + $0xc1] sm:$0xff]
        %v4409 = vld [vmem:[%s4359 + $0xc9] sm:$0xff]
        %v4410 = vld [vmem:[%s4359 + $0xd9] sm:$0xff]
        %v4411 = vld [vmem:[%s4359 + $0xe1] sm:$0xff]
        %v4412 = vld [vmem:[%s4359 + $0xf1] sm:$0xff]
        %v4413 = vld [vmem:[%s4359 + $0xf9] sm:$0xff]
        %v4414 = vld [vmem:[%s4359 + $0x109] sm:$0xff]
        %v4415 = vld [vmem:[%s4359 + $0x111] sm:$0xff]
        %v4416 = vld [vmem:[%s4359 + $0x121] sm:$0xff]
        %v4417 = vld [vmem:[%s4359 + $0x129] sm:$0xff]
        %v4418 = vld [vmem:[%s4359 + $0x139] sm:$0xff]
        %v4419 = vld [vmem:[%s4359 + $0x141] sm:$0xff]
        %v4420 = vld [vmem:[%s4359 + $0x151] sm:$0xff]
        %v4421 = vld [vmem:[%s4359 + $0x159] sm:$0xff]
        %v4422 = vld [vmem:[%s4359 + $0x169] sm:$0xff]
        %v4423 = vld [vmem:[%s4359 + $0x171] sm:$0xff]
        %v4424 = vld [vmem:[%s4359 + $0x2] sm:$0xff]
        %v4425 = vld [vmem:[%s4359 + $0xa] sm:$0xff]
        %v4426 = vld [vmem:[%s4359 + $0x1a] sm:$0xff]
        %v4427 = vld [vmem:[%s4359 + $0x22] sm:$0xff]
        %v4428 = vld [vmem:[%s4359 + $0x32] sm:$0xff]
        %v4429 = vld [vmem:[%s4359 + $0x3a] sm:$0xff]
        %v4430 = vld [vmem:[%s4359 + $0x4a] sm:$0xff]
        %v4431 = vld [vmem:[%s4359 + $0x52] sm:$0xff]
        %v4432 = vld [vmem:[%s4359 + $0x62] sm:$0xff]
        %v4433 = vld [vmem:[%s4359 + $0x6a] sm:$0xff]
        %v4434 = vld [vmem:[%s4359 + $0x7a] sm:$0xff]
        %v4435 = vld [vmem:[%s4359 + $0x82] sm:$0xff]
        %v4436 = vld [vmem:[%s4359 + $0x92] sm:$0xff]
        %v4437 = vld [vmem:[%s4359 + $0x9a] sm:$0xff]
        %v4438 = vld [vmem:[%s4359 + $0xaa] sm:$0xff]
        %v4439 = vld [vmem:[%s4359 + $0xb2] sm:$0xff]
        %v4440 = vld [vmem:[%s4359 + $0xc2] sm:$0xff]
        %v4441 = vld [vmem:[%s4359 + $0xca] sm:$0xff]
        %v4442 = vld [vmem:[%s4359 + $0xda] sm:$0xff]
        %v4443 = vld [vmem:[%s4359 + $0xe2] sm:$0xff]
        %v4444 = vld [vmem:[%s4359 + $0xf2] sm:$0xff]
        %v4445 = vld [vmem:[%s4359 + $0xfa] sm:$0xff]
        %v4446 = vld [vmem:[%s4359 + $0x10a] sm:$0xff]
        %v4447 = vld [vmem:[%s4359 + $0x112] sm:$0xff]
        %v4448 = vld [vmem:[%s4359 + $0x122] sm:$0xff]
        %v4449 = vld [vmem:[%s4359 + $0x12a] sm:$0xff]
        %v4450 = vld [vmem:[%s4359 + $0x13a] sm:$0xff]
        %v4451 = vld [vmem:[%s4359 + $0x142] sm:$0xff]
        %v4452 = vld [vmem:[%s4359 + $0x152] sm:$0xff]
        %v4453 = vld [vmem:[%s4359 + $0x15a] sm:$0xff]
        %v4454 = vld [vmem:[%s4359 + $0x16a] sm:$0xff]
        %v4455 = vld [vmem:[%s4359 + $0x172] sm:$0xff]
        %4488 = vrot.lane.b32.xlu0 %v4392, 64
        %v4489 = vpop.permute.xlu0 %4488
        %4490 = vrot.lane.b32.xlu0 %v4393, 64
        %v4491 = vpop.permute.xlu0 %4490
        %4492 = vrot.lane.b32.xlu0 %v4394, 64
        %v4493 = vpop.permute.xlu0 %4492
        %4494 = vrot.lane.b32.xlu0 %v4395, 64
        %v4495 = vpop.permute.xlu0 %4494
        %4496 = vrot.lane.b32.xlu0 %v4396, 64
        %v4497 = vpop.permute.xlu0 %4496
        %4498 = vrot.lane.b32.xlu0 %v4397, 64
        %v4499 = vpop.permute.xlu0 %4498
        %4500 = vrot.lane.b32.xlu0 %v4398, 64
        %v4501 = vpop.permute.xlu0 %4500
        %4502 = vrot.lane.b32.xlu0 %v4399, 64
        %v4503 = vpop.permute.xlu0 %4502
        %4504 = vrot.lane.b32.xlu0 %v4400, 64
        %v4505 = vpop.permute.xlu0 %4504
        %4506 = vrot.lane.b32.xlu0 %v4401, 64
        %v4507 = vpop.permute.xlu0 %4506
        %4508 = vrot.lane.b32.xlu0 %v4402, 64
        %v4509 = vpop.permute.xlu0 %4508
        %4510 = vrot.lane.b32.xlu0 %v4403, 64
        %v4511 = vpop.permute.xlu0 %4510
        %4512 = vrot.lane.b32.xlu0 %v4404, 64
        %v4513 = vpop.permute.xlu0 %4512
        %4514 = vrot.lane.b32.xlu0 %v4405, 64
        %v4515 = vpop.permute.xlu0 %4514
        %4516 = vrot.lane.b32.xlu0 %v4406, 64
        %v4517 = vpop.permute.xlu0 %4516
        %4518 = vrot.lane.b32.xlu0 %v4407, 64
        %v4519 = vpop.permute.xlu0 %4518
        %4520 = vrot.lane.b32.xlu0 %v4408, 64
        %v4521 = vpop.permute.xlu0 %4520
        %4522 = vrot.lane.b32.xlu0 %v4409, 64
        %v4523 = vpop.permute.xlu0 %4522
        %4524 = vrot.lane.b32.xlu0 %v4410, 64
        %v4525 = vpop.permute.xlu0 %4524
        %4526 = vrot.lane.b32.xlu0 %v4411, 64
        %v4527 = vpop.permute.xlu0 %4526
        %4528 = vrot.lane.b32.xlu0 %v4412, 64
        %v4529 = vpop.permute.xlu0 %4528
        %4530 = vrot.lane.b32.xlu0 %v4413, 64
        %v4531 = vpop.permute.xlu0 %4530
        %4532 = vrot.lane.b32.xlu0 %v4414, 64
        %v4533 = vpop.permute.xlu0 %4532
        %4534 = vrot.lane.b32.xlu0 %v4415, 64
        %v4535 = vpop.permute.xlu0 %4534
        %4536 = vrot.lane.b32.xlu0 %v4416, 64
        %v4537 = vpop.permute.xlu0 %4536
        %4538 = vrot.lane.b32.xlu0 %v4417, 64
        %v4539 = vpop.permute.xlu0 %4538
        %4540 = vrot.lane.b32.xlu0 %v4418, 64
        %v4541 = vpop.permute.xlu0 %4540
        %4542 = vrot.lane.b32.xlu0 %v4419, 64
        %v4543 = vpop.permute.xlu0 %4542
        %4544 = vrot.lane.b32.xlu0 %v4420, 64
        %v4545 = vpop.permute.xlu0 %4544
        %4546 = vrot.lane.b32.xlu0 %v4421, 64
        %v4547 = vpop.permute.xlu0 %4546
        %4548 = vrot.lane.b32.xlu0 %v4422, 64
        %v4549 = vpop.permute.xlu0 %4548
        %4550 = vrot.lane.b32.xlu0 %v4423, 64
        %v4551 = vpop.permute.xlu0 %4550
        %v4584 = vsel %vm517, %v4360, %v4489
        %v4585 = vsel %vm517, %v4361, %v4491
        %v4586 = vsel %vm517, %v4362, %v4493
        %v4587 = vsel %vm517, %v4363, %v4495
        %v4588 = vsel %vm517, %v4364, %v4497
        %v4589 = vsel %vm517, %v4365, %v4499
        %v4590 = vsel %vm517, %v4366, %v4501
        %v4591 = vsel %vm517, %v4367, %v4503
        %v4592 = vsel %vm517, %v4368, %v4505
        %v4593 = vsel %vm517, %v4369, %v4507
        %v4594 = vsel %vm517, %v4370, %v4509
        %v4595 = vsel %vm517, %v4371, %v4511
        %v4596 = vsel %vm517, %v4372, %v4513
        %v4597 = vsel %vm517, %v4373, %v4515
        %v4598 = vsel %vm517, %v4374, %v4517
        %v4599 = vsel %vm517, %v4375, %v4519
        %v4600 = vsel %vm517, %v4376, %v4521
        %v4601 = vsel %vm517, %v4377, %v4523
        %v4602 = vsel %vm517, %v4378, %v4525
        %v4603 = vsel %vm517, %v4379, %v4527
        %v4604 = vsel %vm517, %v4380, %v4529
        %v4605 = vsel %vm517, %v4381, %v4531
        %v4606 = vsel %vm517, %v4382, %v4533
        %v4607 = vsel %vm517, %v4383, %v4535
        %v4608 = vsel %vm517, %v4384, %v4537
        %v4609 = vsel %vm517, %v4385, %v4539
        %v4610 = vsel %vm517, %v4386, %v4541
        %v4611 = vsel %vm517, %v4387, %v4543
        %v4612 = vsel %vm517, %v4388, %v4545
        %v4613 = vsel %vm517, %v4389, %v4547
        %v4614 = vsel %vm517, %v4390, %v4549
        %v4615 = vsel %vm517, %v4391, %v4551
        %v4616 = vpack.c.bf16 %v4585, %v4584
        %v4617 = vpack.c.bf16 %v4425, %v4424
        %v4618 = vpack.c.bf16 %v4587, %v4586
        %v4619 = vpack.c.bf16 %v4427, %v4426
        %v4620 = vpack.c.bf16 %v4589, %v4588
        %v4621 = vpack.c.bf16 %v4429, %v4428
        %v4622 = vpack.c.bf16 %v4591, %v4590
        %v4623 = vpack.c.bf16 %v4431, %v4430
        %v4624 = vpack.c.bf16 %v4593, %v4592
        %v4625 = vpack.c.bf16 %v4433, %v4432
        %v4626 = vpack.c.bf16 %v4595, %v4594
        %v4627 = vpack.c.bf16 %v4435, %v4434
        %v4628 = vpack.c.bf16 %v4597, %v4596
        %v4629 = vpack.c.bf16 %v4437, %v4436
        %v4630 = vpack.c.bf16 %v4599, %v4598
        %v4631 = vpack.c.bf16 %v4439, %v4438
        %v4632 = vpack.c.bf16 %v4601, %v4600
        %v4633 = vpack.c.bf16 %v4441, %v4440
        %v4634 = vpack.c.bf16 %v4603, %v4602
        %v4635 = vpack.c.bf16 %v4443, %v4442
        %v4636 = vpack.c.bf16 %v4605, %v4604
        %v4637 = vpack.c.bf16 %v4445, %v4444
        %v4638 = vpack.c.bf16 %v4607, %v4606
        %v4639 = vpack.c.bf16 %v4447, %v4446
        %v4640 = vpack.c.bf16 %v4609, %v4608
        %v4641 = vpack.c.bf16 %v4449, %v4448
        %v4642 = vpack.c.bf16 %v4611, %v4610
        %v4643 = vpack.c.bf16 %v4451, %v4450
        %v4644 = vpack.c.bf16 %v4613, %v4612
        %v4645 = vpack.c.bf16 %v4453, %v4452
        %v4646 = vpack.c.bf16 %v4615, %v4614
        %v4647 = vpack.c.bf16 %v4455, %v4454
        %s4648 = scalar_lea.vmem %s5, 192
        %v4649 = vld [vmem:[%s4648] sm:$0xf]
        %v4650 = vld [vmem:[%s4648 + $0x4] sm:$0xf]
        %v4651 = vld [vmem:[%s4648 + $0x8] sm:$0xf]
        %v4652 = vld [vmem:[%s4648 + $0xc] sm:$0xf]
        %v4653 = vld [vmem:[%s4648 + $0x10] sm:$0xf]
        %v4654 = vld [vmem:[%s4648 + $0x14] sm:$0xf]
        %v4655 = vld [vmem:[%s4648 + $0x18] sm:$0xf]
        %v4656 = vld [vmem:[%s4648 + $0x1c] sm:$0xf]
        %v4657 = vld [vmem:[%s4648 + $0x20] sm:$0xf]
        %v4658 = vld [vmem:[%s4648 + $0x24] sm:$0xf]
        %v4659 = vld [vmem:[%s4648 + $0x28] sm:$0xf]
        %v4660 = vld [vmem:[%s4648 + $0x2c] sm:$0xf]
        %v4661 = vld [vmem:[%s4648 + $0x30] sm:$0xf]
        %v4662 = vld [vmem:[%s4648 + $0x34] sm:$0xf]
        %v4663 = vld [vmem:[%s4648 + $0x38] sm:$0xf]
        %v4664 = vld [vmem:[%s4648 + $0x3c] sm:$0xf]
        %v4665 = vld [vmem:[%s4648 + $0x40] sm:$0xf]
        %v4666 = vld [vmem:[%s4648 + $0x44] sm:$0xf]
        %v4667 = vld [vmem:[%s4648 + $0x48] sm:$0xf]
        %v4668 = vld [vmem:[%s4648 + $0x4c] sm:$0xf]
        %v4669 = vld [vmem:[%s4648 + $0x50] sm:$0xf]
        %v4670 = vld [vmem:[%s4648 + $0x54] sm:$0xf]
        %v4671 = vld [vmem:[%s4648 + $0x58] sm:$0xf]
        %v4672 = vld [vmem:[%s4648 + $0x5c] sm:$0xf]
        %v4697 = vunpack.c.l.b16 %v4649
        %v4698 = vunpack.c.l.b16 %v4650
        %v4699 = vunpack.c.l.b16 %v4651
        %v4700 = vunpack.c.l.b16 %v4652
        %v4701 = vunpack.c.l.b16 %v4653
        %v4702 = vunpack.c.l.b16 %v4654
        %v4703 = vunpack.c.l.b16 %v4655
        %v4704 = vunpack.c.l.b16 %v4656
        %v4705 = vunpack.c.l.b16 %v4657
        %v4706 = vunpack.c.l.b16 %v4658
        %v4707 = vunpack.c.l.b16 %v4659
        %v4708 = vunpack.c.l.b16 %v4660
        %v4709 = vunpack.c.l.b16 %v4661
        %v4710 = vunpack.c.l.b16 %v4662
        %v4711 = vunpack.c.l.b16 %v4663
        %v4712 = vunpack.c.l.b16 %v4664
        %v4713 = vunpack.c.l.b16 %v4665
        %v4714 = vunpack.c.l.b16 %v4666
        %v4715 = vunpack.c.l.b16 %v4667
        %v4716 = vunpack.c.l.b16 %v4668
        %v4717 = vunpack.c.l.b16 %v4669
        %v4718 = vunpack.c.l.b16 %v4670
        %v4719 = vunpack.c.l.b16 %v4671
        %v4720 = vunpack.c.l.b16 %v4672
        %v4721 = vpack.c.b16 %v4698, %v4697
        %v4722 = vpack.c.b16 %v4700, %v4699
        %v4723 = vpack.c.b16 %v4702, %v4701
        %v4724 = vpack.c.b16 %v4704, %v4703
        %v4725 = vpack.c.b16 %v4706, %v4705
        %v4726 = vpack.c.b16 %v4708, %v4707
        %v4727 = vpack.c.b16 %v4710, %v4709
        %v4728 = vpack.c.b16 %v4712, %v4711
        %v4729 = vpack.c.b16 %v4714, %v4713
        %v4730 = vpack.c.b16 %v4716, %v4715
        %v4731 = vpack.c.b16 %v4718, %v4717
        %v4732 = vpack.c.b16 %v4720, %v4719
        %v4746 = vsel %vm517, %v4617, 0
        %v4749 = vsel %vm517, %v4619, 0
        %v4752 = vsel %vm517, %v4621, 0
        %v4755 = vsel %vm517, %v4623, 0
        %v4758 = vsel %vm517, %v4625, 0
        %v4761 = vsel %vm517, %v4627, 0
        %v4764 = vsel %vm517, %v4629, 0
        %v4767 = vsel %vm517, %v4631, 0
        %v4770 = vsel %vm517, %v4633, 0
        %v4773 = vsel %vm517, %v4635, 0
        %v4776 = vsel %vm517, %v4637, 0
        %v4779 = vsel %vm517, %v4639, 0
        %v4782 = vsel %vm517, %v4641, 0
        %v4785 = vsel %vm517, %v4643, 0
        %v4788 = vsel %vm517, %v4645, 0
        %v4791 = vsel %vm517, %v4647, 0
        %4793 = vmatprep.subr.bf16.mxu0 0
        %4794 = vmatpush1.bf16.msra.mxu0 %v4728
        %4795 = vmatprep.subr.bf16.mxu0 0
        %4796 = vmatpush1.bf16.msra.mxu0 %v4727
        %4797 = vmatprep.subr.bf16.mxu0 0
        %4798 = vmatpush1.bf16.msra.mxu0 %v4726
        %4799 = vmatprep.subr.bf16.mxu0 0
        %4800 = vmatpush1.bf16.msra.mxu0 %v4725
        %4801 = vmatprep.subr.bf16.mxu0 0
        %4802 = vmatpush1.bf16.msra.mxu0 %v4724
        %4803 = vmatprep.subr.bf16.mxu0 0
        %4804 = vmatpush1.bf16.msra.mxu0 %v4723
        %4805 = vmatprep.subr.bf16.mxu0 0
        %4806 = vmatpush1.bf16.msra.mxu0 %v4722
        %4807 = vmatprep.subr.bf16.mxu0 0
        %4808 = vmatpush1.bf16.msra.mxu0 %v4721
        %4809 = vmatprep.subr.bf16.mxu0 0
        %4810 = vmatpush2.bf16.msra.mxu0 0
        %4811 = vmatprep.subr.bf16.mxu0 0
        %4812 = vmatpush2.bf16.msra.mxu0 0
        %4813 = vmatprep.subr.bf16.mxu0 0
        %4814 = vmatpush2.bf16.msra.mxu0 0
        %4815 = vmatprep.subr.bf16.mxu0 0
        %4816 = vmatpush2.bf16.msra.mxu0 0
        %4817 = vmatprep.subr.bf16.mxu0 0
        %4818 = vmatpush2.bf16.msra.mxu0 %v4732
        %4819 = vmatprep.subr.bf16.mxu0 0
        %4820 = vmatpush2.bf16.msra.mxu0 %v4731
        %4821 = vmatprep.subr.bf16.mxu0 0
        %4822 = vmatpush2.bf16.msra.mxu0 %v4730
        %4823 = vmatprep.subr.bf16.mxu0 0
        %4824 = vmatpush2.bf16.msra.mxu0 %v4729
        %4825 = vmatprep.mubr.bf16.mxu0 %v4746
        %4826 = vmatmul.mubr.bf16.gmra.mxu0 %v4616
        %v4827 = vpop.f32.mrf.mxu0
        %v4828 = vadd.f32 0.0, %v4827
        %v4829 = vpop.f32.mrf.mxu0
        %v4830 = vpop.f32.mrf.mxu0
        %v4831 = vadd.f32 0.0, %v4830
        %v4832 = vpop.f32.mrf.mxu0
        %4833 = vmatprep.mubr.bf16.mxu0 %v4749
        %4834 = vmatmul.mubr.bf16.gmra.mxu0 %v4618
        %v4835 = vpop.f32.mrf.mxu0
        %v4836 = vadd.f32 0.0, %v4835
        %v4837 = vpop.f32.mrf.mxu0
        %v4838 = vpop.f32.mrf.mxu0
        %v4839 = vadd.f32 0.0, %v4838
        %v4840 = vpop.f32.mrf.mxu0
        %4841 = vmatprep.mubr.bf16.mxu0 %v4752
        %4842 = vmatmul.mubr.bf16.gmra.mxu0 %v4620
        %v4843 = vpop.f32.mrf.mxu0
        %v4844 = vadd.f32 0.0, %v4843
        %v4845 = vpop.f32.mrf.mxu0
        %v4846 = vpop.f32.mrf.mxu0
        %v4847 = vadd.f32 0.0, %v4846
        %v4848 = vpop.f32.mrf.mxu0
        %4849 = vmatprep.mubr.bf16.mxu0 %v4755
        %4850 = vmatmul.mubr.bf16.gmra.mxu0 %v4622
        %v4851 = vpop.f32.mrf.mxu0
        %v4852 = vadd.f32 0.0, %v4851
        %v4853 = vpop.f32.mrf.mxu0
        %v4854 = vpop.f32.mrf.mxu0
        %v4855 = vadd.f32 0.0, %v4854
        %v4856 = vpop.f32.mrf.mxu0
        %4857 = vmatprep.mubr.bf16.mxu0 %v4758
        %4858 = vmatmul.mubr.bf16.gmra.mxu0 %v4624
        %v4859 = vpop.f32.mrf.mxu0
        %v4860 = vadd.f32 0.0, %v4859
        %v4861 = vpop.f32.mrf.mxu0
        %v4862 = vpop.f32.mrf.mxu0
        %v4863 = vadd.f32 0.0, %v4862
        %v4864 = vpop.f32.mrf.mxu0
        %4865 = vmatprep.mubr.bf16.mxu0 %v4761
        %4866 = vmatmul.mubr.bf16.gmra.mxu0 %v4626
        %v4867 = vpop.f32.mrf.mxu0
        %v4868 = vadd.f32 0.0, %v4867
        %v4869 = vpop.f32.mrf.mxu0
        %v4870 = vpop.f32.mrf.mxu0
        %v4871 = vadd.f32 0.0, %v4870
        %v4872 = vpop.f32.mrf.mxu0
        %4873 = vmatprep.mubr.bf16.mxu0 %v4764
        %4874 = vmatmul.mubr.bf16.gmra.mxu0 %v4628
        %v4875 = vpop.f32.mrf.mxu0
        %v4876 = vadd.f32 0.0, %v4875
        %v4877 = vpop.f32.mrf.mxu0
        %v4878 = vpop.f32.mrf.mxu0
        %v4879 = vadd.f32 0.0, %v4878
        %v4880 = vpop.f32.mrf.mxu0
        %4881 = vmatprep.mubr.bf16.mxu0 %v4767
        %4882 = vmatmul.mubr.bf16.gmra.mxu0 %v4630
        %v4883 = vpop.f32.mrf.mxu0
        %v4884 = vadd.f32 0.0, %v4883
        %v4885 = vpop.f32.mrf.mxu0
        %v4886 = vpop.f32.mrf.mxu0
        %v4887 = vadd.f32 0.0, %v4886
        %v4888 = vpop.f32.mrf.mxu0
        %4889 = vmatprep.mubr.bf16.mxu0 %v4770
        %4890 = vmatmul.mubr.bf16.gmra.mxu0 %v4632
        %v4891 = vpop.f32.mrf.mxu0
        %v4892 = vadd.f32 0.0, %v4891
        %v4893 = vpop.f32.mrf.mxu0
        %v4894 = vpop.f32.mrf.mxu0
        %v4895 = vadd.f32 0.0, %v4894
        %v4896 = vpop.f32.mrf.mxu0
        %4897 = vmatprep.mubr.bf16.mxu0 %v4773
        %4898 = vmatmul.mubr.bf16.gmra.mxu0 %v4634
        %v4899 = vpop.f32.mrf.mxu0
        %v4900 = vadd.f32 0.0, %v4899
        %v4901 = vpop.f32.mrf.mxu0
        %v4902 = vpop.f32.mrf.mxu0
        %v4903 = vadd.f32 0.0, %v4902
        %v4904 = vpop.f32.mrf.mxu0
        %4905 = vmatprep.mubr.bf16.mxu0 %v4776
        %4906 = vmatmul.mubr.bf16.gmra.mxu0 %v4636
        %v4907 = vpop.f32.mrf.mxu0
        %v4908 = vadd.f32 0.0, %v4907
        %v4909 = vpop.f32.mrf.mxu0
        %v4910 = vpop.f32.mrf.mxu0
        %v4911 = vadd.f32 0.0, %v4910
        %v4912 = vpop.f32.mrf.mxu0
        %4913 = vmatprep.mubr.bf16.mxu0 %v4779
        %4914 = vmatmul.mubr.bf16.gmra.mxu0 %v4638
        %v4915 = vpop.f32.mrf.mxu0
        %v4916 = vadd.f32 0.0, %v4915
        %v4917 = vpop.f32.mrf.mxu0
        %v4918 = vpop.f32.mrf.mxu0
        %v4919 = vadd.f32 0.0, %v4918
        %v4920 = vpop.f32.mrf.mxu0
        %4921 = vmatprep.mubr.bf16.mxu0 %v4782
        %4922 = vmatmul.mubr.bf16.gmra.mxu0 %v4640
        %v4923 = vpop.f32.mrf.mxu0
        %v4924 = vadd.f32 0.0, %v4923
        %v4925 = vpop.f32.mrf.mxu0
        %v4926 = vpop.f32.mrf.mxu0
        %v4927 = vadd.f32 0.0, %v4926
        %v4928 = vpop.f32.mrf.mxu0
        %4929 = vmatprep.mubr.bf16.mxu0 %v4785
        %4930 = vmatmul.mubr.bf16.gmra.mxu0 %v4642
        %v4931 = vpop.f32.mrf.mxu0
        %v4932 = vadd.f32 0.0, %v4931
        %v4933 = vpop.f32.mrf.mxu0
        %v4934 = vpop.f32.mrf.mxu0
        %v4935 = vadd.f32 0.0, %v4934
        %v4936 = vpop.f32.mrf.mxu0
        %4937 = vmatprep.mubr.bf16.mxu0 %v4788
        %4938 = vmatmul.mubr.bf16.gmra.mxu0 %v4644
        %v4939 = vpop.f32.mrf.mxu0
        %v4940 = vadd.f32 0.0, %v4939
        %v4941 = vpop.f32.mrf.mxu0
        %v4942 = vpop.f32.mrf.mxu0
        %v4943 = vadd.f32 0.0, %v4942
        %v4944 = vpop.f32.mrf.mxu0
        %4945 = vmatprep.mubr.bf16.mxu0 %v4791
        %4946 = vmatmul.mubr.bf16.gmra.mxu0 %v4646
        %v4947 = vpop.f32.mrf.mxu0
        %v4948 = vadd.f32 0.0, %v4947
        %v4949 = vpop.f32.mrf.mxu0
        %v4950 = vpop.f32.mrf.mxu0
        %v4951 = vadd.f32 0.0, %v4950
        %v4952 = vpop.f32.mrf.mxu0
        %4953 = vdwg.mxu0
        %v4954 = vadd.f32 %v4233, %v4828
        %v4955 = vadd.f32 %v4236, %v4831
        %v4956 = vadd.f32 %v4241, %v4836
        %v4957 = vadd.f32 %v4244, %v4839
        %v4958 = vadd.f32 %v4249, %v4844
        %v4959 = vadd.f32 %v4252, %v4847
        %v4960 = vadd.f32 %v4257, %v4852
        %v4961 = vadd.f32 %v4260, %v4855
        %v4962 = vadd.f32 %v4265, %v4860
        %v4963 = vadd.f32 %v4268, %v4863
        %v4964 = vadd.f32 %v4273, %v4868
        %v4965 = vadd.f32 %v4276, %v4871
        %v4966 = vadd.f32 %v4281, %v4876
        %v4967 = vadd.f32 %v4284, %v4879
        %v4968 = vadd.f32 %v4289, %v4884
        %v4969 = vadd.f32 %v4292, %v4887
        %v4970 = vadd.f32 %v4297, %v4892
        %v4971 = vadd.f32 %v4300, %v4895
        %v4972 = vadd.f32 %v4305, %v4900
        %v4973 = vadd.f32 %v4308, %v4903
        %v4974 = vadd.f32 %v4313, %v4908
        %v4975 = vadd.f32 %v4316, %v4911
        %v4976 = vadd.f32 %v4321, %v4916
        %v4977 = vadd.f32 %v4324, %v4919
        %v4978 = vadd.f32 %v4329, %v4924
        %v4979 = vadd.f32 %v4332, %v4927
        %v4980 = vadd.f32 %v4337, %v4932
        %v4981 = vadd.f32 %v4340, %v4935
        %v4982 = vadd.f32 %v4345, %v4940
        %v4983 = vadd.f32 %v4348, %v4943
        %v4984 = vadd.f32 %v4353, %v4948
        %v4985 = vadd.f32 %v4356, %v4951
        %v4986 = vld [vmem:[%s6] sm:$0x1]
        %v4988 = vlaneseq
        %v4989 = vshrl.u32 %v4988, 7
        %v4990 = vsub.s32 0, %v4989
        %v4991 = vrot.slane %v4986, %v4990
        %v4993 = vmul.f32 %v4954, %v4991
        %v4994 = vmul.f32 %v4955, %v4991
        %v4995 = vmul.f32 %v4956, %v4991
        %v4996 = vmul.f32 %v4957, %v4991
        %v4997 = vmul.f32 %v4958, %v4991
        %v4998 = vmul.f32 %v4959, %v4991
        %v4999 = vmul.f32 %v4960, %v4991
        %v5000 = vmul.f32 %v4961, %v4991
        %v5001 = vmul.f32 %v4962, %v4991
        %v5002 = vmul.f32 %v4963, %v4991
        %v5003 = vmul.f32 %v4964, %v4991
        %v5004 = vmul.f32 %v4965, %v4991
        %v5005 = vmul.f32 %v4966, %v4991
        %v5006 = vmul.f32 %v4967, %v4991
        %v5007 = vmul.f32 %v4968, %v4991
        %v5008 = vmul.f32 %v4969, %v4991
        %v5009 = vmul.f32 %v4970, %v4991
        %v5010 = vmul.f32 %v4971, %v4991
        %v5011 = vmul.f32 %v4972, %v4991
        %v5012 = vmul.f32 %v4973, %v4991
        %v5013 = vmul.f32 %v4974, %v4991
        %v5014 = vmul.f32 %v4975, %v4991
        %v5015 = vmul.f32 %v4976, %v4991
        %v5016 = vmul.f32 %v4977, %v4991
        %v5017 = vmul.f32 %v4978, %v4991
        %v5018 = vmul.f32 %v4979, %v4991
        %v5019 = vmul.f32 %v4980, %v4991
        %v5020 = vmul.f32 %v4981, %v4991
        %v5021 = vmul.f32 %v4982, %v4991
        %v5022 = vmul.f32 %v4983, %v4991
        %v5023 = vmul.f32 %v4984, %v4991
        %v5024 = vmul.f32 %v4985, %v4991
        %v5025 = vld [vmem:[%s7] sm:$0x1]
        %v5027 = vlaneseq
        %v5028 = vshrl.u32 %v5027, 7
        %v5029 = vsub.s32 0, %v5028
        %v5030 = vrot.slane %v5025, %v5029
        %v5032 = vadd.f32 %v4993, %v5030
        %v5033 = vadd.f32 %v4994, %v5030
        %v5034 = vadd.f32 %v4995, %v5030
        %v5035 = vadd.f32 %v4996, %v5030
        %v5036 = vadd.f32 %v4997, %v5030
        %v5037 = vadd.f32 %v4998, %v5030
        %v5038 = vadd.f32 %v4999, %v5030
        %v5039 = vadd.f32 %v5000, %v5030
        %v5040 = vadd.f32 %v5001, %v5030
        %v5041 = vadd.f32 %v5002, %v5030
        %v5042 = vadd.f32 %v5003, %v5030
        %v5043 = vadd.f32 %v5004, %v5030
        %v5044 = vadd.f32 %v5005, %v5030
        %v5045 = vadd.f32 %v5006, %v5030
        %v5046 = vadd.f32 %v5007, %v5030
        %v5047 = vadd.f32 %v5008, %v5030
        %v5048 = vadd.f32 %v5009, %v5030
        %v5049 = vadd.f32 %v5010, %v5030
        %v5050 = vadd.f32 %v5011, %v5030
        %v5051 = vadd.f32 %v5012, %v5030
        %v5052 = vadd.f32 %v5013, %v5030
        %v5053 = vadd.f32 %v5014, %v5030
        %v5054 = vadd.f32 %v5015, %v5030
        %v5055 = vadd.f32 %v5016, %v5030
        %v5056 = vadd.f32 %v5017, %v5030
        %v5057 = vadd.f32 %v5018, %v5030
        %v5058 = vadd.f32 %v5019, %v5030
        %v5059 = vadd.f32 %v5020, %v5030
        %v5060 = vadd.f32 %v5021, %v5030
        %v5061 = vadd.f32 %v5022, %v5030
        %v5062 = vadd.f32 %v5023, %v5030
        %v5063 = vadd.f32 %v5024, %v5030
        %vm5064 = vcmp.ge.f32.partialorder %v5032, 0.0
        %vm5065 = vcmp.ge.f32.partialorder %v5033, 0.0
        %vm5066 = vcmp.ge.f32.partialorder %v5034, 0.0
        %vm5067 = vcmp.ge.f32.partialorder %v5035, 0.0
        %vm5068 = vcmp.ge.f32.partialorder %v5036, 0.0
        %vm5069 = vcmp.ge.f32.partialorder %v5037, 0.0
        %vm5070 = vcmp.ge.f32.partialorder %v5038, 0.0
        %vm5071 = vcmp.ge.f32.partialorder %v5039, 0.0
        %vm5072 = vcmp.ge.f32.partialorder %v5040, 0.0
        %vm5073 = vcmp.ge.f32.partialorder %v5041, 0.0
        %vm5074 = vcmp.ge.f32.partialorder %v5042, 0.0
        %vm5075 = vcmp.ge.f32.partialorder %v5043, 0.0
        %vm5076 = vcmp.ge.f32.partialorder %v5044, 0.0
        %vm5077 = vcmp.ge.f32.partialorder %v5045, 0.0
        %vm5078 = vcmp.ge.f32.partialorder %v5046, 0.0
        %vm5079 = vcmp.ge.f32.partialorder %v5047, 0.0
        %vm5080 = vcmp.ge.f32.partialorder %v5048, 0.0
        %vm5081 = vcmp.ge.f32.partialorder %v5049, 0.0
        %vm5082 = vcmp.ge.f32.partialorder %v5050, 0.0
        %vm5083 = vcmp.ge.f32.partialorder %v5051, 0.0
        %vm5084 = vcmp.ge.f32.partialorder %v5052, 0.0
        %vm5085 = vcmp.ge.f32.partialorder %v5053, 0.0
        %vm5086 = vcmp.ge.f32.partialorder %v5054, 0.0
        %vm5087 = vcmp.ge.f32.partialorder %v5055, 0.0
        %vm5088 = vcmp.ge.f32.partialorder %v5056, 0.0
        %vm5089 = vcmp.ge.f32.partialorder %v5057, 0.0
        %vm5090 = vcmp.ge.f32.partialorder %v5058, 0.0
        %vm5091 = vcmp.ge.f32.partialorder %v5059, 0.0
        %vm5092 = vcmp.ge.f32.partialorder %v5060, 0.0
        %vm5093 = vcmp.ge.f32.partialorder %v5061, 0.0
        %vm5094 = vcmp.ge.f32.partialorder %v5062, 0.0
        %vm5095 = vcmp.ge.f32.partialorder %v5063, 0.0
        %v5096 = vmul.f32 %v5032, 0.01
        %v5097 = vmul.f32 %v5033, 0.01
        %v5098 = vmul.f32 %v5034, 0.01
        %v5099 = vmul.f32 %v5035, 0.01
        %v5100 = vmul.f32 %v5036, 0.01
        %v5101 = vmul.f32 %v5037, 0.01
        %v5102 = vmul.f32 %v5038, 0.01
        %v5103 = vmul.f32 %v5039, 0.01
        %v5104 = vmul.f32 %v5040, 0.01
        %v5105 = vmul.f32 %v5041, 0.01
        %v5106 = vmul.f32 %v5042, 0.01
        %v5107 = vmul.f32 %v5043, 0.01
        %v5108 = vmul.f32 %v5044, 0.01
        %v5109 = vmul.f32 %v5045, 0.01
        %v5110 = vmul.f32 %v5046, 0.01
        %v5111 = vmul.f32 %v5047, 0.01
        %v5112 = vmul.f32 %v5048, 0.01
        %v5113 = vmul.f32 %v5049, 0.01
        %v5114 = vmul.f32 %v5050, 0.01
        %v5115 = vmul.f32 %v5051, 0.01
        %v5116 = vmul.f32 %v5052, 0.01
        %v5117 = vmul.f32 %v5053, 0.01
        %v5118 = vmul.f32 %v5054, 0.01
        %v5119 = vmul.f32 %v5055, 0.01
        %v5120 = vmul.f32 %v5056, 0.01
        %v5121 = vmul.f32 %v5057, 0.01
        %v5122 = vmul.f32 %v5058, 0.01
        %v5123 = vmul.f32 %v5059, 0.01
        %v5124 = vmul.f32 %v5060, 0.01
        %v5125 = vmul.f32 %v5061, 0.01
        %v5126 = vmul.f32 %v5062, 0.01
        %v5127 = vmul.f32 %v5063, 0.01
        %v5128 = vsel %vm5064, %v5032, %v5096
        %v5129 = vsel %vm5065, %v5033, %v5097
        %v5130 = vsel %vm5066, %v5034, %v5098
        %v5131 = vsel %vm5067, %v5035, %v5099
        %v5132 = vsel %vm5068, %v5036, %v5100
        %v5133 = vsel %vm5069, %v5037, %v5101
        %v5134 = vsel %vm5070, %v5038, %v5102
        %v5135 = vsel %vm5071, %v5039, %v5103
        %v5136 = vsel %vm5072, %v5040, %v5104
        %v5137 = vsel %vm5073, %v5041, %v5105
        %v5138 = vsel %vm5074, %v5042, %v5106
        %v5139 = vsel %vm5075, %v5043, %v5107
        %v5140 = vsel %vm5076, %v5044, %v5108
        %v5141 = vsel %vm5077, %v5045, %v5109
        %v5142 = vsel %vm5078, %v5046, %v5110
        %v5143 = vsel %vm5079, %v5047, %v5111
        %v5144 = vsel %vm5080, %v5048, %v5112
        %v5145 = vsel %vm5081, %v5049, %v5113
        %v5146 = vsel %vm5082, %v5050, %v5114
        %v5147 = vsel %vm5083, %v5051, %v5115
        %v5148 = vsel %vm5084, %v5052, %v5116
        %v5149 = vsel %vm5085, %v5053, %v5117
        %v5150 = vsel %vm5086, %v5054, %v5118
        %v5151 = vsel %vm5087, %v5055, %v5119
        %v5152 = vsel %vm5088, %v5056, %v5120
        %v5153 = vsel %vm5089, %v5057, %v5121
        %v5154 = vsel %vm5090, %v5058, %v5122
        %v5155 = vsel %vm5091, %v5059, %v5123
        %v5156 = vsel %vm5092, %v5060, %v5124
        %v5157 = vsel %vm5093, %v5061, %v5125
        %v5158 = vsel %vm5094, %v5062, %v5126
        %v5159 = vsel %vm5095, %v5063, %v5127
        %5160 = vst.msk [vmem:[%s313] sm:$0xff] %vm517, %v5128
        %5161 = vst.msk [vmem:[%s313 + $0x8] sm:$0xff] %vm517, %v5129
        %5162 = vst.msk [vmem:[%s313 + $0x10] sm:$0xff] %vm517, %v5130
        %5163 = vst.msk [vmem:[%s313 + $0x18] sm:$0xff] %vm517, %v5131
        %5164 = vst.msk [vmem:[%s313 + $0x20] sm:$0xff] %vm517, %v5132
        %5165 = vst.msk [vmem:[%s313 + $0x28] sm:$0xff] %vm517, %v5133
        %5166 = vst.msk [vmem:[%s313 + $0x30] sm:$0xff] %vm517, %v5134
        %5167 = vst.msk [vmem:[%s313 + $0x38] sm:$0xff] %vm517, %v5135
        %5168 = vst.msk [vmem:[%s313 + $0x40] sm:$0xff] %vm517, %v5136
        %5169 = vst.msk [vmem:[%s313 + $0x48] sm:$0xff] %vm517, %v5137
        %5170 = vst.msk [vmem:[%s313 + $0x50] sm:$0xff] %vm517, %v5138
        %5171 = vst.msk [vmem:[%s313 + $0x58] sm:$0xff] %vm517, %v5139
        %5172 = vst.msk [vmem:[%s313 + $0x60] sm:$0xff] %vm517, %v5140
        %5173 = vst.msk [vmem:[%s313 + $0x68] sm:$0xff] %vm517, %v5141
        %5174 = vst.msk [vmem:[%s313 + $0x70] sm:$0xff] %vm517, %v5142
        %5175 = vst.msk [vmem:[%s313 + $0x78] sm:$0xff] %vm517, %v5143
        %5176 = vst.msk [vmem:[%s313 + $0x80] sm:$0xff] %vm517, %v5144
        %5177 = vst.msk [vmem:[%s313 + $0x88] sm:$0xff] %vm517, %v5145
        %5178 = vst.msk [vmem:[%s313 + $0x90] sm:$0xff] %vm517, %v5146
        %5179 = vst.msk [vmem:[%s313 + $0x98] sm:$0xff] %vm517, %v5147
        %5180 = vst.msk [vmem:[%s313 + $0xa0] sm:$0xff] %vm517, %v5148
        %5181 = vst.msk [vmem:[%s313 + $0xa8] sm:$0xff] %vm517, %v5149
        %5182 = vst.msk [vmem:[%s313 + $0xb0] sm:$0xff] %vm517, %v5150
        %5183 = vst.msk [vmem:[%s313 + $0xb8] sm:$0xff] %vm517, %v5151
        %5184 = vst.msk [vmem:[%s313 + $0xc0] sm:$0xff] %vm517, %v5152
        %5185 = vst.msk [vmem:[%s313 + $0xc8] sm:$0xff] %vm517, %v5153
        %5186 = vst.msk [vmem:[%s313 + $0xd0] sm:$0xff] %vm517, %v5154
        %5187 = vst.msk [vmem:[%s313 + $0xd8] sm:$0xff] %vm517, %v5155
        %5188 = vst.msk [vmem:[%s313 + $0xe0] sm:$0xff] %vm517, %v5156
        %5189 = vst.msk [vmem:[%s313 + $0xe8] sm:$0xff] %vm517, %v5157
        %5190 = vst.msk [vmem:[%s313 + $0xf0] sm:$0xff] %vm517, %v5158
        %5191 = vst.msk [vmem:[%s313 + $0xf8] sm:$0xff] %vm517, %v5159
        %s5192 = sand.u32 %s208, 1
        %s5193 = scalar_lea.sflag [#allocation5], %s5192
        %s5194 = sand.u32 %s208, 1
        %s5195 = smul.addr %s5194, 256
        %s5196 = scalar_lea.vmem [#allocation4], %s5195
        // Predicated region
        $region53: #{up_block_forward.3} parent=51 // pred_check
          %p5197 = pneg %p218
        $region54: #{up_block_forward.3} parent=51 // pred_check_branch
          %5199 = sbr.rel (%p5197) target = $region56
        $region55: #{up_block_forward.3} parent=51 // pred_region
          %s5201 = ssub.s32 4096, 4096
          %5202 = vsyncadd %s5193, %s5201
          %s5203 = smul.addr %s22, 32
          %s5204 = smul.addr %s5203, 128
          %s5205 = scalar_lea.hbm %s8, %s5204
          %s5206 = sshll.u32 %s5196, 4
          %s5207 = int_to_ptr.vmem [resolvable:$true] %s5206
          %5212 = dma.vmem_to_hbm [thread:$0]  %s5207, 4096, %s5205, %s5193, 128, 128, 8
        $region56: #{up_block_forward.3} parent=51 // pred_fallthru
          _
      $region52: #{up_block_forward.3} parent=5 // pred_fallthru
        _
      %p5213 = scmp.le.s32.totalorder 2, %s17
      // Predicated region
      $region57: #{up_block_forward.3} parent=5 // pred_check
        %p5214 = pneg %p5213
      $region58: #{up_block_forward.3} parent=5 // pred_check_branch
        %5216 = sbr.rel (%p5214) target = $region60
      $region59: #{up_block_forward.3} parent=5 // pred_region
        %s5217 = ssub.s32 %s17, 2
        // Predicated region
        $region61: #{up_block_forward.3} parent=59 // pred_check
          %p5218 = pneg %p224
        $region62: #{up_block_forward.3} parent=59 // pred_check_branch
          %5220 = sbr.rel (%p5218) target = $region64
        $region63: #{up_block_forward.3} parent=59 // pred_region
          %s5221 = sand.u32 %s209, 1
          %s5222 = scalar_lea.sflag [#allocation5], %s5221
          %s5223 = sand.u32 %s209, 1
          %s5224 = smul.addr %s5223, 256
          %s5225 = scalar_lea.vmem [#allocation4], %s5224
          %5226 = dma.done %s5222, 4096
        $region64: #{up_block_forward.3} parent=59 // pred_fallthru
          _
      $region60: #{up_block_forward.3} parent=5 // pred_fallthru
        _
    $region6: #{up_block_forward.3} parent=1 // loop_footer
      %s21 = sadd.s32 1, %s17
    $region7: #{up_block_forward.3} parent=1 // loop_footer_branch
      %16 = sbr.rel target = $region3
    $region8: #{up_block_forward.3} parent=1 // loop_exit
      _
    %5227 = vsyncpa [#allocation5], 1
    %s5228 = scalar_lea.sflag [#allocation5], 1
    %5229 = vsyncpa %s5228, 1

</llo_original>
